<compile_context>
chip_gen: v5e
topology: v5e:2x2
jax: 0.10.0
libtpu: 0.0.40
codegen_flags: <defaults>
</compile_context>

<pallas_src>
import functools

import jax
import jax.numpy as jnp
from jax import lax
from jax.experimental import pallas as pl
from jax.experimental.pallas import tpu as pltpu

NEG = -1e30  # finite stand-in for -inf (keeps log-space math NaN-free)


def _custom_loss_kernel(ctc_lp_ref,      # (Bt, Tt, C) f32  frame log-probs
                        tok_logits_ref,  # (Bt, U,  C) f32  token logits
                        frame_lens_ref,  # (Bt, 1)     i32
                        tokens_ref,      # (Bt, U)     i32
                        token_lens_ref,  # (Bt, 1)     i32
                        out_ref,         # (1, 8, 128) f32  partial sums
                        alpha_ref,       # (Bt, S_pad)    f32 scratch: CTC forward var
                        ext_oh_ref,      # (Bt, S_pad, C) f32 scratch: ext-label one-hot
                        a3bias_ref,      # (Bt, S_pad)    f32 scratch: skip-trans. bias
                        *, num_real_b):
    b_idx = pl.program_id(0)
    t_idx = pl.program_id(1)
    nt = pl.num_programs(1)

    Bt, Tt, C = ctc_lp_ref.shape
    U = tok_logits_ref.shape[1]
    S = 2 * U + 1
    S_pad = alpha_ref.shape[1]

    flens = frame_lens_ref[...]                                     # (Bt, 1)
    tlens = token_lens_ref[...]                                     # (Bt, 1)
    siota = lax.broadcasted_iota(jnp.int32, (Bt, S_pad), 1)

    # ---- one-time (per batch tile) setup: extended labels / one-hot / bias ----
    @pl.when(t_idx == 0)
    def _setup():
        gtok = tokens_ref[...]                                      # (Bt, U) i32
        u_io = lax.broadcasted_iota(jnp.int32, (U, S_pad), 0)
        s_io = lax.broadcasted_iota(jnp.int32, (U, S_pad), 1)
        sel = (s_io == 2 * u_io + 1).astype(jnp.int32)              # (U, S_pad)
        # ext_lab[b, s] = tokens[b, (s-1)//2] for odd s < S, else 0 (= blank)
        ext_lab = jnp.sum(gtok[:, :, None] * sel[None, :, :], axis=1)  # (Bt, S_pad)
        cls = lax.broadcasted_iota(jnp.int32, (Bt, S_pad, C), 2)
        ext_oh_ref[...] = (cls == ext_lab[:, :, None]).astype(jnp.float32)
        prev2 = jnp.concatenate(
            [jnp.zeros((Bt, 2), jnp.int32), ext_lab[:, :S_pad - 2]], axis=1)
        s_odd = (siota % 2) == 1
        allow3 = s_odd & (siota >= 3) & (siota < S) & (ext_lab != prev2)
        a3bias_ref[...] = jnp.where(allow3, 0.0, NEG)

    # ---- emissions for this time tile: one batched MXU matmul -----------------
    lp = ctc_lp_ref[...]                                            # (Bt, Tt, C)
    emis = jnp.einsum('btc,bsc->bts', lp, ext_oh_ref[...],
                      preferred_element_type=jnp.float32)           # (Bt, Tt, S_pad)

    # ---- init forward variable with frame 0 -----------------------------------
    # TODO(synk): samples with frame_len == 0 still consume the frame-0 emission
    # (same behavior as the previous kernel; degenerate vs torch's inf->0 path).
    @pl.when(t_idx == 0)
    def _init_alpha():
        alpha_ref[...] = jnp.where(siota <= 1, emis[:, 0, :], NEG)

    # ---- sequential CTC recursion over the frames of this tile ----------------
    a2_bias = jnp.where(siota >= 1, 0.0, NEG)   # kill wrap-around at s == 0
    a3_bias = a3bias_ref[...]                   # kill disallowed skip transitions
    a = alpha_ref[...]
    t0 = t_idx * Tt
    for lt in range(Tt):                        # static unroll (short, per tile)
        e_t = emis[:, lt, :]                    # (Bt, S_pad)
        a2 = pltpu.roll(a, shift=1, axis=1) + a2_bias
        a3 = pltpu.roll(a, shift=2, axis=1) + a3_bias
        m = jnp.maximum(jnp.maximum(a, a2), a3)            # fused 3-way LSE
        comb = m + jnp.log(jnp.exp(a - m) + jnp.exp(a2 - m) + jnp.exp(a3 - m))
        a_new = comb + e_t
        tglob = t0 + lt
        adv = jnp.logical_and(tglob >= 1, tglob < flens)   # (Bt, 1)
        a = jnp.where(adv, a_new, a)
    alpha_ref[...] = a

    # ---- finalize: per-batch-tile partial sums --------------------------------
    @pl.when(t_idx == nt - 1)
    def _finalize():
        # CE (masked sum + token count)
        logits = tok_logits_ref[...]                                # (Bt, U, C)
        gtok = tokens_ref[...]
        cls_u = lax.broadcasted_iota(jnp.int32, (Bt, U, C), 2)
        onehot = cls_u == gtok[:, :, None]
        mx = jnp.max(logits, axis=-1, keepdims=True)
        lse = mx[..., 0] + jnp.log(jnp.sum(jnp.exp(logits - mx), axis=-1))
        picked = jnp.sum(jnp.where(onehot, logits, 0.0), axis=-1)
        ce_elem = lse - picked                                      # (Bt, U)
        pos = lax.broadcasted_iota(jnp.int32, (Bt, U), 1)
        tok_mask = pos < tlens
        ce_sum = jnp.sum(jnp.where(tok_mask, ce_elem, 0.0))
        ce_cnt = jnp.sum(tok_mask.astype(jnp.float32))

        # CTC per-sample NLL from the final forward variable
        fin_mask = (siota == 2 * tlens) | (siota == 2 * tlens - 1)
        fin = jnp.where(fin_mask, a, NEG)
        fm = jnp.max(fin, axis=1, keepdims=True)
        ll = fm + jnp.log(jnp.sum(jnp.exp(fin - fm), axis=1, keepdims=True))
        nll = -ll                                                   # (Bt, 1)
        nll = jnp.where(nll > 1e20, 0.0, nll)                       # zero_infinity
        per = nll / jnp.maximum(tlens.astype(jnp.float32), 1.0)
        b_io = lax.broadcasted_iota(jnp.int32, (Bt, 1), 0)
        valid = (b_idx * Bt + b_io) < num_real_b                    # mask pad rows
        nll_sum = jnp.sum(jnp.where(valid, per, 0.0))

        lane = lax.broadcasted_iota(jnp.int32, out_ref.shape, 2)
        sub = lax.broadcasted_iota(jnp.int32, out_ref.shape, 1)
        row0 = sub == 0
        out_ref[...] = (jnp.where(row0 & (lane == 0), ce_sum, 0.0)
                        + jnp.where(row0 & (lane == 1), ce_cnt, 0.0)
                        + jnp.where(row0 & (lane == 2), nll_sum, 0.0))


def custom_loss(ctc_preds_logprob, token_preds_logits, frame_lens_gt,
                padded_tokens_gt, token_lens_gt, alpha=0.2,
                *, b_tile=8, t_tile=8):
    """CustomLoss forward (alpha * CTC + CE).
       ctc_preds_logprob (B, Tf, C) log-probs (blank = 0); token_preds_logits
       (B, U, C); frame_lens_gt (B,); padded_tokens_gt (B, U); token_lens_gt (B,)."""
    assert b_tile % 8 == 0 and t_tile % 8 == 0
    B, Tf, C = ctc_preds_logprob.shape
    _, U, _ = token_preds_logits.shape
    S = 2 * U + 1
    s_pad = ((S + 127) // 128) * 128

    b_pad = ((B + b_tile - 1) // b_tile) * b_tile
    tf_pad = ((Tf + t_tile - 1) // t_tile) * t_tile
    nb = b_pad // b_tile
    nt = tf_pad // t_tile

    # zero-pad batch/time (padded rows have zero lens -> contribute exactly 0)
    ctc_lp = jnp.pad(jnp.asarray(ctc_preds_logprob, jnp.float32),
                     ((0, b_pad - B), (0, tf_pad - Tf), (0, 0)))
    tok_logits = jnp.pad(jnp.asarray(token_preds_logits, jnp.float32),
                         ((0, b_pad - B), (0, 0), (0, 0)))
    tokens = jnp.pad(jnp.asarray(padded_tokens_gt, jnp.int32),
                     ((0, b_pad - B), (0, 0)))
    flens = jnp.pad(jnp.asarray(frame_lens_gt, jnp.int32).reshape(B, 1),
                    ((0, b_pad - B), (0, 0)))
    tlens = jnp.pad(jnp.asarray(token_lens_gt, jnp.int32).reshape(B, 1),
                    ((0, b_pad - B), (0, 0)))

    kern = functools.partial(_custom_loss_kernel, num_real_b=B)

    parts = pl.pallas_call(
        kern,
        out_shape=jax.ShapeDtypeStruct((nb, 8, 128), jnp.float32),
        grid_spec=pltpu.PrefetchScalarGridSpec(
            num_scalar_prefetch=0,
            grid=(nb, nt),
            in_specs=[
                pl.BlockSpec((b_tile, t_tile, C), lambda b, t: (b, t, 0)),
                pl.BlockSpec((b_tile, U, C), lambda b, t: (b, 0, 0)),
                pl.BlockSpec((b_tile, 1), lambda b, t: (b, 0)),
                pl.BlockSpec((b_tile, U), lambda b, t: (b, 0)),
                pl.BlockSpec((b_tile, 1), lambda b, t: (b, 0)),
            ],
            out_specs=pl.BlockSpec((1, 8, 128), lambda b, t: (b, 0, 0)),
            scratch_shapes=[
                pltpu.VMEM((b_tile, s_pad), jnp.float32),      # CTC forward variable
                pltpu.VMEM((b_tile, s_pad, C), jnp.float32),   # ext-label one-hot
                pltpu.VMEM((b_tile, s_pad), jnp.float32),      # skip-transition bias
            ],
        ),
        compiler_params=pltpu.CompilerParams(
            dimension_semantics=("parallel", "arbitrary"),
            vmem_limit_bytes=32 * 1024 * 1024),
    )(ctc_lp, tok_logits, flens, tokens, tlens)

    ce_loss = jnp.sum(parts[:, 0, 0]) / jnp.maximum(jnp.sum(parts[:, 0, 1]), 1.0)
    ctc_loss = jnp.sum(parts[:, 0, 2]) / float(B)
    return alpha * ctc_loss + ce_loss


def _reference_loss(ctc_preds_logprob, token_preds_logits, frame_lens_gt,
                    padded_tokens_gt, token_lens_gt, alpha=0.2):
    """Pure-JAX reference of the same forward math (for validation)."""
    lp = jnp.asarray(ctc_preds_logprob, jnp.float32)
    logits = jnp.asarray(token_preds_logits, jnp.float32)
    tokens = jnp.asarray(padded_tokens_gt, jnp.int32)
    flens = jnp.asarray(frame_lens_gt, jnp.int32)
    tlens = jnp.asarray(token_lens_gt, jnp.int32)
    B, Tf, C = lp.shape
    _, U, _ = logits.shape
    S = 2 * U + 1
    neg = jnp.float32(NEG)

    # CE
    mx = jnp.max(logits, axis=-1, keepdims=True)
    lse = mx[..., 0] + jnp.log(jnp.sum(jnp.exp(logits - mx), axis=-1))
    picked = jnp.take_along_axis(logits, tokens[:, :, None], axis=-1)[..., 0]
    ce_elem = lse - picked
    mask = jnp.arange(U)[None, :] < tlens[:, None]
    ce = jnp.sum(jnp.where(mask, ce_elem, 0.0)) / jnp.maximum(jnp.sum(mask), 1)

    # CTC
    ext = jnp.zeros((B, S), jnp.int32).at[:, 1::2].set(tokens)
    emis = jnp.take_along_axis(lp, jnp.broadcast_to(ext[:, None, :], (B, Tf, S)),
                               axis=2)
    s_ar = jnp.arange(S)[None, :]
    prev2 = jnp.concatenate([jnp.zeros((B, 2), jnp.int32), ext[:, :S - 2]], axis=1)
    allow3 = ((s_ar % 2) == 1) & (s_ar >= 3) & (ext != prev2)

    def lae(x, y):
        m = jnp.maximum(x, y)
        return m + jnp.log(jnp.exp(x - m) + jnp.exp(y - m))

    a0 = jnp.where(s_ar <= 1, emis[:, 0, :], neg)

    def body(t, a):
        a2 = jnp.concatenate([jnp.full((B, 1), neg), a[:, :S - 1]], axis=1)
        a3 = jnp.concatenate([jnp.full((B, 2), neg), a[:, :S - 2]], axis=1)
        a3 = jnp.where(allow3, a3, neg)
        a_new = lae(lae(a, a2), a3) + emis[:, t, :]
        return jnp.where(t < flens[:, None], a_new, a)

    aT = lax.fori_loop(1, Tf, body, a0)
    fin_mask = (s_ar == 2 * tlens[:, None]) | (s_ar == 2 * tlens[:, None] - 1)
    fin = jnp.where(fin_mask, aT, neg)
    fm = jnp.max(fin, axis=1, keepdims=True)
    ll = fm[:, 0] + jnp.log(jnp.sum(jnp.exp(fin - fm), axis=1))
    nll = -ll
    nll = jnp.where(nll > 1e20, 0.0, nll)
    ctc = jnp.mean(nll / jnp.maximum(tlens.astype(jnp.float32), 1.0))
    return alpha * ctc + ce


if __name__ == "__main__":
    key = jax.random.PRNGKey(0)
    B, Tf, U, C = 2, 16, 6, 32  # batch, frames, padded token len, vocab (blank=0)

    k1, k2, k3 = jax.random.split(key, 3)
    ctc_logits = jax.random.normal(k1, (B, Tf, C), dtype=jnp.float32)
    ctc_preds_logprob = jax.nn.log_softmax(ctc_logits, axis=-1)
    token_preds_logits = jax.random.normal(k2, (B, U, C), dtype=jnp.float32)

    # targets in [1, C-1] (blank=0 never a target); padded positions filled with 0
    tokens = jax.random.randint(k3, (B, U), 1, C, dtype=jnp.int32)
    token_lens = jnp.array([6, 4], dtype=jnp.int32)
    pad_mask = jnp.arange(U)[None, :] < token_lens[:, None]
    padded_tokens_gt = jnp.where(pad_mask, tokens, 0)
    frame_lens = jnp.array([16, 12], dtype=jnp.int32)

    loss = custom_loss(ctc_preds_logprob, token_preds_logits, frame_lens,
                       padded_tokens_gt, token_lens, alpha=0.2)
    loss = jax.block_until_ready(loss)

    ref = _reference_loss(ctc_preds_logprob, token_preds_logits, frame_lens,
                          padded_tokens_gt, token_lens, alpha=0.2)
    ref = jax.block_until_ready(ref)

    assert bool(jnp.isfinite(loss)), f"loss not finite: {loss}"
    assert abs(float(loss) - float(ref)) <= 2e-3 * max(1.0, abs(float(ref))), \
        f"kernel={float(loss)} ref={float(ref)}"
    print("KERNEL_OK")
</pallas_src>

<mosaic_0001>
module attributes {stable_mosaic.version = 11 : i64} {
  func.func @_custom_loss_kernel(%arg0: i32, %arg1: i32, %arg2: memref<8x8x32xf32, #tpu.memory_space<vmem>>, %arg3: memref<8x6x32xf32, #tpu.memory_space<vmem>>, %arg4: memref<8x1xi32, #tpu.memory_space<vmem>>, %arg5: memref<8x6xi32, #tpu.memory_space<vmem>>, %arg6: memref<8x1xi32, #tpu.memory_space<vmem>>, %arg7: memref<1x8x128xf32, #tpu.memory_space<vmem>>, %arg8: memref<8x128xf32, #tpu.memory_space<vmem>>, %arg9: memref<8x128x32xf32, #tpu.memory_space<vmem>>, %arg10: memref<8x128xf32, #tpu.memory_space<vmem>>) attributes {dimension_semantics = [#tpu.dimension_semantics<parallel>, #tpu.dimension_semantics<arbitrary>], iteration_bounds = array<i64: 1, 2>, scalar_prefetch = 0 : i64, scratch_operands = 3 : i64, tpu.core_type = #tpu.core_type<tc>, window_params = [{transform_indices = @transform_0, window_bounds = array<i64: 8, 8, 32>}, {transform_indices = @transform_1, window_bounds = array<i64: 8, 6, 32>}, {transform_indices = @transform_2, window_bounds = array<i64: 8, 1>}, {transform_indices = @transform_3, window_bounds = array<i64: 8, 6>}, {transform_indices = @transform_4, window_bounds = array<i64: 8, 1>}, {transform_indices = @transform_5, window_bounds = array<i64: 1, 8, 128>}]} {
    %c0 = arith.constant 0 : index
    %c0_0 = arith.constant 0 : index
    %0 = vector.load %arg4[%c0, %c0_0] : memref<8x1xi32, #tpu.memory_space<vmem>>, vector<8x1xi32>
    %c0_1 = arith.constant 0 : index
    %c0_2 = arith.constant 0 : index
    %1 = vector.load %arg6[%c0_1, %c0_2] : memref<8x1xi32, #tpu.memory_space<vmem>>, vector<8x1xi32>
    %2 = tpu.iota {dimensions = array<i32: 1>} : vector<8x128xi32>
    %c0_i32 = arith.constant 0 : i32
    %3 = arith.cmpi eq, %arg1, %c0_i32 : i32
    %4 = arith.extui %3 : i1 to i32
    %c0_i32_3 = arith.constant 0 : i32
    %5 = arith.cmpi ne, %4, %c0_i32_3 : i32
    scf.if %5 {
      %c0_48 = arith.constant 0 : index
      %c0_49 = arith.constant 0 : index
      %248 = vector.load %arg5[%c0_48, %c0_49] : memref<8x6xi32, #tpu.memory_space<vmem>>, vector<8x6xi32>
      %249 = tpu.iota {dimensions = array<i32: 0>} : vector<6x128xi32>
      %250 = tpu.iota {dimensions = array<i32: 1>} : vector<6x128xi32>
      %c2_i32_50 = arith.constant 2 : i32
      %251 = vector.broadcast %c2_i32_50 : i32 to vector<6x128xi32>
      %252 = arith.muli %251, %249 : vector<6x128xi32>
      %c1_i32_51 = arith.constant 1 : i32
      %253 = vector.broadcast %c1_i32_51 : i32 to vector<6x128xi32>
      %254 = arith.addi %252, %253 : vector<6x128xi32>
      %255 = arith.cmpi eq, %250, %254 : vector<6x128xi32>
      %256 = arith.extui %255 : vector<6x128xi1> to vector<6x128xi32>
      %257 = vector.shape_cast %248 : vector<8x6xi32> to vector<8x6x1xi32>
      %258 = vector.shape_cast %256 : vector<6x128xi32> to vector<1x6x128xi32>
      %259 = vector.broadcast %257 : vector<8x6x1xi32> to vector<8x6x128xi32>
      %260 = vector.broadcast %258 : vector<1x6x128xi32> to vector<8x6x128xi32>
      %261 = arith.muli %259, %260 : vector<8x6x128xi32>
      %cst_52 = arith.constant dense<0> : vector<8x128xi32>
      %262 = vector.multi_reduction <add>, %261, %cst_52 [1] : vector<8x6x128xi32> to vector<8x128xi32>
      %263 = tpu.iota {dimensions = array<i32: 2>} : vector<8x128x32xi32>
      %264 = vector.shape_cast %262 : vector<8x128xi32> to vector<8x128x1xi32>
      %265 = vector.broadcast %264 : vector<8x128x1xi32> to vector<8x128x32xi32>
      %266 = arith.cmpi eq, %263, %265 : vector<8x128x32xi32>
      %267 = arith.extui %266 : vector<8x128x32xi1> to vector<8x128x32xi32>
      %268 = arith.sitofp %267 : vector<8x128x32xi32> to vector<8x128x32xf32>
      %c0_53 = arith.constant 0 : index
      %c0_54 = arith.constant 0 : index
      %c0_55 = arith.constant 0 : index
      %269 = vector.load %arg9[%c0_53, %c0_54, %c0_55] : memref<8x128x32xf32, #tpu.memory_space<vmem>>, vector<8x128x32xf32>
      tpu.vector_store %arg9[%c0_53, %c0_54, %c0_55], %268 {strides = array<i32>} : memref<8x128x32xf32, #tpu.memory_space<vmem>>, vector<8x128x32xf32>,
      %c0_i32_56 = arith.constant 0 : i32
      %270 = vector.broadcast %c0_i32_56 : i32 to vector<8x2xi32>
      %271 = vector.extract_strided_slice %262 {offsets = [0, 0], sizes = [8, 126], strides = [1, 1]} : vector<8x128xi32> to vector<8x126xi32>
      %272 = tpu.concatenate %270, %271 in 1 : vector<8x2xi32>, vector<8x126xi32> -> vector<8x128xi32>
      %c2_i32_57 = arith.constant 2 : i32
      %c0_i32_58 = arith.constant 0 : i32
      %273 = arith.cmpi eq, %c2_i32_57, %c0_i32_58 : i32
      %c1_i32_59 = arith.constant 1 : i32
      %274 = arith.select %273, %c1_i32_59, %c2_i32_57 : i32
      %275 = vector.broadcast %274 : i32 to vector<8x128xi32>
      %276 = arith.remsi %2, %275 : vector<8x128xi32>
      %c0_i32_60 = arith.constant 0 : i32
      %277 = vector.broadcast %c0_i32_60 : i32 to vector<8x128xi32>
      %278 = arith.cmpi ne, %276, %277 : vector<8x128xi32>
      %c0_i32_61 = arith.constant 0 : i32
      %279 = vector.broadcast %c0_i32_61 : i32 to vector<8x128xi32>
      %280 = arith.cmpi slt, %276, %279 : vector<8x128xi32>
      %c0_i32_62 = arith.constant 0 : i32
      %281 = arith.cmpi slt, %274, %c0_i32_62 : i32
      %282 = vector.broadcast %281 : i1 to vector<8x128xi1>
      %283 = vector.broadcast %282 : vector<8x128xi1> to vector<8x128xi1>
      %284 = arith.xori %280, %283 : vector<8x128xi1>
      %285 = arith.andi %284, %278 : vector<8x128xi1>
      %286 = vector.broadcast %274 : i32 to vector<8x128xi32>
      %287 = arith.addi %276, %286 : vector<8x128xi32>
      %288 = arith.select %285, %287, %276 : vector<8x128xi1>, vector<8x128xi32>
      %c1_i32_63 = arith.constant 1 : i32
      %289 = vector.broadcast %c1_i32_63 : i32 to vector<8x128xi32>
      %290 = arith.cmpi eq, %288, %289 : vector<8x128xi32>
      %c3_i32_64 = arith.constant 3 : i32
      %291 = vector.broadcast %c3_i32_64 : i32 to vector<8x128xi32>
      %292 = arith.cmpi sge, %2, %291 : vector<8x128xi32>
      %293 = arith.andi %290, %292 : vector<8x128xi1>
      %c13_i32 = arith.constant 13 : i32
      %294 = vector.broadcast %c13_i32 : i32 to vector<8x128xi32>
      %295 = arith.cmpi slt, %2, %294 : vector<8x128xi32>
      %296 = arith.andi %293, %295 : vector<8x128xi1>
      %297 = arith.cmpi ne, %262, %272 : vector<8x128xi32>
      %298 = arith.andi %296, %297 : vector<8x128xi1>
      %cst_65 = arith.constant 0.000000e+00 : f32
      %cst_66 = arith.constant -1.000000e+30 : f32
      %299 = vector.broadcast %cst_65 : f32 to vector<8x128xf32>
      %300 = vector.broadcast %cst_66 : f32 to vector<8x128xf32>
      %301 = arith.select %298, %299, %300 : vector<8x128xi1>, vector<8x128xf32>
      %c0_67 = arith.constant 0 : index
      %c0_68 = arith.constant 0 : index
      %302 = vector.load %arg10[%c0_67, %c0_68] : memref<8x128xf32, #tpu.memory_space<vmem>>, vector<8x128xf32>
      tpu.vector_store %arg10[%c0_67, %c0_68], %301 {strides = array<i32>} : memref<8x128xf32, #tpu.memory_space<vmem>>, vector<8x128xf32>,
    } else {
    }
    %c0_4 = arith.constant 0 : index
    %c0_5 = arith.constant 0 : index
    %c0_6 = arith.constant 0 : index
    %6 = vector.load %arg2[%c0_4, %c0_5, %c0_6] : memref<8x8x32xf32, #tpu.memory_space<vmem>>, vector<8x8x32xf32>
    %c0_7 = arith.constant 0 : index
    %c0_8 = arith.constant 0 : index
    %c0_9 = arith.constant 0 : index
    %7 = vector.load %arg9[%c0_7, %c0_8, %c0_9] : memref<8x128x32xf32, #tpu.memory_space<vmem>>, vector<8x128x32xf32>
    "tpu.trace_start"() <{level = 10 : i32, message = "btc,bsc->bts"}> : () -> ()
    %cst = arith.constant dense<0.000000e+00> : vector<8x8x128xf32>
    %8 = tpu.matmul %6, %7, %cst {dimension_numbers = #tpu.dot_dimension_numbers<[2], [2], [1], [1], [0, 0, 0, 1, 1, 1], [0], [0]>} : vector<8x8x32xf32>, vector<8x128x32xf32>, vector<8x8x128xf32> -> vector<8x8x128xf32>
    %c0_i32_10 = arith.constant 0 : i32
    "tpu.trace_stop"() : () -> ()
    %9 = arith.cmpi eq, %arg1, %c0_i32_10 : i32
    %10 = arith.extui %9 : i1 to i32
    %c0_i32_11 = arith.constant 0 : i32
    %11 = arith.cmpi ne, %10, %c0_i32_11 : i32
    scf.if %11 {
      %c1_i32_48 = arith.constant 1 : i32
      %248 = vector.broadcast %c1_i32_48 : i32 to vector<8x128xi32>
      %249 = arith.cmpi sle, %2, %248 : vector<8x128xi32>
      %250 = vector.extract_strided_slice %8 {offsets = [0, 0, 0], sizes = [8, 1, 128], strides = [1, 1, 1]} : vector<8x8x128xf32> to vector<8x1x128xf32>
      %251 = vector.shape_cast %250 : vector<8x1x128xf32> to vector<8x128xf32>
      %cst_49 = arith.constant -1.000000e+30 : f32
      %252 = vector.broadcast %cst_49 : f32 to vector<8x128xf32>
      %253 = arith.select %249, %251, %252 : vector<8x128xi1>, vector<8x128xf32>
      %c0_50 = arith.constant 0 : index
      %c0_51 = arith.constant 0 : index
      %254 = vector.load %arg8[%c0_50, %c0_51] : memref<8x128xf32, #tpu.memory_space<vmem>>, vector<8x128xf32>
      tpu.vector_store %arg8[%c0_50, %c0_51], %253 {strides = array<i32>} : memref<8x128xf32, #tpu.memory_space<vmem>>, vector<8x128xf32>,
    } else {
    }
    %c1_i32 = arith.constant 1 : i32
    %12 = vector.broadcast %c1_i32 : i32 to vector<8x128xi32>
    %13 = arith.cmpi sge, %2, %12 : vector<8x128xi32>
    %cst_12 = arith.constant 0.000000e+00 : f32
    %cst_13 = arith.constant -1.000000e+30 : f32
    %14 = vector.broadcast %cst_12 : f32 to vector<8x128xf32>
    %15 = vector.broadcast %cst_13 : f32 to vector<8x128xf32>
    %16 = arith.select %13, %14, %15 : vector<8x128xi1>, vector<8x128xf32>
    %c0_14 = arith.constant 0 : index
    %c0_15 = arith.constant 0 : index
    %17 = vector.load %arg10[%c0_14, %c0_15] : memref<8x128xf32, #tpu.memory_space<vmem>>, vector<8x128xf32>
    %c0_16 = arith.constant 0 : index
    %c0_17 = arith.constant 0 : index
    %18 = vector.load %arg8[%c0_16, %c0_17] : memref<8x128xf32, #tpu.memory_space<vmem>>, vector<8x128xf32>
    %c8_i32 = arith.constant 8 : i32
    %19 = arith.muli %arg1, %c8_i32 : i32
    %20 = vector.extract_strided_slice %8 {offsets = [0, 0, 0], sizes = [8, 1, 128], strides = [1, 1, 1]} : vector<8x8x128xf32> to vector<8x1x128xf32>
    %21 = vector.shape_cast %20 : vector<8x1x128xf32> to vector<8x128xf32>
    %c1_i32_18 = arith.constant 1 : i32
    %22 = tpu.dynamic_rotate %18 by %c1_i32_18 dim 1 : vector<8x128xf32>, i32 -> vector<8x128xf32>
    %23 = arith.addf %22, %16 : vector<8x128xf32>
    %c2_i32 = arith.constant 2 : i32
    %24 = tpu.dynamic_rotate %18 by %c2_i32 dim 1 : vector<8x128xf32>, i32 -> vector<8x128xf32>
    %25 = arith.addf %24, %17 : vector<8x128xf32>
    %26 = arith.maximumf %18, %23 : vector<8x128xf32>
    %27 = arith.maximumf %26, %25 : vector<8x128xf32>
    %28 = arith.subf %18, %27 : vector<8x128xf32>
    %29 = math.exp %28 : vector<8x128xf32>
    %30 = arith.subf %23, %27 : vector<8x128xf32>
    %31 = math.exp %30 : vector<8x128xf32>
    %32 = arith.addf %29, %31 : vector<8x128xf32>
    %33 = arith.subf %25, %27 : vector<8x128xf32>
    %34 = math.exp %33 : vector<8x128xf32>
    %35 = arith.addf %32, %34 : vector<8x128xf32>
    %36 = math.log %35 : vector<8x128xf32>
    %37 = arith.addf %27, %36 : vector<8x128xf32>
    %38 = arith.addf %37, %21 : vector<8x128xf32>
    %c0_i32_19 = arith.constant 0 : i32
    %39 = arith.addi %19, %c0_i32_19 : i32
    %c1_i32_20 = arith.constant 1 : i32
    %40 = arith.cmpi sge, %39, %c1_i32_20 : i32
    %41 = vector.broadcast %39 : i32 to vector<8x1xi32>
    %42 = arith.cmpi slt, %41, %0 : vector<8x1xi32>
    %43 = vector.broadcast %40 : i1 to vector<8x1xi1>
    %44 = arith.andi %43, %42 : vector<8x1xi1>
    %45 = vector.shape_cast %44 : vector<8x1xi1> to vector<8x1xi1>
    %46 = vector.broadcast %45 : vector<8x1xi1> to vector<8x128xi1>
    %47 = arith.select %46, %38, %18 : vector<8x128xi1>, vector<8x128xf32>
    %48 = vector.extract_strided_slice %8 {offsets = [0, 1, 0], sizes = [8, 1, 128], strides = [1, 1, 1]} : vector<8x8x128xf32> to vector<8x1x128xf32>
    %49 = vector.shape_cast %48 : vector<8x1x128xf32> to vector<8x128xf32>
    %c1_i32_21 = arith.constant 1 : i32
    %50 = tpu.dynamic_rotate %47 by %c1_i32_21 dim 1 : vector<8x128xf32>, i32 -> vector<8x128xf32>
    %51 = arith.addf %50, %16 : vector<8x128xf32>
    %c2_i32_22 = arith.constant 2 : i32
    %52 = tpu.dynamic_rotate %47 by %c2_i32_22 dim 1 : vector<8x128xf32>, i32 -> vector<8x128xf32>
    %53 = arith.addf %52, %17 : vector<8x128xf32>
    %54 = arith.maximumf %47, %51 : vector<8x128xf32>
    %55 = arith.maximumf %54, %53 : vector<8x128xf32>
    %56 = arith.subf %47, %55 : vector<8x128xf32>
    %57 = math.exp %56 : vector<8x128xf32>
    %58 = arith.subf %51, %55 : vector<8x128xf32>
    %59 = math.exp %58 : vector<8x128xf32>
    %60 = arith.addf %57, %59 : vector<8x128xf32>
    %61 = arith.subf %53, %55 : vector<8x128xf32>
    %62 = math.exp %61 : vector<8x128xf32>
    %63 = arith.addf %60, %62 : vector<8x128xf32>
    %64 = math.log %63 : vector<8x128xf32>
    %65 = arith.addf %55, %64 : vector<8x128xf32>
    %66 = arith.addf %65, %49 : vector<8x128xf32>
    %c1_i32_23 = arith.constant 1 : i32
    %67 = arith.addi %19, %c1_i32_23 : i32
    %c1_i32_24 = arith.constant 1 : i32
    %68 = arith.cmpi sge, %67, %c1_i32_24 : i32
    %69 = vector.broadcast %67 : i32 to vector<8x1xi32>
    %70 = arith.cmpi slt, %69, %0 : vector<8x1xi32>
    %71 = vector.broadcast %68 : i1 to vector<8x1xi1>
    %72 = arith.andi %71, %70 : vector<8x1xi1>
    %73 = vector.shape_cast %72 : vector<8x1xi1> to vector<8x1xi1>
    %74 = vector.broadcast %73 : vector<8x1xi1> to vector<8x128xi1>
    %75 = arith.select %74, %66, %47 : vector<8x128xi1>, vector<8x128xf32>
    %76 = vector.extract_strided_slice %8 {offsets = [0, 2, 0], sizes = [8, 1, 128], strides = [1, 1, 1]} : vector<8x8x128xf32> to vector<8x1x128xf32>
    %77 = vector.shape_cast %76 : vector<8x1x128xf32> to vector<8x128xf32>
    %c1_i32_25 = arith.constant 1 : i32
    %78 = tpu.dynamic_rotate %75 by %c1_i32_25 dim 1 : vector<8x128xf32>, i32 -> vector<8x128xf32>
    %79 = arith.addf %78, %16 : vector<8x128xf32>
    %c2_i32_26 = arith.constant 2 : i32
    %80 = tpu.dynamic_rotate %75 by %c2_i32_26 dim 1 : vector<8x128xf32>, i32 -> vector<8x128xf32>
    %81 = arith.addf %80, %17 : vector<8x128xf32>
    %82 = arith.maximumf %75, %79 : vector<8x128xf32>
    %83 = arith.maximumf %82, %81 : vector<8x128xf32>
    %84 = arith.subf %75, %83 : vector<8x128xf32>
    %85 = math.exp %84 : vector<8x128xf32>
    %86 = arith.subf %79, %83 : vector<8x128xf32>
    %87 = math.exp %86 : vector<8x128xf32>
    %88 = arith.addf %85, %87 : vector<8x128xf32>
    %89 = arith.subf %81, %83 : vector<8x128xf32>
    %90 = math.exp %89 : vector<8x128xf32>
    %91 = arith.addf %88, %90 : vector<8x128xf32>
    %92 = math.log %91 : vector<8x128xf32>
    %93 = arith.addf %83, %92 : vector<8x128xf32>
    %94 = arith.addf %93, %77 : vector<8x128xf32>
    %c2_i32_27 = arith.constant 2 : i32
    %95 = arith.addi %19, %c2_i32_27 : i32
    %c1_i32_28 = arith.constant 1 : i32
    %96 = arith.cmpi sge, %95, %c1_i32_28 : i32
    %97 = vector.broadcast %95 : i32 to vector<8x1xi32>
    %98 = arith.cmpi slt, %97, %0 : vector<8x1xi32>
    %99 = vector.broadcast %96 : i1 to vector<8x1xi1>
    %100 = arith.andi %99, %98 : vector<8x1xi1>
    %101 = vector.shape_cast %100 : vector<8x1xi1> to vector<8x1xi1>
    %102 = vector.broadcast %101 : vector<8x1xi1> to vector<8x128xi1>
    %103 = arith.select %102, %94, %75 : vector<8x128xi1>, vector<8x128xf32>
    %104 = vector.extract_strided_slice %8 {offsets = [0, 3, 0], sizes = [8, 1, 128], strides = [1, 1, 1]} : vector<8x8x128xf32> to vector<8x1x128xf32>
    %105 = vector.shape_cast %104 : vector<8x1x128xf32> to vector<8x128xf32>
    %c1_i32_29 = arith.constant 1 : i32
    %106 = tpu.dynamic_rotate %103 by %c1_i32_29 dim 1 : vector<8x128xf32>, i32 -> vector<8x128xf32>
    %107 = arith.addf %106, %16 : vector<8x128xf32>
    %c2_i32_30 = arith.constant 2 : i32
    %108 = tpu.dynamic_rotate %103 by %c2_i32_30 dim 1 : vector<8x128xf32>, i32 -> vector<8x128xf32>
    %109 = arith.addf %108, %17 : vector<8x128xf32>
    %110 = arith.maximumf %103, %107 : vector<8x128xf32>
    %111 = arith.maximumf %110, %109 : vector<8x128xf32>
    %112 = arith.subf %103, %111 : vector<8x128xf32>
    %113 = math.exp %112 : vector<8x128xf32>
    %114 = arith.subf %107, %111 : vector<8x128xf32>
    %115 = math.exp %114 : vector<8x128xf32>
    %116 = arith.addf %113, %115 : vector<8x128xf32>
    %117 = arith.subf %109, %111 : vector<8x128xf32>
    %118 = math.exp %117 : vector<8x128xf32>
    %119 = arith.addf %116, %118 : vector<8x128xf32>
    %120 = math.log %119 : vector<8x128xf32>
    %121 = arith.addf %111, %120 : vector<8x128xf32>
    %122 = arith.addf %121, %105 : vector<8x128xf32>
    %c3_i32 = arith.constant 3 : i32
    %123 = arith.addi %19, %c3_i32 : i32
    %c1_i32_31 = arith.constant 1 : i32
    %124 = arith.cmpi sge, %123, %c1_i32_31 : i32
    %125 = vector.broadcast %123 : i32 to vector<8x1xi32>
    %126 = arith.cmpi slt, %125, %0 : vector<8x1xi32>
    %127 = vector.broadcast %124 : i1 to vector<8x1xi1>
    %128 = arith.andi %127, %126 : vector<8x1xi1>
    %129 = vector.shape_cast %128 : vector<8x1xi1> to vector<8x1xi1>
    %130 = vector.broadcast %129 : vector<8x1xi1> to vector<8x128xi1>
    %131 = arith.select %130, %122, %103 : vector<8x128xi1>, vector<8x128xf32>
    %132 = vector.extract_strided_slice %8 {offsets = [0, 4, 0], sizes = [8, 1, 128], strides = [1, 1, 1]} : vector<8x8x128xf32> to vector<8x1x128xf32>
    %133 = vector.shape_cast %132 : vector<8x1x128xf32> to vector<8x128xf32>
    %c1_i32_32 = arith.constant 1 : i32
    %134 = tpu.dynamic_rotate %131 by %c1_i32_32 dim 1 : vector<8x128xf32>, i32 -> vector<8x128xf32>
    %135 = arith.addf %134, %16 : vector<8x128xf32>
    %c2_i32_33 = arith.constant 2 : i32
    %136 = tpu.dynamic_rotate %131 by %c2_i32_33 dim 1 : vector<8x128xf32>, i32 -> vector<8x128xf32>
    %137 = arith.addf %136, %17 : vector<8x128xf32>
    %138 = arith.maximumf %131, %135 : vector<8x128xf32>
    %139 = arith.maximumf %138, %137 : vector<8x128xf32>
    %140 = arith.subf %131, %139 : vector<8x128xf32>
    %141 = math.exp %140 : vector<8x128xf32>
    %142 = arith.subf %135, %139 : vector<8x128xf32>
    %143 = math.exp %142 : vector<8x128xf32>
    %144 = arith.addf %141, %143 : vector<8x128xf32>
    %145 = arith.subf %137, %139 : vector<8x128xf32>
    %146 = math.exp %145 : vector<8x128xf32>
    %147 = arith.addf %144, %146 : vector<8x128xf32>
    %148 = math.log %147 : vector<8x128xf32>
    %149 = arith.addf %139, %148 : vector<8x128xf32>
    %150 = arith.addf %149, %133 : vector<8x128xf32>
    %c4_i32 = arith.constant 4 : i32
    %151 = arith.addi %19, %c4_i32 : i32
    %c1_i32_34 = arith.constant 1 : i32
    %152 = arith.cmpi sge, %151, %c1_i32_34 : i32
    %153 = vector.broadcast %151 : i32 to vector<8x1xi32>
    %154 = arith.cmpi slt, %153, %0 : vector<8x1xi32>
    %155 = vector.broadcast %152 : i1 to vector<8x1xi1>
    %156 = arith.andi %155, %154 : vector<8x1xi1>
    %157 = vector.shape_cast %156 : vector<8x1xi1> to vector<8x1xi1>
    %158 = vector.broadcast %157 : vector<8x1xi1> to vector<8x128xi1>
    %159 = arith.select %158, %150, %131 : vector<8x128xi1>, vector<8x128xf32>
    %160 = vector.extract_strided_slice %8 {offsets = [0, 5, 0], sizes = [8, 1, 128], strides = [1, 1, 1]} : vector<8x8x128xf32> to vector<8x1x128xf32>
    %161 = vector.shape_cast %160 : vector<8x1x128xf32> to vector<8x128xf32>
    %c1_i32_35 = arith.constant 1 : i32
    %162 = tpu.dynamic_rotate %159 by %c1_i32_35 dim 1 : vector<8x128xf32>, i32 -> vector<8x128xf32>
    %163 = arith.addf %162, %16 : vector<8x128xf32>
    %c2_i32_36 = arith.constant 2 : i32
    %164 = tpu.dynamic_rotate %159 by %c2_i32_36 dim 1 : vector<8x128xf32>, i32 -> vector<8x128xf32>
    %165 = arith.addf %164, %17 : vector<8x128xf32>
    %166 = arith.maximumf %159, %163 : vector<8x128xf32>
    %167 = arith.maximumf %166, %165 : vector<8x128xf32>
    %168 = arith.subf %159, %167 : vector<8x128xf32>
    %169 = math.exp %168 : vector<8x128xf32>
    %170 = arith.subf %163, %167 : vector<8x128xf32>
    %171 = math.exp %170 : vector<8x128xf32>
    %172 = arith.addf %169, %171 : vector<8x128xf32>
    %173 = arith.subf %165, %167 : vector<8x128xf32>
    %174 = math.exp %173 : vector<8x128xf32>
    %175 = arith.addf %172, %174 : vector<8x128xf32>
    %176 = math.log %175 : vector<8x128xf32>
    %177 = arith.addf %167, %176 : vector<8x128xf32>
    %178 = arith.addf %177, %161 : vector<8x128xf32>
    %c5_i32 = arith.constant 5 : i32
    %179 = arith.addi %19, %c5_i32 : i32
    %c1_i32_37 = arith.constant 1 : i32
    %180 = arith.cmpi sge, %179, %c1_i32_37 : i32
    %181 = vector.broadcast %179 : i32 to vector<8x1xi32>
    %182 = arith.cmpi slt, %181, %0 : vector<8x1xi32>
    %183 = vector.broadcast %180 : i1 to vector<8x1xi1>
    %184 = arith.andi %183, %182 : vector<8x1xi1>
    %185 = vector.shape_cast %184 : vector<8x1xi1> to vector<8x1xi1>
    %186 = vector.broadcast %185 : vector<8x1xi1> to vector<8x128xi1>
    %187 = arith.select %186, %178, %159 : vector<8x128xi1>, vector<8x128xf32>
    %188 = vector.extract_strided_slice %8 {offsets = [0, 6, 0], sizes = [8, 1, 128], strides = [1, 1, 1]} : vector<8x8x128xf32> to vector<8x1x128xf32>
    %189 = vector.shape_cast %188 : vector<8x1x128xf32> to vector<8x128xf32>
    %c1_i32_38 = arith.constant 1 : i32
    %190 = tpu.dynamic_rotate %187 by %c1_i32_38 dim 1 : vector<8x128xf32>, i32 -> vector<8x128xf32>
    %191 = arith.addf %190, %16 : vector<8x128xf32>
    %c2_i32_39 = arith.constant 2 : i32
    %192 = tpu.dynamic_rotate %187 by %c2_i32_39 dim 1 : vector<8x128xf32>, i32 -> vector<8x128xf32>
    %193 = arith.addf %192, %17 : vector<8x128xf32>
    %194 = arith.maximumf %187, %191 : vector<8x128xf32>
    %195 = arith.maximumf %194, %193 : vector<8x128xf32>
    %196 = arith.subf %187, %195 : vector<8x128xf32>
    %197 = math.exp %196 : vector<8x128xf32>
    %198 = arith.subf %191, %195 : vector<8x128xf32>
    %199 = math.exp %198 : vector<8x128xf32>
    %200 = arith.addf %197, %199 : vector<8x128xf32>
    %201 = arith.subf %193, %195 : vector<8x128xf32>
    %202 = math.exp %201 : vector<8x128xf32>
    %203 = arith.addf %200, %202 : vector<8x128xf32>
    %204 = math.log %203 : vector<8x128xf32>
    %205 = arith.addf %195, %204 : vector<8x128xf32>
    %206 = arith.addf %205, %189 : vector<8x128xf32>
    %c6_i32 = arith.constant 6 : i32
    %207 = arith.addi %19, %c6_i32 : i32
    %c1_i32_40 = arith.constant 1 : i32
    %208 = arith.cmpi sge, %207, %c1_i32_40 : i32
    %209 = vector.broadcast %207 : i32 to vector<8x1xi32>
    %210 = arith.cmpi slt, %209, %0 : vector<8x1xi32>
    %211 = vector.broadcast %208 : i1 to vector<8x1xi1>
    %212 = arith.andi %211, %210 : vector<8x1xi1>
    %213 = vector.shape_cast %212 : vector<8x1xi1> to vector<8x1xi1>
    %214 = vector.broadcast %213 : vector<8x1xi1> to vector<8x128xi1>
    %215 = arith.select %214, %206, %187 : vector<8x128xi1>, vector<8x128xf32>
    %216 = vector.extract_strided_slice %8 {offsets = [0, 7, 0], sizes = [8, 1, 128], strides = [1, 1, 1]} : vector<8x8x128xf32> to vector<8x1x128xf32>
    %217 = vector.shape_cast %216 : vector<8x1x128xf32> to vector<8x128xf32>
    %c1_i32_41 = arith.constant 1 : i32
    %218 = tpu.dynamic_rotate %215 by %c1_i32_41 dim 1 : vector<8x128xf32>, i32 -> vector<8x128xf32>
    %219 = arith.addf %218, %16 : vector<8x128xf32>
    %c2_i32_42 = arith.constant 2 : i32
    %220 = tpu.dynamic_rotate %215 by %c2_i32_42 dim 1 : vector<8x128xf32>, i32 -> vector<8x128xf32>
    %221 = arith.addf %220, %17 : vector<8x128xf32>
    %222 = arith.maximumf %215, %219 : vector<8x128xf32>
    %223 = arith.maximumf %222, %221 : vector<8x128xf32>
    %224 = arith.subf %215, %223 : vector<8x128xf32>
    %225 = math.exp %224 : vector<8x128xf32>
    %226 = arith.subf %219, %223 : vector<8x128xf32>
    %227 = math.exp %226 : vector<8x128xf32>
    %228 = arith.addf %225, %227 : vector<8x128xf32>
    %229 = arith.subf %221, %223 : vector<8x128xf32>
    %230 = math.exp %229 : vector<8x128xf32>
    %231 = arith.addf %228, %230 : vector<8x128xf32>
    %232 = math.log %231 : vector<8x128xf32>
    %233 = arith.addf %223, %232 : vector<8x128xf32>
    %234 = arith.addf %233, %217 : vector<8x128xf32>
    %c7_i32 = arith.constant 7 : i32
    %235 = arith.addi %19, %c7_i32 : i32
    %c1_i32_43 = arith.constant 1 : i32
    %236 = arith.cmpi sge, %235, %c1_i32_43 : i32
    %237 = vector.broadcast %235 : i32 to vector<8x1xi32>
    %238 = arith.cmpi slt, %237, %0 : vector<8x1xi32>
    %239 = vector.broadcast %236 : i1 to vector<8x1xi1>
    %240 = arith.andi %239, %238 : vector<8x1xi1>
    %241 = vector.shape_cast %240 : vector<8x1xi1> to vector<8x1xi1>
    %242 = vector.broadcast %241 : vector<8x1xi1> to vector<8x128xi1>
    %243 = arith.select %242, %234, %215 : vector<8x128xi1>, vector<8x128xf32>
    %c0_44 = arith.constant 0 : index
    %c0_45 = arith.constant 0 : index
    %244 = vector.load %arg8[%c0_44, %c0_45] : memref<8x128xf32, #tpu.memory_space<vmem>>, vector<8x128xf32>
    tpu.vector_store %arg8[%c0_44, %c0_45], %243 {strides = array<i32>} : memref<8x128xf32, #tpu.memory_space<vmem>>, vector<8x128xf32>,
    %c1_i32_46 = arith.constant 1 : i32
    %245 = arith.cmpi eq, %arg1, %c1_i32_46 : i32
    %246 = arith.extui %245 : i1 to i32
    %c0_i32_47 = arith.constant 0 : i32
    %247 = arith.cmpi ne, %246, %c0_i32_47 : i32
    scf.if %247 {
      %c0_48 = arith.constant 0 : index
      %c0_49 = arith.constant 0 : index
      %c0_50 = arith.constant 0 : index
      %248 = vector.load %arg3[%c0_48, %c0_49, %c0_50] : memref<8x6x32xf32, #tpu.memory_space<vmem>>, vector<8x6x32xf32>
      %c0_51 = arith.constant 0 : index
      %c0_52 = arith.constant 0 : index
      %249 = vector.load %arg5[%c0_51, %c0_52] : memref<8x6xi32, #tpu.memory_space<vmem>>, vector<8x6xi32>
      %250 = tpu.iota {dimensions = array<i32: 2>} : vector<8x6x32xi32>
      %251 = vector.shape_cast %249 : vector<8x6xi32> to vector<8x6x1xi32>
      %252 = vector.broadcast %251 : vector<8x6x1xi32> to vector<8x6x32xi32>
      %253 = arith.cmpi eq, %250, %252 : vector<8x6x32xi32>
      %cst_53 = arith.constant dense<0xFF800000> : vector<8x6xf32>
      %254 = vector.multi_reduction <maximumf>, %248, %cst_53 [2] : vector<8x6x32xf32> to vector<8x6xf32>
      %255 = vector.shape_cast %254 : vector<8x6xf32> to vector<8x6x1xf32>
      %256 = vector.shape_cast %255 : vector<8x6x1xf32> to vector<8x6xf32>
      %257 = vector.broadcast %255 : vector<8x6x1xf32> to vector<8x6x32xf32>
      %258 = arith.subf %248, %257 : vector<8x6x32xf32>
      %259 = math.exp %258 : vector<8x6x32xf32>
      %cst_54 = arith.constant dense<0.000000e+00> : vector<8x6xf32>
      %260 = vector.multi_reduction <add>, %259, %cst_54 [2] : vector<8x6x32xf32> to vector<8x6xf32>
      %261 = math.log %260 : vector<8x6xf32>
      %262 = arith.addf %256, %261 : vector<8x6xf32>
      %cst_55 = arith.constant 0.000000e+00 : f32
      %263 = vector.broadcast %cst_55 : f32 to vector<8x6x32xf32>
      %264 = arith.select %253, %248, %263 : vector<8x6x32xi1>, vector<8x6x32xf32>
      %cst_56 = arith.constant dense<0.000000e+00> : vector<8x6xf32>
      %265 = vector.multi_reduction <add>, %264, %cst_56 [2] : vector<8x6x32xf32> to vector<8x6xf32>
      %266 = arith.subf %262, %265 : vector<8x6xf32>
      %267 = tpu.iota {dimensions = array<i32: 1>} : vector<8x6xi32>
      %268 = vector.broadcast %1 : vector<8x1xi32> to vector<8x6xi32>
      %269 = arith.cmpi slt, %267, %268 : vector<8x6xi32>
      %cst_57 = arith.constant 0.000000e+00 : f32
      %270 = vector.broadcast %cst_57 : f32 to vector<8x6xf32>
      %271 = arith.select %269, %266, %270 : vector<8x6xi1>, vector<8x6xf32>
      %272 = vector.shape_cast %271 : vector<8x6xf32> to vector<1x8x6xf32>
      %cst_58 = arith.constant dense<0.000000e+00> : vector<1xf32>
      %273 = vector.multi_reduction <add>, %272, %cst_58 [1, 2] : vector<1x8x6xf32> to vector<1xf32>
      %274 = vector.shape_cast %273 : vector<1xf32> to vector<1x1x1xf32>
      %275 = vector.extract %274[0, 0, 0] : f32 from vector<1x1x1xf32>
      %276 = arith.extui %269 : vector<8x6xi1> to vector<8x6xi32>
      %277 = arith.sitofp %276 : vector<8x6xi32> to vector<8x6xf32>
      %278 = vector.shape_cast %277 : vector<8x6xf32> to vector<1x8x6xf32>
      %cst_59 = arith.constant dense<0.000000e+00> : vector<1xf32>
      %279 = vector.multi_reduction <add>, %278, %cst_59 [1, 2] : vector<1x8x6xf32> to vector<1xf32>
      %280 = vector.shape_cast %279 : vector<1xf32> to vector<1x1x1xf32>
      %281 = vector.extract %280[0, 0, 0] : f32 from vector<1x1x1xf32>
      %c2_i32_60 = arith.constant 2 : i32
      %282 = vector.broadcast %c2_i32_60 : i32 to vector<8x1xi32>
      %283 = arith.muli %282, %1 : vector<8x1xi32>
      %284 = vector.broadcast %283 : vector<8x1xi32> to vector<8x128xi32>
      %285 = arith.cmpi eq, %2, %284 : vector<8x128xi32>
      %c2_i32_61 = arith.constant 2 : i32
      %286 = vector.broadcast %c2_i32_61 : i32 to vector<8x1xi32>
      %287 = arith.muli %286, %1 : vector<8x1xi32>
      %c1_i32_62 = arith.constant 1 : i32
      %288 = vector.broadcast %c1_i32_62 : i32 to vector<8x1xi32>
      %289 = arith.subi %287, %288 : vector<8x1xi32>
      %290 = vector.broadcast %289 : vector<8x1xi32> to vector<8x128xi32>
      %291 = arith.cmpi eq, %2, %290 : vector<8x128xi32>
      %292 = arith.ori %285, %291 : vector<8x128xi1>
      %cst_63 = arith.constant -1.000000e+30 : f32
      %293 = vector.broadcast %cst_63 : f32 to vector<8x128xf32>
      %294 = arith.select %292, %243, %293 : vector<8x128xi1>, vector<8x128xf32>
      %cst_64 = arith.constant dense<0xFF800000> : vector<8xf32>
      %295 = vector.multi_reduction <maximumf>, %294, %cst_64 [1] : vector<8x128xf32> to vector<8xf32>
      %296 = vector.shape_cast %295 : vector<8xf32> to vector<8x1xf32>
      %297 = vector.broadcast %296 : vector<8x1xf32> to vector<8x128xf32>
      %298 = arith.subf %294, %297 : vector<8x128xf32>
      %299 = math.exp %298 : vector<8x128xf32>
      %cst_65 = arith.constant dense<0.000000e+00> : vector<8xf32>
      %300 = vector.multi_reduction <add>, %299, %cst_65 [1] : vector<8x128xf32> to vector<8xf32>
      %301 = vector.shape_cast %300 : vector<8xf32> to vector<8x1xf32>
      %302 = math.log %301 : vector<8x1xf32>
      %303 = arith.addf %296, %302 : vector<8x1xf32>
      %cst_66 = arith.constant 0.000000e+00 : f32
      %304 = vector.broadcast %cst_66 : f32 to vector<8x1xf32>
      %305 = arith.subf %304, %303 : vector<8x1xf32>
      %cst_67 = arith.constant 1.000000e+20 : f32
      %306 = vector.broadcast %cst_67 : f32 to vector<8x1xf32>
      %307 = arith.cmpf ogt, %305, %306 : vector<8x1xf32>
      %cst_68 = arith.constant 0.000000e+00 : f32
      %308 = vector.broadcast %cst_68 : f32 to vector<8x1xf32>
      %309 = arith.select %307, %308, %305 : vector<8x1xi1>, vector<8x1xf32>
      %310 = arith.sitofp %1 : vector<8x1xi32> to vector<8x1xf32>
      %cst_69 = arith.constant 1.000000e+00 : f32
      %311 = vector.broadcast %cst_69 : f32 to vector<8x1xf32>
      %312 = arith.maximumf %310, %311 : vector<8x1xf32>
      %313 = arith.divf %309, %312 : vector<8x1xf32>
      %314 = tpu.iota {dimensions = array<i32: 0>} : vector<8x1xi32>
      %c8_i32_70 = arith.constant 8 : i32
      %315 = arith.muli %arg0, %c8_i32_70 : i32
      %316 = vector.broadcast %315 : i32 to vector<8x1xi32>
      %317 = arith.addi %316, %314 : vector<8x1xi32>
      %c2_i32_71 = arith.constant 2 : i32
      %318 = vector.broadcast %c2_i32_71 : i32 to vector<8x1xi32>
      %319 = arith.cmpi slt, %317, %318 : vector<8x1xi32>
      %cst_72 = arith.constant 0.000000e+00 : f32
      %320 = vector.broadcast %cst_72 : f32 to vector<8x1xf32>
      %321 = arith.select %319, %313, %320 : vector<8x1xi1>, vector<8x1xf32>
      %322 = vector.shape_cast %321 : vector<8x1xf32> to vector<1x8x1xf32>
      %cst_73 = arith.constant dense<0.000000e+00> : vector<1xf32>
      %323 = vector.multi_reduction <add>, %322, %cst_73 [1, 2] : vector<1x8x1xf32> to vector<1xf32>
      %324 = vector.shape_cast %323 : vector<1xf32> to vector<1x1x1xf32>
      %325 = vector.extract %324[0, 0, 0] : f32 from vector<1x1x1xf32>
      %326 = tpu.iota {dimensions = array<i32: 2>} : vector<1x8x128xi32>
      %327 = tpu.iota {dimensions = array<i32: 1>} : vector<1x8x128xi32>
      %c0_i32_74 = arith.constant 0 : i32
      %328 = vector.broadcast %c0_i32_74 : i32 to vector<1x8x128xi32>
      %329 = arith.cmpi eq, %327, %328 : vector<1x8x128xi32>
      %c0_i32_75 = arith.constant 0 : i32
      %330 = vector.broadcast %c0_i32_75 : i32 to vector<1x8x128xi32>
      %331 = arith.cmpi eq, %326, %330 : vector<1x8x128xi32>
      %332 = arith.andi %329, %331 : vector<1x8x128xi1>
      %cst_76 = arith.constant 0.000000e+00 : f32
      %333 = vector.broadcast %275 : f32 to vector<1x8x128xf32>
      %334 = vector.broadcast %cst_76 : f32 to vector<1x8x128xf32>
      %335 = arith.select %332, %333, %334 : vector<1x8x128xi1>, vector<1x8x128xf32>
      %c1_i32_77 = arith.constant 1 : i32
      %336 = vector.broadcast %c1_i32_77 : i32 to vector<1x8x128xi32>
      %337 = arith.cmpi eq, %326, %336 : vector<1x8x128xi32>
      %338 = arith.andi %329, %337 : vector<1x8x128xi1>
      %cst_78 = arith.constant 0.000000e+00 : f32
      %339 = vector.broadcast %281 : f32 to vector<1x8x128xf32>
      %340 = vector.broadcast %cst_78 : f32 to vector<1x8x128xf32>
      %341 = arith.select %338, %339, %340 : vector<1x8x128xi1>, vector<1x8x128xf32>
      %342 = arith.addf %335, %341 : vector<1x8x128xf32>
      %c2_i32_79 = arith.constant 2 : i32
      %343 = vector.broadcast %c2_i32_79 : i32 to vector<1x8x128xi32>
      %344 = arith.cmpi eq, %326, %343 : vector<1x8x128xi32>
      %345 = arith.andi %329, %344 : vector<1x8x128xi1>
      %cst_80 = arith.constant 0.000000e+00 : f32
      %346 = vector.broadcast %325 : f32 to vector<1x8x128xf32>
      %347 = vector.broadcast %cst_80 : f32 to vector<1x8x128xf32>
      %348 = arith.select %345, %346, %347 : vector<1x8x128xi1>, vector<1x8x128xf32>
      %349 = arith.addf %342, %348 : vector<1x8x128xf32>
      %c0_81 = arith.constant 0 : index
      %c0_82 = arith.constant 0 : index
      %c0_83 = arith.constant 0 : index
      %350 = vector.load %arg7[%c0_81, %c0_82, %c0_83] : memref<1x8x128xf32, #tpu.memory_space<vmem>>, vector<1x8x128xf32>
      tpu.vector_store %arg7[%c0_81, %c0_82, %c0_83], %349 {strides = array<i32>} : memref<1x8x128xf32, #tpu.memory_space<vmem>>, vector<1x8x128xf32>,
    } else {
    }
    return
  }
  func.func @transform_0(%arg0: i32, %arg1: i32) -> (i32, i32, i32) {
    %c0_i32 = arith.constant 0 : i32
    %c0_i32_0 = arith.constant 0 : i32
    return %arg0, %arg1, %c0_i32 : i32, i32, i32
  }
  func.func @transform_1(%arg0: i32, %arg1: i32) -> (i32, i32, i32) {
    %c0_i32 = arith.constant 0 : i32
    %c0_i32_0 = arith.constant 0 : i32
    %c0_i32_1 = arith.constant 0 : i32
    return %arg0, %c0_i32, %c0_i32_0 : i32, i32, i32
  }
  func.func @transform_2(%arg0: i32, %arg1: i32) -> (i32, i32) {
    %c0_i32 = arith.constant 0 : i32
    %c0_i32_0 = arith.constant 0 : i32
    return %arg0, %c0_i32 : i32, i32
  }
  func.func @transform_3(%arg0: i32, %arg1: i32) -> (i32, i32) {
    %c0_i32 = arith.constant 0 : i32
    %c0_i32_0 = arith.constant 0 : i32
    return %arg0, %c0_i32 : i32, i32
  }
  func.func @transform_4(%arg0: i32, %arg1: i32) -> (i32, i32) {
    %c0_i32 = arith.constant 0 : i32
    %c0_i32_0 = arith.constant 0 : i32
    return %arg0, %c0_i32 : i32, i32
  }
  func.func @transform_5(%arg0: i32, %arg1: i32) -> (i32, i32, i32) {
    %c0_i32 = arith.constant 0 : i32
    %c0_i32_0 = arith.constant 0 : i32
    %c0_i32_1 = arith.constant 0 : i32
    return %arg0, %c0_i32, %c0_i32_0 : i32, i32, i32
  }
}

</mosaic_0001>

<llo_original>
// kernel: tpu_custom_call.1
$region0: #{tpu_custom_call.1}
  #allocation0 [shape = 'u32[]', space=smem, size = 0x4, offset = 0x4, fixed_abs, tag = 'smem constant byte address 0x4 - core index']
  #allocation1 [shape = 'u32[72,128]{1,0:T(1,128)}', space=vmem, size = 0x9000, scoped, tag = 'internal scratch']
  #allocation2 [shape = 'f32[8,128]{1,0:T(8,128)}', space=vmem, size = 0x1000, scoped, tag = 'scratch operand']
  #allocation3 [shape = 'f32[8,128,32]{2,1,0:T(8,128)}', space=vmem, size = 0x80000, scoped, tag = 'scratch operand']
  #allocation4 [shape = 'f32[8,128]{1,0:T(8,128)}', space=vmem, size = 0x1000, scoped, tag = 'scratch operand']
  %s0 = inlined_call_operand.vmem [shape: f32[8,16,32], index: 0, kind: input, shape index: {}]
  %s1 = inlined_call_operand.vmem [shape: f32[8,6,32], index: 1, kind: input, shape index: {}]
  %s2 = inlined_call_operand.vmem [shape: s32[8,1], index: 2, kind: input, shape index: {}]
  %s3 = inlined_call_operand.hbm [shape: s32[8,6], index: 3, kind: input, shape index: {}]
  %s4 = inlined_call_operand.vmem [shape: s32[8,1], index: 4, kind: input, shape index: {}]
  %s5 = inlined_call_operand.hbm [shape: f32[1,8,128], index: 5, kind: output, shape index: {}]
  %s6 = sld [smem:[#allocation0]]
  $region107: #{tpu_custom_call.1} parent=0
    _
  %s8 = ssub.s32 1, %s6
  %s9 = scalar_select 0, %s8, %s6
  $region1: #{tpu_custom_call.1} parent=0
    #allocation5 [shape = 'u8[65536]{0}', space=vmem, size = 0x10000, scoped, tag = 'input window, operand 0']
    #allocation6 [shape = 'u8[4096]{0}', space=vmem, size = 0x1000, scoped, tag = 'input window, operand 3, single buffered']
    #allocation7 [shape = 's32[2]{0}', space=sflag, size = 0x8, scoped, tag = 'scoped memory for tpu_custom_call.1']
    #allocation8 [shape = 's32[2]{0}', space=sflag, size = 0x8, scoped, tag = 'scoped memory for tpu_custom_call.1']
    #allocation9 [shape = 'u8[4096]{0}', space=vmem, size = 0x1000, scoped, tag = 'output window, operand 0, single buffered']
    %10 = vsyncpa [#allocation7], 0
    %11 = vsyncpa [#allocation8], 0
    loop: start=0, step=1, limit=4
    $region2: #{tpu_custom_call.1} parent=1 // loop_pre_header
      _
    $region3: #{tpu_custom_call.1} parent=1 // loop_header
      %s13 = sphi 0, %s17
      %p14 = scmp.ge.s32.totalorder %s13, 4
      %s20 = sphi 0, %s32
      %s21 = sphi 0, %s28
      %s22 = sphi 0, %s20
      %s23 = sphi 0, %s21
      %s24 = sphi 0, %s22
      %s25 = sphi 0, %s23
      %s37 = sphi 0, %s39
      %s40 = sphi 0, %s37
      %s41 = sphi 0, %s40
      %s57 = sphi 0, %s41
      %s63 = sphi 0, %s65
      %s66 = sphi 0, %s63
      %s67 = sphi 0, %s66
      %s83 = sphi 0, %s67
      %s89 = sphi 0, %s91
      %s92 = sphi 0, %s89
      %s93 = sphi 0, %s92
      %s109 = sphi 0, %s93
      %s115 = sphi 0, %s117
      %s118 = sphi 0, %s115
      %s119 = sphi 0, %s118
      %s135 = sphi 0, %s119
      %s141 = sphi 0, %s143
      %s144 = sphi 0, %s141
      %s145 = sphi 0, %s144
      %s161 = sphi 0, %s145
      %s167 = sphi 0, %s169
      %s170 = sphi 0, %s167
      %s171 = sphi 0, %s170
      %s187 = sphi 0, %s171
    $region4: #{tpu_custom_call.1} parent=1 // loop_header_branch
      %16 = sbr.rel (%p14) target = $region8
    $region5: #{tpu_custom_call.1} parent=1 // loop_body
      %s18 = ssub.s32 %s13, 1
      %s19 = ssub.s32 %s13, 2
      %s26 = sadd.s32 1, %s21
      %p27 = scmp.ge.s32.totalorder %s26, 2
      %s28 = scalar_select %p27, 0, %s26
      %s29 = sadd.s32 1, %s20
      %s30 = scalar_select %p27, %s29, %s20
      %p31 = scmp.ge.s32.totalorder %s30, 1
      %s32 = scalar_select %p31, 0, %s30
      %s33 = ssub.s32 %s20, %s32
      %s34 = ssub.s32 %s21, %s28
      %s35 = sor.u32 %s33, %s34
      %p36 = scmp.eq.s32.totalorder %s35, 0
      %s38 = sadd.s32 %s37, 1
      %s39 = scalar_select %p36, %s37, %s38
      %p42 = pneg %p36
      %p43 = scmp.eq.s32.totalorder %s13, 1
      %p44 = por %p42, %p43
      %p45 = scmp.ne.s32.totalorder %s37, %s40
      %p46 = scmp.eq.s32.totalorder %s13, 0
      %p47 = por %p45, %p46
      %p48 = scmp.ne.s32.totalorder %s37, %s40
      %p49 = scmp.eq.s32.totalorder %s18, 1
      %p50 = por %p48, %p49
      %p51 = scmp.ne.s32.totalorder %s40, %s41
      %p52 = scmp.eq.s32.totalorder %s18, 0
      %p53 = por %p51, %p52
      %p54 = scmp.ne.s32.totalorder %s40, %s41
      %p55 = scmp.eq.s32.totalorder %s19, 1
      %p56 = por %p54, %p55
      %p58 = scmp.ne.s32.totalorder %s41, %s57
      %p59 = scmp.eq.s32.totalorder %s19, 0
      %p60 = por %p58, %p59
      %s61 = ssub.s32 %s20, %s32
      %p62 = scmp.eq.s32.totalorder %s61, 0
      %s64 = sadd.s32 %s63, 1
      %s65 = scalar_select %p62, %s63, %s64
      %p68 = pneg %p62
      %p69 = scmp.eq.s32.totalorder %s13, 1
      %p70 = por %p68, %p69
      %p71 = scmp.ne.s32.totalorder %s63, %s66
      %p72 = scmp.eq.s32.totalorder %s13, 0
      %p73 = por %p71, %p72
      %p74 = scmp.ne.s32.totalorder %s63, %s66
      %p75 = scmp.eq.s32.totalorder %s18, 1
      %p76 = por %p74, %p75
      %p77 = scmp.ne.s32.totalorder %s66, %s67
      %p78 = scmp.eq.s32.totalorder %s18, 0
      %p79 = por %p77, %p78
      %p80 = scmp.ne.s32.totalorder %s66, %s67
      %p81 = scmp.eq.s32.totalorder %s19, 1
      %p82 = por %p80, %p81
      %p84 = scmp.ne.s32.totalorder %s67, %s83
      %p85 = scmp.eq.s32.totalorder %s19, 0
      %p86 = por %p84, %p85
      %s87 = ssub.s32 %s20, %s32
      %p88 = scmp.eq.s32.totalorder %s87, 0
      %s90 = sadd.s32 %s89, 1
      %s91 = scalar_select %p88, %s89, %s90
      %p94 = pneg %p88
      %p95 = scmp.eq.s32.totalorder %s13, 1
      %p96 = por %p94, %p95
      %p97 = scmp.ne.s32.totalorder %s89, %s92
      %p98 = scmp.eq.s32.totalorder %s13, 0
      %p99 = por %p97, %p98
      %p100 = scmp.ne.s32.totalorder %s89, %s92
      %p101 = scmp.eq.s32.totalorder %s18, 1
      %p102 = por %p100, %p101
      %p103 = scmp.ne.s32.totalorder %s92, %s93
      %p104 = scmp.eq.s32.totalorder %s18, 0
      %p105 = por %p103, %p104
      %p106 = scmp.ne.s32.totalorder %s92, %s93
      %p107 = scmp.eq.s32.totalorder %s19, 1
      %p108 = por %p106, %p107
      %p110 = scmp.ne.s32.totalorder %s93, %s109
      %p111 = scmp.eq.s32.totalorder %s19, 0
      %p112 = por %p110, %p111
      %s113 = ssub.s32 %s20, %s32
      %p114 = scmp.eq.s32.totalorder %s113, 0
      %s116 = sadd.s32 %s115, 1
      %s117 = scalar_select %p114, %s115, %s116
      %p120 = pneg %p114
      %p121 = scmp.eq.s32.totalorder %s13, 1
      %p122 = por %p120, %p121
      %p123 = scmp.ne.s32.totalorder %s115, %s118
      %p124 = scmp.eq.s32.totalorder %s13, 0
      %p125 = por %p123, %p124
      %p126 = scmp.ne.s32.totalorder %s115, %s118
      %p127 = scmp.eq.s32.totalorder %s18, 1
      %p128 = por %p126, %p127
      %p129 = scmp.ne.s32.totalorder %s118, %s119
      %p130 = scmp.eq.s32.totalorder %s18, 0
      %p131 = por %p129, %p130
      %p132 = scmp.ne.s32.totalorder %s118, %s119
      %p133 = scmp.eq.s32.totalorder %s19, 1
      %p134 = por %p132, %p133
      %p136 = scmp.ne.s32.totalorder %s119, %s135
      %p137 = scmp.eq.s32.totalorder %s19, 0
      %p138 = por %p136, %p137
      %s139 = ssub.s32 %s20, %s32
      %p140 = scmp.eq.s32.totalorder %s139, 0
      %s142 = sadd.s32 %s141, 1
      %s143 = scalar_select %p140, %s141, %s142
      %p146 = pneg %p140
      %p147 = scmp.eq.s32.totalorder %s13, 1
      %p148 = por %p146, %p147
      %p149 = scmp.ne.s32.totalorder %s141, %s144
      %p150 = scmp.eq.s32.totalorder %s13, 0
      %p151 = por %p149, %p150
      %p152 = scmp.ne.s32.totalorder %s141, %s144
      %p153 = scmp.eq.s32.totalorder %s18, 1
      %p154 = por %p152, %p153
      %p155 = scmp.ne.s32.totalorder %s144, %s145
      %p156 = scmp.eq.s32.totalorder %s18, 0
      %p157 = por %p155, %p156
      %p158 = scmp.ne.s32.totalorder %s144, %s145
      %p159 = scmp.eq.s32.totalorder %s19, 1
      %p160 = por %p158, %p159
      %p162 = scmp.ne.s32.totalorder %s145, %s161
      %p163 = scmp.eq.s32.totalorder %s19, 0
      %p164 = por %p162, %p163
      %s165 = ssub.s32 %s20, %s32
      %p166 = scmp.eq.s32.totalorder %s165, 0
      %s168 = sadd.s32 %s167, 1
      %s169 = scalar_select %p166, %s167, %s168
      %p172 = pneg %p166
      %p173 = scmp.eq.s32.totalorder %s13, 1
      %p174 = por %p172, %p173
      %p175 = scmp.ne.s32.totalorder %s167, %s170
      %p176 = scmp.eq.s32.totalorder %s13, 0
      %p177 = por %p175, %p176
      %p178 = scmp.ne.s32.totalorder %s167, %s170
      %p179 = scmp.eq.s32.totalorder %s18, 1
      %p180 = por %p178, %p179
      %p181 = scmp.ne.s32.totalorder %s170, %s171
      %p182 = scmp.eq.s32.totalorder %s18, 0
      %p183 = por %p181, %p182
      %p184 = scmp.ne.s32.totalorder %s170, %s171
      %p185 = scmp.eq.s32.totalorder %s19, 1
      %p186 = por %p184, %p185
      %p188 = scmp.ne.s32.totalorder %s171, %s187
      %p189 = scmp.eq.s32.totalorder %s19, 0
      %p190 = por %p188, %p189
      %p191 = scmp.le.s32.totalorder 1, %s13
      %p192 = scmp.lt.s32.totalorder %s13, 3
      %p193 = pnand %p191, %p192
      %p194 = pneg %p193
      // Predicated region
      $region9: #{tpu_custom_call.1} parent=5 // pred_check
        _
      $region10: #{tpu_custom_call.1} parent=5 // pred_check_branch
        %196 = sbr.rel (%p193) target = $region12
      $region11: #{tpu_custom_call.1} parent=5 // pred_region
        %s197 = ssub.s32 %s13, 1
        // Predicated region
        $region13: #{tpu_custom_call.1} parent=11 // pred_check
          %p198 = pneg %p79
        $region14: #{tpu_custom_call.1} parent=11 // pred_check_branch
          %200 = sbr.rel (%p198) target = $region16
        $region15: #{tpu_custom_call.1} parent=11 // pred_region
          %s201 = smul.u32 8, %s22
          %p202 = scmp.lt.s32.totalorder %s201, 7
          %s203 = scalar_select %p202, %s201, 7
          %s204 = smul.addr %s203, 8
          %s205 = scalar_lea.vmem %s1, %s204
          %s206 = smul.u32 8, %s22
        $region16: #{tpu_custom_call.1} parent=11 // pred_fallthru
          _
        // Predicated region
        $region17: #{tpu_custom_call.1} parent=11 // pred_check
          %p207 = pneg %p105
        $region18: #{tpu_custom_call.1} parent=11 // pred_check_branch
          %209 = sbr.rel (%p207) target = $region20
        $region19: #{tpu_custom_call.1} parent=11 // pred_region
          %p210 = scmp.lt.s32.totalorder %s22, 0
          %s211 = scalar_select %p210, %s22, 0
          %s212 = smul.addr %s211, 8
          %s213 = scalar_lea.vmem %s2, %s212
        $region20: #{tpu_custom_call.1} parent=11 // pred_fallthru
          _
        // Predicated region
        $region21: #{tpu_custom_call.1} parent=11 // pred_check
          %p214 = pneg %p131
        $region22: #{tpu_custom_call.1} parent=11 // pred_check_branch
          %216 = sbr.rel (%p214) target = $region24
        $region23: #{tpu_custom_call.1} parent=11 // pred_region
          %218 = vsyncadd [#allocation7], 0
          %s219 = smul.addr %s22, 8
          %s220 = scalar_lea.hbm %s3, %s219
          %s222 = sshll.u32 %s220, 4
          %s223 = int_to_ptr.hbm [resolvable:$true] %s222
          %s224 = sshll.u32 [#allocation6], 4
          %s225 = int_to_ptr.vmem [resolvable:$true] %s224
          %227 = dma.hbm_to_vmem [thread:$0]  %s223, 128, %s225, [#allocation7]
        $region24: #{tpu_custom_call.1} parent=11 // pred_fallthru
          _
        // Predicated region
        $region25: #{tpu_custom_call.1} parent=11 // pred_check
          %p228 = pneg %p157
        $region26: #{tpu_custom_call.1} parent=11 // pred_check_branch
          %230 = sbr.rel (%p228) target = $region28
        $region27: #{tpu_custom_call.1} parent=11 // pred_region
          %p231 = scmp.lt.s32.totalorder %s22, 0
          %s232 = scalar_select %p231, %s22, 0
          %s233 = smul.addr %s232, 8
          %s234 = scalar_lea.vmem %s4, %s233
        $region28: #{tpu_custom_call.1} parent=11 // pred_fallthru
          _
      $region12: #{tpu_custom_call.1} parent=5 // pred_fallthru
        _
      %p235 = scmp.lt.s32.totalorder %s13, 2
      // Predicated region
      $region29: #{tpu_custom_call.1} parent=5 // pred_check
        %p236 = pneg %p235
      $region30: #{tpu_custom_call.1} parent=5 // pred_check_branch
        %238 = sbr.rel (%p236) target = $region32
      $region31: #{tpu_custom_call.1} parent=5 // pred_region
        // Predicated region
        $region33: #{tpu_custom_call.1} parent=31 // pred_check
          %p239 = pneg %p47
        $region34: #{tpu_custom_call.1} parent=31 // pred_check_branch
          %241 = sbr.rel (%p239) target = $region36
        $region35: #{tpu_custom_call.1} parent=31 // pred_region
          %s242 = sand.u32 %s37, 1
          %s243 = sand.u32 %s37, 1
          %s244 = smul.addr %s243, 64
          %s245 = scalar_lea.vmem [#allocation5], %s244
          %s246 = smul.u32 8, %s20
          %s247 = smul.addr %s246, 2
          %s248 = sadd.s32 %s21, %s247
          %s249 = smul.addr %s248, 8
          %s250 = scalar_lea.vmem %s0, %s249
          // Predicated region
          $region37: #{tpu_custom_call.1} parent=35 // pred_check
            _
          $region38: #{tpu_custom_call.1} parent=35 // pred_check_branch
            %252 = sbr.rel (0) target = $region40
          $region39: #{tpu_custom_call.1} parent=35 // pred_region
            // Predicated region
            $region41: #{tpu_custom_call.1} parent=39 // pred_check
              _
            $region42: #{tpu_custom_call.1} parent=39 // pred_check_branch
              %254 = sbr.rel (0) target = $region44
            $region43: #{tpu_custom_call.1} parent=39 // pred_region
              // Predicated region
              $region56: #{tpu_custom_call.1} parent=43 // pred_check
                _
              $region57: #{tpu_custom_call.1} parent=43 // pred_check_branch
                %284 = sbr.rel (0) target = $region59
              $region58: #{tpu_custom_call.1} parent=43 // pred_region
                loop: start=0, step=1, limit=1
                $region60: #{tpu_custom_call.1} parent=58 // loop_pre_header
                  _
                $region61: #{tpu_custom_call.1} parent=58 // loop_header
                  %s286 = sphi 0, %s290
                  %p287 = scmp.ge.s32.totalorder %s286, 1
                  %s291 = sphi %s250, %s250
                  %s292 = sphi %s245, %s245
                $region62: #{tpu_custom_call.1} parent=58 // loop_header_branch
                  %289 = sbr.rel (%p287) target = $region66
                $region63: #{tpu_custom_call.1} parent=58 // loop_body
                  %v293 = vld [vmem:[%s291] sm:$0xff]
                  %294 = vst [vmem:[%s292] sm:$0xff] %v293
                  %v295 = vld [vmem:[%s291 + $0x10] sm:$0xff]
                  %296 = vst [vmem:[%s292 + $0x8] sm:$0xff] %v295
                  %v297 = vld [vmem:[%s291 + $0x20] sm:$0xff]
                  %298 = vst [vmem:[%s292 + $0x10] sm:$0xff] %v297
                  %v299 = vld [vmem:[%s291 + $0x30] sm:$0xff]
                  %300 = vst [vmem:[%s292 + $0x18] sm:$0xff] %v299
                  %v301 = vld [vmem:[%s291 + $0x40] sm:$0xff]
                  %302 = vst [vmem:[%s292 + $0x20] sm:$0xff] %v301
                  %v303 = vld [vmem:[%s291 + $0x50] sm:$0xff]
                  %304 = vst [vmem:[%s292 + $0x28] sm:$0xff] %v303
                  %v305 = vld [vmem:[%s291 + $0x60] sm:$0xff]
                  %306 = vst [vmem:[%s292 + $0x30] sm:$0xff] %v305
                  %v307 = vld [vmem:[%s291 + $0x70] sm:$0xff]
                  %308 = vst [vmem:[%s292 + $0x38] sm:$0xff] %v307
                $region64: #{tpu_custom_call.1} parent=58 // loop_footer
                  %s290 = sadd.s32 1, %s286
                $region65: #{tpu_custom_call.1} parent=58 // loop_footer_branch
                  %285 = sbr.rel target = $region61
                $region66: #{tpu_custom_call.1} parent=58 // loop_exit
                  _
              $region59: #{tpu_custom_call.1} parent=43 // pred_fallthru
                _
              // Predicated region
              $region67: #{tpu_custom_call.1} parent=43 // pred_check
                _
              $region68: #{tpu_custom_call.1} parent=43 // pred_check_branch
                %310 = sbr.rel target = $region70
              $region69: #{tpu_custom_call.1} parent=43 // pred_region
                _
              $region70: #{tpu_custom_call.1} parent=43 // pred_fallthru
                _
            $region44: #{tpu_custom_call.1} parent=39 // pred_fallthru
              _
            // Predicated region
            $region45: #{tpu_custom_call.1} parent=39 // pred_check
              _
            $region46: #{tpu_custom_call.1} parent=39 // pred_check_branch
              %256 = sbr.rel target = $region48
            $region47: #{tpu_custom_call.1} parent=39 // pred_region
              %s258 = ssub.s32 256, 1
              loop: start=0, step=1, limit=1
              $region49: #{tpu_custom_call.1} parent=47 // loop_pre_header
                _
              $region50: #{tpu_custom_call.1} parent=47 // loop_header
                %s260 = sphi 0, %s264
                %p261 = scmp.ge.s32.totalorder %s260, 1
                %s265 = sphi %s250, %s250
                %s266 = sphi %s245, %s245
              $region51: #{tpu_custom_call.1} parent=47 // loop_header_branch
                %263 = sbr.rel (%p261) target = $region55
              $region52: #{tpu_custom_call.1} parent=47 // loop_body
                %v267 = vld [vmem:[%s265] sm:%s258]
                %268 = vst [vmem:[%s266] sm:%s258] %v267
                %v269 = vld [vmem:[%s265 + $0x10] sm:%s258]
                %270 = vst [vmem:[%s266 + $0x8] sm:%s258] %v269
                %v271 = vld [vmem:[%s265 + $0x20] sm:%s258]
                %272 = vst [vmem:[%s266 + $0x10] sm:%s258] %v271
                %v273 = vld [vmem:[%s265 + $0x30] sm:%s258]
                %274 = vst [vmem:[%s266 + $0x18] sm:%s258] %v273
                %v275 = vld [vmem:[%s265 + $0x40] sm:%s258]
                %276 = vst [vmem:[%s266 + $0x20] sm:%s258] %v275
                %v277 = vld [vmem:[%s265 + $0x50] sm:%s258]
                %278 = vst [vmem:[%s266 + $0x28] sm:%s258] %v277
                %v279 = vld [vmem:[%s265 + $0x60] sm:%s258]
                %280 = vst [vmem:[%s266 + $0x30] sm:%s258] %v279
                %v281 = vld [vmem:[%s265 + $0x70] sm:%s258]
                %282 = vst [vmem:[%s266 + $0x38] sm:%s258] %v281
              $region53: #{tpu_custom_call.1} parent=47 // loop_footer
                %s264 = sadd.s32 1, %s260
              $region54: #{tpu_custom_call.1} parent=47 // loop_footer_branch
                %259 = sbr.rel target = $region50
              $region55: #{tpu_custom_call.1} parent=47 // loop_exit
                _
            $region48: #{tpu_custom_call.1} parent=39 // pred_fallthru
              _
          $region40: #{tpu_custom_call.1} parent=35 // pred_fallthru
            _
          %311 = vnop
        $region36: #{tpu_custom_call.1} parent=31 // pred_fallthru
          _
      $region32: #{tpu_custom_call.1} parent=5 // pred_fallthru
        _
      %p312 = scmp.le.s32.totalorder 1, %s13
      %p313 = scmp.lt.s32.totalorder %s13, 3
      %p314 = pnand %p312, %p313
      %p315 = pneg %p314
      // Predicated region
      $region71: #{tpu_custom_call.1} parent=5 // pred_check
        _
      $region72: #{tpu_custom_call.1} parent=5 // pred_check_branch
        %317 = sbr.rel (%p314) target = $region74
      $region73: #{tpu_custom_call.1} parent=5 // pred_region
        %s318 = ssub.s32 %s13, 1
        %s319 = sand.u32 %s40, 1
        %s320 = sand.u32 %s40, 1
        %s321 = smul.addr %s320, 64
        %s322 = scalar_lea.vmem [#allocation5], %s321
        // Predicated region
        $region75: #{tpu_custom_call.1} parent=73 // pred_check
          %p323 = pneg %p53
        $region76: #{tpu_custom_call.1} parent=73 // pred_check_branch
          %325 = sbr.rel (%p323) target = $region78
        $region77: #{tpu_custom_call.1} parent=73 // pred_region
          _
        $region78: #{tpu_custom_call.1} parent=73 // pred_fallthru
          _
        // Predicated region
        $region79: #{tpu_custom_call.1} parent=73 // pred_check
          %p326 = pneg %p131
        $region80: #{tpu_custom_call.1} parent=73 // pred_check_branch
          %328 = sbr.rel (%p326) target = $region82
        $region81: #{tpu_custom_call.1} parent=73 // pred_region
          %330 = dma.done [#allocation7], 128
        $region82: #{tpu_custom_call.1} parent=73 // pred_fallthru
          _
        %s331 = sand.u32 %s40, 1
        %s332 = sand.u32 %s40, 1
        %s333 = smul.addr %s332, 64
        %s334 = scalar_lea.vmem [#allocation5], %s333
        %p335 = pneg %p53
        %p336 = pneg %p50
        %s337 = smul.u32 8, %s22
        %p338 = scmp.lt.s32.totalorder %s337, 7
        %s339 = scalar_select %p338, %s337, 7
        %s340 = smul.addr %s339, 8
        %s341 = scalar_lea.vmem %s1, %s340
        %p342 = pneg %p79
        %p343 = pneg %p76
        %p344 = scmp.lt.s32.totalorder %s22, 0
        %s345 = scalar_select %p344, %s22, 0
        %s346 = smul.addr %s345, 8
        %s347 = scalar_lea.vmem %s2, %s346
        %p348 = pneg %p105
        %p349 = pneg %p102
        %p350 = pneg %p131
        %p351 = pneg %p128
        %p352 = scmp.lt.s32.totalorder %s22, 0
        %s353 = scalar_select %p352, %s22, 0
        %s354 = smul.addr %s353, 8
        %s355 = scalar_lea.vmem %s4, %s354
        %p356 = pneg %p157
        %p357 = pneg %p154
        %p358 = pneg %p183
        %p359 = pneg %p180
        %s360 = smul.u32 8, %s22
        %s361 = smul.u32 8, %s22
        %p362 = scmp.lt.s32.totalorder %s361, 7
        %s363 = scalar_select %p362, %s361, 7
        %s364 = smul.addr %s363, 8
        %s365 = scalar_lea.vmem %s1, %s364
        %s366 = smul.u32 8, %s22
        %p367 = scmp.lt.s32.totalorder %s22, 0
        %s368 = scalar_select %p367, %s22, 0
        %s369 = smul.addr %s368, 8
        %s370 = scalar_lea.vmem %s2, %s369
        %p371 = scmp.lt.s32.totalorder %s22, 0
        %s372 = scalar_select %p371, %s22, 0
        %s373 = smul.addr %s372, 8
        %s374 = scalar_lea.vmem %s4, %s373
        %v375 = vld [vmem:[%s370] sm:$0xff]
        %v376 = vld [vmem:[%s374] sm:$0xff]
        %v377 = vlaneseq
        %v378 = vand.u32 %v377, 127
        %p379 = scmp.eq.s32.totalorder %s23, 0
        // Predicated region
        $region83: #{tpu_custom_call.1} parent=73 // pred_check
          %p380 = pneg %p379
        $region84: #{tpu_custom_call.1} parent=73 // pred_check_branch
          %382 = sbr.rel (%p380) target = $region86
        $region85: #{tpu_custom_call.1} parent=73 // pred_region
          %v383 = vld [vmem:[#allocation6] sm:$0xff]
          %v384 = vlaneseq
          %v385 = vshrl.u32 %v384, 7
          %v386 = vmul.u32 %v385, 2
          %v387 = vadd.s32 %v386, 1
          %vm388 = vcmp.eq.s32.totalorder %v378, %v387
          %v389 = vsel %vm388, 1, 0
          %v390 = vperm.slane %v383, 0
          %v391 = vlaneseq
          %v392 = vshrl.u32 %v391, 7
          %394 = vset.pattern.permute.xlu0 %v392
          %395 = vperm.xlu0 %394, %v390
          %v396 = vpop.permute.xlu0 %395
          %v397 = vperm.slane %v383, 1
          %v398 = vlaneseq
          %v399 = vshrl.u32 %v398, 7
          %401 = vset.pattern.permute.xlu0 %v399
          %402 = vperm.xlu0 %401, %v397
          %v403 = vpop.permute.xlu0 %402
          %v404 = vperm.slane %v383, 2
          %v405 = vlaneseq
          %v406 = vshrl.u32 %v405, 7
          %408 = vset.pattern.permute.xlu0 %v406
          %409 = vperm.xlu0 %408, %v404
          %v410 = vpop.permute.xlu0 %409
          %v411 = vperm.slane %v383, 3
          %v412 = vlaneseq
          %v413 = vshrl.u32 %v412, 7
          %415 = vset.pattern.permute.xlu0 %v413
          %416 = vperm.xlu0 %415, %v411
          %v417 = vpop.permute.xlu0 %416
          %v418 = vperm.slane %v383, 4
          %v419 = vlaneseq
          %v420 = vshrl.u32 %v419, 7
          %422 = vset.pattern.permute.xlu0 %v420
          %423 = vperm.xlu0 %422, %v418
          %v424 = vpop.permute.xlu0 %423
          %v425 = vperm.slane %v383, 5
          %v426 = vlaneseq
          %v427 = vshrl.u32 %v426, 7
          %429 = vset.pattern.permute.xlu0 %v427
          %430 = vperm.xlu0 %429, %v425
          %v431 = vpop.permute.xlu0 %430
          %v432 = vperm.slane %v383, 6
          %v433 = vlaneseq
          %v434 = vshrl.u32 %v433, 7
          %436 = vset.pattern.permute.xlu0 %v434
          %437 = vperm.xlu0 %436, %v432
          %v438 = vpop.permute.xlu0 %437
          %v439 = vperm.slane %v383, 7
          %v440 = vlaneseq
          %v441 = vshrl.u32 %v440, 7
          %443 = vset.pattern.permute.xlu0 %v441
          %444 = vperm.xlu0 %443, %v439
          %v445 = vpop.permute.xlu0 %444
          %v446 = vmul.u32 %v396, %v389
          %v447 = vmul.u32 %v403, %v389
          %v448 = vmul.u32 %v410, %v389
          %v449 = vmul.u32 %v417, %v389
          %v450 = vmul.u32 %v424, %v389
          %v451 = vmul.u32 %v431, %v389
          %v452 = vmul.u32 %v438, %v389
          %v453 = vmul.u32 %v445, %v389
          %vm454 = vcmask 1045504
          %v455 = vsel %vm454, %v446, 0
          %v456 = vrot.slane %v455, 4
          %v457 = vadd.s32 %v455, %v456
          %v458 = vrot.slane %v457, 2
          %v459 = vadd.s32 %v457, %v458
          %v460 = vrot.slane %v459, 1
          %v461 = vadd.s32 %v459, %v460
          %v462 = vsel %vm454, %v447, 0
          %v463 = vrot.slane %v462, 4
          %v464 = vadd.s32 %v462, %v463
          %v465 = vrot.slane %v464, 2
          %v466 = vadd.s32 %v464, %v465
          %v467 = vrot.slane %v466, 1
          %v468 = vadd.s32 %v466, %v467
          %v469 = vsel %vm454, %v448, 0
          %v470 = vrot.slane %v469, 4
          %v471 = vadd.s32 %v469, %v470
          %v472 = vrot.slane %v471, 2
          %v473 = vadd.s32 %v471, %v472
          %v474 = vrot.slane %v473, 1
          %v475 = vadd.s32 %v473, %v474
          %v476 = vsel %vm454, %v449, 0
          %v477 = vrot.slane %v476, 4
          %v478 = vadd.s32 %v476, %v477
          %v479 = vrot.slane %v478, 2
          %v480 = vadd.s32 %v478, %v479
          %v481 = vrot.slane %v480, 1
          %v482 = vadd.s32 %v480, %v481
          %v483 = vsel %vm454, %v450, 0
          %v484 = vrot.slane %v483, 4
          %v485 = vadd.s32 %v483, %v484
          %v486 = vrot.slane %v485, 2
          %v487 = vadd.s32 %v485, %v486
          %v488 = vrot.slane %v487, 1
          %v489 = vadd.s32 %v487, %v488
          %v490 = vsel %vm454, %v451, 0
          %v491 = vrot.slane %v490, 4
          %v492 = vadd.s32 %v490, %v491
          %v493 = vrot.slane %v492, 2
          %v494 = vadd.s32 %v492, %v493
          %v495 = vrot.slane %v494, 1
          %v496 = vadd.s32 %v494, %v495
          %v497 = vsel %vm454, %v452, 0
          %v498 = vrot.slane %v497, 4
          %v499 = vadd.s32 %v497, %v498
          %v500 = vrot.slane %v499, 2
          %v501 = vadd.s32 %v499, %v500
          %v502 = vrot.slane %v501, 1
          %v503 = vadd.s32 %v501, %v502
          %v504 = vsel %vm454, %v453, 0
          %v505 = vrot.slane %v504, 4
          %v506 = vadd.s32 %v504, %v505
          %v507 = vrot.slane %v506, 2
          %v508 = vadd.s32 %v506, %v507
          %v509 = vrot.slane %v508, 1
          %v510 = vadd.s32 %v508, %v509
          %v511 = vlaneseq
          %v512 = vshrl.u32 %v511, 7
          %514 = vset.pattern.permute.xlu0 %v512
          %515 = vperm.xlu0 %514, %v461
          %v516 = vpop.permute.xlu0 %515
          %v517 = vlaneseq
          %v518 = vshrl.u32 %v517, 7
          %v519 = vadd.s32 %v518, 8
          %520 = vset.pattern.permute.xlu0 %v519
          %521 = vperm.xlu0 %520, %v461
          %v522 = vpop.permute.xlu0 %521
          %v523 = vlaneseq
          %v524 = vshrl.u32 %v523, 7
          %v525 = vadd.s32 %v524, 16
          %526 = vset.pattern.permute.xlu0 %v525
          %527 = vperm.xlu0 %526, %v461
          %v528 = vpop.permute.xlu0 %527
          %v529 = vlaneseq
          %v530 = vshrl.u32 %v529, 7
          %v531 = vadd.s32 %v530, 24
          %532 = vset.pattern.permute.xlu0 %v531
          %533 = vperm.xlu0 %532, %v461
          %v534 = vpop.permute.xlu0 %533
          %v535 = vlaneseq
          %v536 = vshrl.u32 %v535, 7
          %v537 = vadd.s32 %v536, 32
          %538 = vset.pattern.permute.xlu0 %v537
          %539 = vperm.xlu0 %538, %v461
          %v540 = vpop.permute.xlu0 %539
          %v541 = vlaneseq
          %v542 = vshrl.u32 %v541, 7
          %v543 = vadd.s32 %v542, 40
          %544 = vset.pattern.permute.xlu0 %v543
          %545 = vperm.xlu0 %544, %v461
          %v546 = vpop.permute.xlu0 %545
          %v547 = vlaneseq
          %v548 = vshrl.u32 %v547, 7
          %v549 = vadd.s32 %v548, 48
          %550 = vset.pattern.permute.xlu0 %v549
          %551 = vperm.xlu0 %550, %v461
          %v552 = vpop.permute.xlu0 %551
          %v553 = vlaneseq
          %v554 = vshrl.u32 %v553, 7
          %v555 = vadd.s32 %v554, 56
          %556 = vset.pattern.permute.xlu0 %v555
          %557 = vperm.xlu0 %556, %v461
          %v558 = vpop.permute.xlu0 %557
          %v559 = vlaneseq
          %v560 = vshrl.u32 %v559, 7
          %v561 = vadd.s32 %v560, 64
          %562 = vset.pattern.permute.xlu0 %v561
          %563 = vperm.xlu0 %562, %v461
          %v564 = vpop.permute.xlu0 %563
          %v565 = vlaneseq
          %v566 = vshrl.u32 %v565, 7
          %v567 = vadd.s32 %v566, 72
          %568 = vset.pattern.permute.xlu0 %v567
          %569 = vperm.xlu0 %568, %v461
          %v570 = vpop.permute.xlu0 %569
          %v571 = vlaneseq
          %v572 = vshrl.u32 %v571, 7
          %v573 = vadd.s32 %v572, 80
          %574 = vset.pattern.permute.xlu0 %v573
          %575 = vperm.xlu0 %574, %v461
          %v576 = vpop.permute.xlu0 %575
          %v577 = vlaneseq
          %v578 = vshrl.u32 %v577, 7
          %v579 = vadd.s32 %v578, 88
          %580 = vset.pattern.permute.xlu0 %v579
          %581 = vperm.xlu0 %580, %v461
          %v582 = vpop.permute.xlu0 %581
          %v583 = vlaneseq
          %v584 = vshrl.u32 %v583, 7
          %v585 = vadd.s32 %v584, 96
          %586 = vset.pattern.permute.xlu0 %v585
          %587 = vperm.xlu0 %586, %v461
          %v588 = vpop.permute.xlu0 %587
          %v589 = vlaneseq
          %v590 = vshrl.u32 %v589, 7
          %v591 = vadd.s32 %v590, 104
          %592 = vset.pattern.permute.xlu0 %v591
          %593 = vperm.xlu0 %592, %v461
          %v594 = vpop.permute.xlu0 %593
          %v595 = vlaneseq
          %v596 = vshrl.u32 %v595, 7
          %v597 = vadd.s32 %v596, 112
          %598 = vset.pattern.permute.xlu0 %v597
          %599 = vperm.xlu0 %598, %v461
          %v600 = vpop.permute.xlu0 %599
          %v601 = vlaneseq
          %v602 = vshrl.u32 %v601, 7
          %v603 = vadd.s32 %v602, 120
          %604 = vset.pattern.permute.xlu0 %v603
          %605 = vperm.xlu0 %604, %v461
          %v606 = vpop.permute.xlu0 %605
          %v607 = vlaneseq
          %v608 = vshrl.u32 %v607, 7
          %610 = vset.pattern.permute.xlu0 %v608
          %611 = vperm.xlu0 %610, %v468
          %v612 = vpop.permute.xlu0 %611
          %v613 = vlaneseq
          %v614 = vshrl.u32 %v613, 7
          %v615 = vadd.s32 %v614, 8
          %616 = vset.pattern.permute.xlu0 %v615
          %617 = vperm.xlu0 %616, %v468
          %v618 = vpop.permute.xlu0 %617
          %v619 = vlaneseq
          %v620 = vshrl.u32 %v619, 7
          %v621 = vadd.s32 %v620, 16
          %622 = vset.pattern.permute.xlu0 %v621
          %623 = vperm.xlu0 %622, %v468
          %v624 = vpop.permute.xlu0 %623
          %v625 = vlaneseq
          %v626 = vshrl.u32 %v625, 7
          %v627 = vadd.s32 %v626, 24
          %628 = vset.pattern.permute.xlu0 %v627
          %629 = vperm.xlu0 %628, %v468
          %v630 = vpop.permute.xlu0 %629
          %v631 = vlaneseq
          %v632 = vshrl.u32 %v631, 7
          %v633 = vadd.s32 %v632, 32
          %634 = vset.pattern.permute.xlu0 %v633
          %635 = vperm.xlu0 %634, %v468
          %v636 = vpop.permute.xlu0 %635
          %v637 = vlaneseq
          %v638 = vshrl.u32 %v637, 7
          %v639 = vadd.s32 %v638, 40
          %640 = vset.pattern.permute.xlu0 %v639
          %641 = vperm.xlu0 %640, %v468
          %v642 = vpop.permute.xlu0 %641
          %v643 = vlaneseq
          %v644 = vshrl.u32 %v643, 7
          %v645 = vadd.s32 %v644, 48
          %646 = vset.pattern.permute.xlu0 %v645
          %647 = vperm.xlu0 %646, %v468
          %v648 = vpop.permute.xlu0 %647
          %v649 = vlaneseq
          %v650 = vshrl.u32 %v649, 7
          %v651 = vadd.s32 %v650, 56
          %652 = vset.pattern.permute.xlu0 %v651
          %653 = vperm.xlu0 %652, %v468
          %v654 = vpop.permute.xlu0 %653
          %v655 = vlaneseq
          %v656 = vshrl.u32 %v655, 7
          %v657 = vadd.s32 %v656, 64
          %658 = vset.pattern.permute.xlu0 %v657
          %659 = vperm.xlu0 %658, %v468
          %v660 = vpop.permute.xlu0 %659
          %v661 = vlaneseq
          %v662 = vshrl.u32 %v661, 7
          %v663 = vadd.s32 %v662, 72
          %664 = vset.pattern.permute.xlu0 %v663
          %665 = vperm.xlu0 %664, %v468
          %v666 = vpop.permute.xlu0 %665
          %v667 = vlaneseq
          %v668 = vshrl.u32 %v667, 7
          %v669 = vadd.s32 %v668, 80
          %670 = vset.pattern.permute.xlu0 %v669
          %671 = vperm.xlu0 %670, %v468
          %v672 = vpop.permute.xlu0 %671
          %v673 = vlaneseq
          %v674 = vshrl.u32 %v673, 7
          %v675 = vadd.s32 %v674, 88
          %676 = vset.pattern.permute.xlu0 %v675
          %677 = vperm.xlu0 %676, %v468
          %v678 = vpop.permute.xlu0 %677
          %v679 = vlaneseq
          %v680 = vshrl.u32 %v679, 7
          %v681 = vadd.s32 %v680, 96
          %682 = vset.pattern.permute.xlu0 %v681
          %683 = vperm.xlu0 %682, %v468
          %v684 = vpop.permute.xlu0 %683
          %v685 = vlaneseq
          %v686 = vshrl.u32 %v685, 7
          %v687 = vadd.s32 %v686, 104
          %688 = vset.pattern.permute.xlu0 %v687
          %689 = vperm.xlu0 %688, %v468
          %v690 = vpop.permute.xlu0 %689
          %v691 = vlaneseq
          %v692 = vshrl.u32 %v691, 7
          %v693 = vadd.s32 %v692, 112
          %694 = vset.pattern.permute.xlu0 %v693
          %695 = vperm.xlu0 %694, %v468
          %v696 = vpop.permute.xlu0 %695
          %v697 = vlaneseq
          %v698 = vshrl.u32 %v697, 7
          %v699 = vadd.s32 %v698, 120
          %700 = vset.pattern.permute.xlu0 %v699
          %701 = vperm.xlu0 %700, %v468
          %v702 = vpop.permute.xlu0 %701
          %v703 = vlaneseq
          %v704 = vshrl.u32 %v703, 7
          %706 = vset.pattern.permute.xlu0 %v704
          %707 = vperm.xlu0 %706, %v475
          %v708 = vpop.permute.xlu0 %707
          %v709 = vlaneseq
          %v710 = vshrl.u32 %v709, 7
          %v711 = vadd.s32 %v710, 8
          %712 = vset.pattern.permute.xlu0 %v711
          %713 = vperm.xlu0 %712, %v475
          %v714 = vpop.permute.xlu0 %713
          %v715 = vlaneseq
          %v716 = vshrl.u32 %v715, 7
          %v717 = vadd.s32 %v716, 16
          %718 = vset.pattern.permute.xlu0 %v717
          %719 = vperm.xlu0 %718, %v475
          %v720 = vpop.permute.xlu0 %719
          %v721 = vlaneseq
          %v722 = vshrl.u32 %v721, 7
          %v723 = vadd.s32 %v722, 24
          %724 = vset.pattern.permute.xlu0 %v723
          %725 = vperm.xlu0 %724, %v475
          %v726 = vpop.permute.xlu0 %725
          %v727 = vlaneseq
          %v728 = vshrl.u32 %v727, 7
          %v729 = vadd.s32 %v728, 32
          %730 = vset.pattern.permute.xlu0 %v729
          %731 = vperm.xlu0 %730, %v475
          %v732 = vpop.permute.xlu0 %731
          %v733 = vlaneseq
          %v734 = vshrl.u32 %v733, 7
          %v735 = vadd.s32 %v734, 40
          %736 = vset.pattern.permute.xlu0 %v735
          %737 = vperm.xlu0 %736, %v475
          %v738 = vpop.permute.xlu0 %737
          %v739 = vlaneseq
          %v740 = vshrl.u32 %v739, 7
          %v741 = vadd.s32 %v740, 48
          %742 = vset.pattern.permute.xlu0 %v741
          %743 = vperm.xlu0 %742, %v475
          %v744 = vpop.permute.xlu0 %743
          %v745 = vlaneseq
          %v746 = vshrl.u32 %v745, 7
          %v747 = vadd.s32 %v746, 56
          %748 = vset.pattern.permute.xlu0 %v747
          %749 = vperm.xlu0 %748, %v475
          %v750 = vpop.permute.xlu0 %749
          %v751 = vlaneseq
          %v752 = vshrl.u32 %v751, 7
          %v753 = vadd.s32 %v752, 64
          %754 = vset.pattern.permute.xlu0 %v753
          %755 = vperm.xlu0 %754, %v475
          %v756 = vpop.permute.xlu0 %755
          %v757 = vlaneseq
          %v758 = vshrl.u32 %v757, 7
          %v759 = vadd.s32 %v758, 72
          %760 = vset.pattern.permute.xlu0 %v759
          %761 = vperm.xlu0 %760, %v475
          %v762 = vpop.permute.xlu0 %761
          %v763 = vlaneseq
          %v764 = vshrl.u32 %v763, 7
          %v765 = vadd.s32 %v764, 80
          %766 = vset.pattern.permute.xlu0 %v765
          %767 = vperm.xlu0 %766, %v475
          %v768 = vpop.permute.xlu0 %767
          %v769 = vlaneseq
          %v770 = vshrl.u32 %v769, 7
          %v771 = vadd.s32 %v770, 88
          %772 = vset.pattern.permute.xlu0 %v771
          %773 = vperm.xlu0 %772, %v475
          %v774 = vpop.permute.xlu0 %773
          %v775 = vlaneseq
          %v776 = vshrl.u32 %v775, 7
          %v777 = vadd.s32 %v776, 96
          %778 = vset.pattern.permute.xlu0 %v777
          %779 = vperm.xlu0 %778, %v475
          %v780 = vpop.permute.xlu0 %779
          %v781 = vlaneseq
          %v782 = vshrl.u32 %v781, 7
          %v783 = vadd.s32 %v782, 104
          %784 = vset.pattern.permute.xlu0 %v783
          %785 = vperm.xlu0 %784, %v475
          %v786 = vpop.permute.xlu0 %785
          %v787 = vlaneseq
          %v788 = vshrl.u32 %v787, 7
          %v789 = vadd.s32 %v788, 112
          %790 = vset.pattern.permute.xlu0 %v789
          %791 = vperm.xlu0 %790, %v475
          %v792 = vpop.permute.xlu0 %791
          %v793 = vlaneseq
          %v794 = vshrl.u32 %v793, 7
          %v795 = vadd.s32 %v794, 120
          %796 = vset.pattern.permute.xlu0 %v795
          %797 = vperm.xlu0 %796, %v475
          %v798 = vpop.permute.xlu0 %797
          %v799 = vlaneseq
          %v800 = vshrl.u32 %v799, 7
          %802 = vset.pattern.permute.xlu0 %v800
          %803 = vperm.xlu0 %802, %v482
          %v804 = vpop.permute.xlu0 %803
          %v805 = vlaneseq
          %v806 = vshrl.u32 %v805, 7
          %v807 = vadd.s32 %v806, 8
          %808 = vset.pattern.permute.xlu0 %v807
          %809 = vperm.xlu0 %808, %v482
          %v810 = vpop.permute.xlu0 %809
          %v811 = vlaneseq
          %v812 = vshrl.u32 %v811, 7
          %v813 = vadd.s32 %v812, 16
          %814 = vset.pattern.permute.xlu0 %v813
          %815 = vperm.xlu0 %814, %v482
          %v816 = vpop.permute.xlu0 %815
          %v817 = vlaneseq
          %v818 = vshrl.u32 %v817, 7
          %v819 = vadd.s32 %v818, 24
          %820 = vset.pattern.permute.xlu0 %v819
          %821 = vperm.xlu0 %820, %v482
          %v822 = vpop.permute.xlu0 %821
          %v823 = vlaneseq
          %v824 = vshrl.u32 %v823, 7
          %v825 = vadd.s32 %v824, 32
          %826 = vset.pattern.permute.xlu0 %v825
          %827 = vperm.xlu0 %826, %v482
          %v828 = vpop.permute.xlu0 %827
          %v829 = vlaneseq
          %v830 = vshrl.u32 %v829, 7
          %v831 = vadd.s32 %v830, 40
          %832 = vset.pattern.permute.xlu0 %v831
          %833 = vperm.xlu0 %832, %v482
          %v834 = vpop.permute.xlu0 %833
          %v835 = vlaneseq
          %v836 = vshrl.u32 %v835, 7
          %v837 = vadd.s32 %v836, 48
          %838 = vset.pattern.permute.xlu0 %v837
          %839 = vperm.xlu0 %838, %v482
          %v840 = vpop.permute.xlu0 %839
          %v841 = vlaneseq
          %v842 = vshrl.u32 %v841, 7
          %v843 = vadd.s32 %v842, 56
          %844 = vset.pattern.permute.xlu0 %v843
          %845 = vperm.xlu0 %844, %v482
          %v846 = vpop.permute.xlu0 %845
          %v847 = vlaneseq
          %v848 = vshrl.u32 %v847, 7
          %v849 = vadd.s32 %v848, 64
          %850 = vset.pattern.permute.xlu0 %v849
          %851 = vperm.xlu0 %850, %v482
          %v852 = vpop.permute.xlu0 %851
          %v853 = vlaneseq
          %v854 = vshrl.u32 %v853, 7
          %v855 = vadd.s32 %v854, 72
          %856 = vset.pattern.permute.xlu0 %v855
          %857 = vperm.xlu0 %856, %v482
          %v858 = vpop.permute.xlu0 %857
          %v859 = vlaneseq
          %v860 = vshrl.u32 %v859, 7
          %v861 = vadd.s32 %v860, 80
          %862 = vset.pattern.permute.xlu0 %v861
          %863 = vperm.xlu0 %862, %v482
          %v864 = vpop.permute.xlu0 %863
          %v865 = vlaneseq
          %v866 = vshrl.u32 %v865, 7
          %v867 = vadd.s32 %v866, 88
          %868 = vset.pattern.permute.xlu0 %v867
          %869 = vperm.xlu0 %868, %v482
          %v870 = vpop.permute.xlu0 %869
          %v871 = vlaneseq
          %v872 = vshrl.u32 %v871, 7
          %v873 = vadd.s32 %v872, 96
          %874 = vset.pattern.permute.xlu0 %v873
          %875 = vperm.xlu0 %874, %v482
          %v876 = vpop.permute.xlu0 %875
          %v877 = vlaneseq
          %v878 = vshrl.u32 %v877, 7
          %v879 = vadd.s32 %v878, 104
          %880 = vset.pattern.permute.xlu0 %v879
          %881 = vperm.xlu0 %880, %v482
          %v882 = vpop.permute.xlu0 %881
          %v883 = vlaneseq
          %v884 = vshrl.u32 %v883, 7
          %v885 = vadd.s32 %v884, 112
          %886 = vset.pattern.permute.xlu0 %v885
          %887 = vperm.xlu0 %886, %v482
          %v888 = vpop.permute.xlu0 %887
          %v889 = vlaneseq
          %v890 = vshrl.u32 %v889, 7
          %v891 = vadd.s32 %v890, 120
          %892 = vset.pattern.permute.xlu0 %v891
          %893 = vperm.xlu0 %892, %v482
          %v894 = vpop.permute.xlu0 %893
          %v895 = vlaneseq
          %v896 = vshrl.u32 %v895, 7
          %898 = vset.pattern.permute.xlu0 %v896
          %899 = vperm.xlu0 %898, %v489
          %v900 = vpop.permute.xlu0 %899
          %v901 = vlaneseq
          %v902 = vshrl.u32 %v901, 7
          %v903 = vadd.s32 %v902, 8
          %904 = vset.pattern.permute.xlu0 %v903
          %905 = vperm.xlu0 %904, %v489
          %v906 = vpop.permute.xlu0 %905
          %v907 = vlaneseq
          %v908 = vshrl.u32 %v907, 7
          %v909 = vadd.s32 %v908, 16
          %910 = vset.pattern.permute.xlu0 %v909
          %911 = vperm.xlu0 %910, %v489
          %v912 = vpop.permute.xlu0 %911
          %v913 = vlaneseq
          %v914 = vshrl.u32 %v913, 7
          %v915 = vadd.s32 %v914, 24
          %916 = vset.pattern.permute.xlu0 %v915
          %917 = vperm.xlu0 %916, %v489
          %v918 = vpop.permute.xlu0 %917
          %v919 = vlaneseq
          %v920 = vshrl.u32 %v919, 7
          %v921 = vadd.s32 %v920, 32
          %922 = vset.pattern.permute.xlu0 %v921
          %923 = vperm.xlu0 %922, %v489
          %v924 = vpop.permute.xlu0 %923
          %v925 = vlaneseq
          %v926 = vshrl.u32 %v925, 7
          %v927 = vadd.s32 %v926, 40
          %928 = vset.pattern.permute.xlu0 %v927
          %929 = vperm.xlu0 %928, %v489
          %v930 = vpop.permute.xlu0 %929
          %v931 = vlaneseq
          %v932 = vshrl.u32 %v931, 7
          %v933 = vadd.s32 %v932, 48
          %934 = vset.pattern.permute.xlu0 %v933
          %935 = vperm.xlu0 %934, %v489
          %v936 = vpop.permute.xlu0 %935
          %v937 = vlaneseq
          %v938 = vshrl.u32 %v937, 7
          %v939 = vadd.s32 %v938, 56
          %940 = vset.pattern.permute.xlu0 %v939
          %941 = vperm.xlu0 %940, %v489
          %v942 = vpop.permute.xlu0 %941
          %v943 = vlaneseq
          %v944 = vshrl.u32 %v943, 7
          %v945 = vadd.s32 %v944, 64
          %946 = vset.pattern.permute.xlu0 %v945
          %947 = vperm.xlu0 %946, %v489
          %v948 = vpop.permute.xlu0 %947
          %v949 = vlaneseq
          %v950 = vshrl.u32 %v949, 7
          %v951 = vadd.s32 %v950, 72
          %952 = vset.pattern.permute.xlu0 %v951
          %953 = vperm.xlu0 %952, %v489
          %v954 = vpop.permute.xlu0 %953
          %v955 = vlaneseq
          %v956 = vshrl.u32 %v955, 7
          %v957 = vadd.s32 %v956, 80
          %958 = vset.pattern.permute.xlu0 %v957
          %959 = vperm.xlu0 %958, %v489
          %v960 = vpop.permute.xlu0 %959
          %v961 = vlaneseq
          %v962 = vshrl.u32 %v961, 7
          %v963 = vadd.s32 %v962, 88
          %964 = vset.pattern.permute.xlu0 %v963
          %965 = vperm.xlu0 %964, %v489
          %v966 = vpop.permute.xlu0 %965
          %v967 = vlaneseq
          %v968 = vshrl.u32 %v967, 7
          %v969 = vadd.s32 %v968, 96
          %970 = vset.pattern.permute.xlu0 %v969
          %971 = vperm.xlu0 %970, %v489
          %v972 = vpop.permute.xlu0 %971
          %v973 = vlaneseq
          %v974 = vshrl.u32 %v973, 7
          %v975 = vadd.s32 %v974, 104
          %976 = vset.pattern.permute.xlu0 %v975
          %977 = vperm.xlu0 %976, %v489
          %v978 = vpop.permute.xlu0 %977
          %v979 = vlaneseq
          %v980 = vshrl.u32 %v979, 7
          %v981 = vadd.s32 %v980, 112
          %982 = vset.pattern.permute.xlu0 %v981
          %983 = vperm.xlu0 %982, %v489
          %v984 = vpop.permute.xlu0 %983
          %v985 = vlaneseq
          %v986 = vshrl.u32 %v985, 7
          %v987 = vadd.s32 %v986, 120
          %988 = vset.pattern.permute.xlu0 %v987
          %989 = vperm.xlu0 %988, %v489
          %v990 = vpop.permute.xlu0 %989
          %v991 = vlaneseq
          %v992 = vshrl.u32 %v991, 7
          %994 = vset.pattern.permute.xlu0 %v992
          %995 = vperm.xlu0 %994, %v496
          %v996 = vpop.permute.xlu0 %995
          %v997 = vlaneseq
          %v998 = vshrl.u32 %v997, 7
          %v999 = vadd.s32 %v998, 8
          %1000 = vset.pattern.permute.xlu0 %v999
          %1001 = vperm.xlu0 %1000, %v496
          %v1002 = vpop.permute.xlu0 %1001
          %v1003 = vlaneseq
          %v1004 = vshrl.u32 %v1003, 7
          %v1005 = vadd.s32 %v1004, 16
          %1006 = vset.pattern.permute.xlu0 %v1005
          %1007 = vperm.xlu0 %1006, %v496
          %v1008 = vpop.permute.xlu0 %1007
          %v1009 = vlaneseq
          %v1010 = vshrl.u32 %v1009, 7
          %v1011 = vadd.s32 %v1010, 24
          %1012 = vset.pattern.permute.xlu0 %v1011
          %1013 = vperm.xlu0 %1012, %v496
          %v1014 = vpop.permute.xlu0 %1013
          %v1015 = vlaneseq
          %v1016 = vshrl.u32 %v1015, 7
          %v1017 = vadd.s32 %v1016, 32
          %1018 = vset.pattern.permute.xlu0 %v1017
          %1019 = vperm.xlu0 %1018, %v496
          %v1020 = vpop.permute.xlu0 %1019
          %v1021 = vlaneseq
          %v1022 = vshrl.u32 %v1021, 7
          %v1023 = vadd.s32 %v1022, 40
          %1024 = vset.pattern.permute.xlu0 %v1023
          %1025 = vperm.xlu0 %1024, %v496
          %v1026 = vpop.permute.xlu0 %1025
          %v1027 = vlaneseq
          %v1028 = vshrl.u32 %v1027, 7
          %v1029 = vadd.s32 %v1028, 48
          %1030 = vset.pattern.permute.xlu0 %v1029
          %1031 = vperm.xlu0 %1030, %v496
          %v1032 = vpop.permute.xlu0 %1031
          %v1033 = vlaneseq
          %v1034 = vshrl.u32 %v1033, 7
          %v1035 = vadd.s32 %v1034, 56
          %1036 = vset.pattern.permute.xlu0 %v1035
          %1037 = vperm.xlu0 %1036, %v496
          %v1038 = vpop.permute.xlu0 %1037
          %v1039 = vlaneseq
          %v1040 = vshrl.u32 %v1039, 7
          %v1041 = vadd.s32 %v1040, 64
          %1042 = vset.pattern.permute.xlu0 %v1041
          %1043 = vperm.xlu0 %1042, %v496
          %v1044 = vpop.permute.xlu0 %1043
          %v1045 = vlaneseq
          %v1046 = vshrl.u32 %v1045, 7
          %v1047 = vadd.s32 %v1046, 72
          %1048 = vset.pattern.permute.xlu0 %v1047
          %1049 = vperm.xlu0 %1048, %v496
          %v1050 = vpop.permute.xlu0 %1049
          %v1051 = vlaneseq
          %v1052 = vshrl.u32 %v1051, 7
          %v1053 = vadd.s32 %v1052, 80
          %1054 = vset.pattern.permute.xlu0 %v1053
          %1055 = vperm.xlu0 %1054, %v496
          %v1056 = vpop.permute.xlu0 %1055
          %v1057 = vlaneseq
          %v1058 = vshrl.u32 %v1057, 7
          %v1059 = vadd.s32 %v1058, 88
          %1060 = vset.pattern.permute.xlu0 %v1059
          %1061 = vperm.xlu0 %1060, %v496
          %v1062 = vpop.permute.xlu0 %1061
          %v1063 = vlaneseq
          %v1064 = vshrl.u32 %v1063, 7
          %v1065 = vadd.s32 %v1064, 96
          %1066 = vset.pattern.permute.xlu0 %v1065
          %1067 = vperm.xlu0 %1066, %v496
          %v1068 = vpop.permute.xlu0 %1067
          %v1069 = vlaneseq
          %v1070 = vshrl.u32 %v1069, 7
          %v1071 = vadd.s32 %v1070, 104
          %1072 = vset.pattern.permute.xlu0 %v1071
          %1073 = vperm.xlu0 %1072, %v496
          %v1074 = vpop.permute.xlu0 %1073
          %v1075 = vlaneseq
          %v1076 = vshrl.u32 %v1075, 7
          %v1077 = vadd.s32 %v1076, 112
          %1078 = vset.pattern.permute.xlu0 %v1077
          %1079 = vperm.xlu0 %1078, %v496
          %v1080 = vpop.permute.xlu0 %1079
          %v1081 = vlaneseq
          %v1082 = vshrl.u32 %v1081, 7
          %v1083 = vadd.s32 %v1082, 120
          %1084 = vset.pattern.permute.xlu0 %v1083
          %1085 = vperm.xlu0 %1084, %v496
          %v1086 = vpop.permute.xlu0 %1085
          %v1087 = vlaneseq
          %v1088 = vshrl.u32 %v1087, 7
          %1090 = vset.pattern.permute.xlu0 %v1088
          %1091 = vperm.xlu0 %1090, %v503
          %v1092 = vpop.permute.xlu0 %1091
          %v1093 = vlaneseq
          %v1094 = vshrl.u32 %v1093, 7
          %v1095 = vadd.s32 %v1094, 8
          %1096 = vset.pattern.permute.xlu0 %v1095
          %1097 = vperm.xlu0 %1096, %v503
          %v1098 = vpop.permute.xlu0 %1097
          %v1099 = vlaneseq
          %v1100 = vshrl.u32 %v1099, 7
          %v1101 = vadd.s32 %v1100, 16
          %1102 = vset.pattern.permute.xlu0 %v1101
          %1103 = vperm.xlu0 %1102, %v503
          %v1104 = vpop.permute.xlu0 %1103
          %v1105 = vlaneseq
          %v1106 = vshrl.u32 %v1105, 7
          %v1107 = vadd.s32 %v1106, 24
          %1108 = vset.pattern.permute.xlu0 %v1107
          %1109 = vperm.xlu0 %1108, %v503
          %v1110 = vpop.permute.xlu0 %1109
          %v1111 = vlaneseq
          %v1112 = vshrl.u32 %v1111, 7
          %v1113 = vadd.s32 %v1112, 32
          %1114 = vset.pattern.permute.xlu0 %v1113
          %1115 = vperm.xlu0 %1114, %v503
          %v1116 = vpop.permute.xlu0 %1115
          %v1117 = vlaneseq
          %v1118 = vshrl.u32 %v1117, 7
          %v1119 = vadd.s32 %v1118, 40
          %1120 = vset.pattern.permute.xlu0 %v1119
          %1121 = vperm.xlu0 %1120, %v503
          %v1122 = vpop.permute.xlu0 %1121
          %v1123 = vlaneseq
          %v1124 = vshrl.u32 %v1123, 7
          %v1125 = vadd.s32 %v1124, 48
          %1126 = vset.pattern.permute.xlu0 %v1125
          %1127 = vperm.xlu0 %1126, %v503
          %v1128 = vpop.permute.xlu0 %1127
          %v1129 = vlaneseq
          %v1130 = vshrl.u32 %v1129, 7
          %v1131 = vadd.s32 %v1130, 56
          %1132 = vset.pattern.permute.xlu0 %v1131
          %1133 = vperm.xlu0 %1132, %v503
          %v1134 = vpop.permute.xlu0 %1133
          %v1135 = vlaneseq
          %v1136 = vshrl.u32 %v1135, 7
          %v1137 = vadd.s32 %v1136, 64
          %1138 = vset.pattern.permute.xlu0 %v1137
          %1139 = vperm.xlu0 %1138, %v503
          %v1140 = vpop.permute.xlu0 %1139
          %v1141 = vlaneseq
          %v1142 = vshrl.u32 %v1141, 7
          %v1143 = vadd.s32 %v1142, 72
          %1144 = vset.pattern.permute.xlu0 %v1143
          %1145 = vperm.xlu0 %1144, %v503
          %v1146 = vpop.permute.xlu0 %1145
          %v1147 = vlaneseq
          %v1148 = vshrl.u32 %v1147, 7
          %v1149 = vadd.s32 %v1148, 80
          %1150 = vset.pattern.permute.xlu0 %v1149
          %1151 = vperm.xlu0 %1150, %v503
          %v1152 = vpop.permute.xlu0 %1151
          %v1153 = vlaneseq
          %v1154 = vshrl.u32 %v1153, 7
          %v1155 = vadd.s32 %v1154, 88
          %1156 = vset.pattern.permute.xlu0 %v1155
          %1157 = vperm.xlu0 %1156, %v503
          %v1158 = vpop.permute.xlu0 %1157
          %v1159 = vlaneseq
          %v1160 = vshrl.u32 %v1159, 7
          %v1161 = vadd.s32 %v1160, 96
          %1162 = vset.pattern.permute.xlu0 %v1161
          %1163 = vperm.xlu0 %1162, %v503
          %v1164 = vpop.permute.xlu0 %1163
          %v1165 = vlaneseq
          %v1166 = vshrl.u32 %v1165, 7
          %v1167 = vadd.s32 %v1166, 104
          %1168 = vset.pattern.permute.xlu0 %v1167
          %1169 = vperm.xlu0 %1168, %v503
          %v1170 = vpop.permute.xlu0 %1169
          %v1171 = vlaneseq
          %v1172 = vshrl.u32 %v1171, 7
          %v1173 = vadd.s32 %v1172, 112
          %1174 = vset.pattern.permute.xlu0 %v1173
          %1175 = vperm.xlu0 %1174, %v503
          %v1176 = vpop.permute.xlu0 %1175
          %v1177 = vlaneseq
          %v1178 = vshrl.u32 %v1177, 7
          %v1179 = vadd.s32 %v1178, 120
          %1180 = vset.pattern.permute.xlu0 %v1179
          %1181 = vperm.xlu0 %1180, %v503
          %v1182 = vpop.permute.xlu0 %1181
          %v1183 = vlaneseq
          %v1184 = vshrl.u32 %v1183, 7
          %1186 = vset.pattern.permute.xlu0 %v1184
          %1187 = vperm.xlu0 %1186, %v510
          %v1188 = vpop.permute.xlu0 %1187
          %v1189 = vlaneseq
          %v1190 = vshrl.u32 %v1189, 7
          %v1191 = vadd.s32 %v1190, 8
          %1192 = vset.pattern.permute.xlu0 %v1191
          %1193 = vperm.xlu0 %1192, %v510
          %v1194 = vpop.permute.xlu0 %1193
          %v1195 = vlaneseq
          %v1196 = vshrl.u32 %v1195, 7
          %v1197 = vadd.s32 %v1196, 16
          %1198 = vset.pattern.permute.xlu0 %v1197
          %1199 = vperm.xlu0 %1198, %v510
          %v1200 = vpop.permute.xlu0 %1199
          %v1201 = vlaneseq
          %v1202 = vshrl.u32 %v1201, 7
          %v1203 = vadd.s32 %v1202, 24
          %1204 = vset.pattern.permute.xlu0 %v1203
          %1205 = vperm.xlu0 %1204, %v510
          %v1206 = vpop.permute.xlu0 %1205
          %v1207 = vlaneseq
          %v1208 = vshrl.u32 %v1207, 7
          %v1209 = vadd.s32 %v1208, 32
          %1210 = vset.pattern.permute.xlu0 %v1209
          %1211 = vperm.xlu0 %1210, %v510
          %v1212 = vpop.permute.xlu0 %1211
          %v1213 = vlaneseq
          %v1214 = vshrl.u32 %v1213, 7
          %v1215 = vadd.s32 %v1214, 40
          %1216 = vset.pattern.permute.xlu0 %v1215
          %1217 = vperm.xlu0 %1216, %v510
          %v1218 = vpop.permute.xlu0 %1217
          %v1219 = vlaneseq
          %v1220 = vshrl.u32 %v1219, 7
          %v1221 = vadd.s32 %v1220, 48
          %1222 = vset.pattern.permute.xlu0 %v1221
          %1223 = vperm.xlu0 %1222, %v510
          %v1224 = vpop.permute.xlu0 %1223
          %v1225 = vlaneseq
          %v1226 = vshrl.u32 %v1225, 7
          %v1227 = vadd.s32 %v1226, 56
          %1228 = vset.pattern.permute.xlu0 %v1227
          %1229 = vperm.xlu0 %1228, %v510
          %v1230 = vpop.permute.xlu0 %1229
          %v1231 = vlaneseq
          %v1232 = vshrl.u32 %v1231, 7
          %v1233 = vadd.s32 %v1232, 64
          %1234 = vset.pattern.permute.xlu0 %v1233
          %1235 = vperm.xlu0 %1234, %v510
          %v1236 = vpop.permute.xlu0 %1235
          %v1237 = vlaneseq
          %v1238 = vshrl.u32 %v1237, 7
          %v1239 = vadd.s32 %v1238, 72
          %1240 = vset.pattern.permute.xlu0 %v1239
          %1241 = vperm.xlu0 %1240, %v510
          %v1242 = vpop.permute.xlu0 %1241
          %v1243 = vlaneseq
          %v1244 = vshrl.u32 %v1243, 7
          %v1245 = vadd.s32 %v1244, 80
          %1246 = vset.pattern.permute.xlu0 %v1245
          %1247 = vperm.xlu0 %1246, %v510
          %v1248 = vpop.permute.xlu0 %1247
          %v1249 = vlaneseq
          %v1250 = vshrl.u32 %v1249, 7
          %v1251 = vadd.s32 %v1250, 88
          %1252 = vset.pattern.permute.xlu0 %v1251
          %1253 = vperm.xlu0 %1252, %v510
          %v1254 = vpop.permute.xlu0 %1253
          %v1255 = vlaneseq
          %v1256 = vshrl.u32 %v1255, 7
          %v1257 = vadd.s32 %v1256, 96
          %1258 = vset.pattern.permute.xlu0 %v1257
          %1259 = vperm.xlu0 %1258, %v510
          %v1260 = vpop.permute.xlu0 %1259
          %v1261 = vlaneseq
          %v1262 = vshrl.u32 %v1261, 7
          %v1263 = vadd.s32 %v1262, 104
          %1264 = vset.pattern.permute.xlu0 %v1263
          %1265 = vperm.xlu0 %1264, %v510
          %v1266 = vpop.permute.xlu0 %1265
          %v1267 = vlaneseq
          %v1268 = vshrl.u32 %v1267, 7
          %v1269 = vadd.s32 %v1268, 112
          %1270 = vset.pattern.permute.xlu0 %v1269
          %1271 = vperm.xlu0 %1270, %v510
          %v1272 = vpop.permute.xlu0 %1271
          %v1273 = vlaneseq
          %v1274 = vshrl.u32 %v1273, 7
          %v1275 = vadd.s32 %v1274, 120
          %1276 = vset.pattern.permute.xlu0 %v1275
          %1277 = vperm.xlu0 %1276, %v510
          %v1278 = vpop.permute.xlu0 %1277
          %vm1279 = vcmp.eq.s32.totalorder %v378, %v516
          %vm1280 = vcmp.eq.s32.totalorder %v378, %v522
          %vm1281 = vcmp.eq.s32.totalorder %v378, %v528
          %vm1282 = vcmp.eq.s32.totalorder %v378, %v534
          %vm1283 = vcmp.eq.s32.totalorder %v378, %v540
          %vm1284 = vcmp.eq.s32.totalorder %v378, %v546
          %vm1285 = vcmp.eq.s32.totalorder %v378, %v552
          %vm1286 = vcmp.eq.s32.totalorder %v378, %v558
          %vm1287 = vcmp.eq.s32.totalorder %v378, %v564
          %vm1288 = vcmp.eq.s32.totalorder %v378, %v570
          %vm1289 = vcmp.eq.s32.totalorder %v378, %v576
          %vm1290 = vcmp.eq.s32.totalorder %v378, %v582
          %vm1291 = vcmp.eq.s32.totalorder %v378, %v588
          %vm1292 = vcmp.eq.s32.totalorder %v378, %v594
          %vm1293 = vcmp.eq.s32.totalorder %v378, %v600
          %vm1294 = vcmp.eq.s32.totalorder %v378, %v606
          %vm1295 = vcmp.eq.s32.totalorder %v378, %v612
          %vm1296 = vcmp.eq.s32.totalorder %v378, %v618
          %vm1297 = vcmp.eq.s32.totalorder %v378, %v624
          %vm1298 = vcmp.eq.s32.totalorder %v378, %v630
          %vm1299 = vcmp.eq.s32.totalorder %v378, %v636
          %vm1300 = vcmp.eq.s32.totalorder %v378, %v642
          %vm1301 = vcmp.eq.s32.totalorder %v378, %v648
          %vm1302 = vcmp.eq.s32.totalorder %v378, %v654
          %vm1303 = vcmp.eq.s32.totalorder %v378, %v660
          %vm1304 = vcmp.eq.s32.totalorder %v378, %v666
          %vm1305 = vcmp.eq.s32.totalorder %v378, %v672
          %vm1306 = vcmp.eq.s32.totalorder %v378, %v678
          %vm1307 = vcmp.eq.s32.totalorder %v378, %v684
          %vm1308 = vcmp.eq.s32.totalorder %v378, %v690
          %vm1309 = vcmp.eq.s32.totalorder %v378, %v696
          %vm1310 = vcmp.eq.s32.totalorder %v378, %v702
          %vm1311 = vcmp.eq.s32.totalorder %v378, %v708
          %vm1312 = vcmp.eq.s32.totalorder %v378, %v714
          %vm1313 = vcmp.eq.s32.totalorder %v378, %v720
          %vm1314 = vcmp.eq.s32.totalorder %v378, %v726
          %vm1315 = vcmp.eq.s32.totalorder %v378, %v732
          %vm1316 = vcmp.eq.s32.totalorder %v378, %v738
          %vm1317 = vcmp.eq.s32.totalorder %v378, %v744
          %vm1318 = vcmp.eq.s32.totalorder %v378, %v750
          %vm1319 = vcmp.eq.s32.totalorder %v378, %v756
          %vm1320 = vcmp.eq.s32.totalorder %v378, %v762
          %vm1321 = vcmp.eq.s32.totalorder %v378, %v768
          %vm1322 = vcmp.eq.s32.totalorder %v378, %v774
          %vm1323 = vcmp.eq.s32.totalorder %v378, %v780
          %vm1324 = vcmp.eq.s32.totalorder %v378, %v786
          %vm1325 = vcmp.eq.s32.totalorder %v378, %v792
          %vm1326 = vcmp.eq.s32.totalorder %v378, %v798
          %vm1327 = vcmp.eq.s32.totalorder %v378, %v804
          %vm1328 = vcmp.eq.s32.totalorder %v378, %v810
          %vm1329 = vcmp.eq.s32.totalorder %v378, %v816
          %vm1330 = vcmp.eq.s32.totalorder %v378, %v822
          %vm1331 = vcmp.eq.s32.totalorder %v378, %v828
          %vm1332 = vcmp.eq.s32.totalorder %v378, %v834
          %vm1333 = vcmp.eq.s32.totalorder %v378, %v840
          %vm1334 = vcmp.eq.s32.totalorder %v378, %v846
          %vm1335 = vcmp.eq.s32.totalorder %v378, %v852
          %vm1336 = vcmp.eq.s32.totalorder %v378, %v858
          %vm1337 = vcmp.eq.s32.totalorder %v378, %v864
          %vm1338 = vcmp.eq.s32.totalorder %v378, %v870
          %vm1339 = vcmp.eq.s32.totalorder %v378, %v876
          %vm1340 = vcmp.eq.s32.totalorder %v378, %v882
          %vm1341 = vcmp.eq.s32.totalorder %v378, %v888
          %vm1342 = vcmp.eq.s32.totalorder %v378, %v894
          %vm1343 = vcmp.eq.s32.totalorder %v378, %v900
          %vm1344 = vcmp.eq.s32.totalorder %v378, %v906
          %vm1345 = vcmp.eq.s32.totalorder %v378, %v912
          %vm1346 = vcmp.eq.s32.totalorder %v378, %v918
          %vm1347 = vcmp.eq.s32.totalorder %v378, %v924
          %vm1348 = vcmp.eq.s32.totalorder %v378, %v930
          %vm1349 = vcmp.eq.s32.totalorder %v378, %v936
          %vm1350 = vcmp.eq.s32.totalorder %v378, %v942
          %vm1351 = vcmp.eq.s32.totalorder %v378, %v948
          %vm1352 = vcmp.eq.s32.totalorder %v378, %v954
          %vm1353 = vcmp.eq.s32.totalorder %v378, %v960
          %vm1354 = vcmp.eq.s32.totalorder %v378, %v966
          %vm1355 = vcmp.eq.s32.totalorder %v378, %v972
          %vm1356 = vcmp.eq.s32.totalorder %v378, %v978
          %vm1357 = vcmp.eq.s32.totalorder %v378, %v984
          %vm1358 = vcmp.eq.s32.totalorder %v378, %v990
          %vm1359 = vcmp.eq.s32.totalorder %v378, %v996
          %vm1360 = vcmp.eq.s32.totalorder %v378, %v1002
          %vm1361 = vcmp.eq.s32.totalorder %v378, %v1008
          %vm1362 = vcmp.eq.s32.totalorder %v378, %v1014
          %vm1363 = vcmp.eq.s32.totalorder %v378, %v1020
          %vm1364 = vcmp.eq.s32.totalorder %v378, %v1026
          %vm1365 = vcmp.eq.s32.totalorder %v378, %v1032
          %vm1366 = vcmp.eq.s32.totalorder %v378, %v1038
          %vm1367 = vcmp.eq.s32.totalorder %v378, %v1044
          %vm1368 = vcmp.eq.s32.totalorder %v378, %v1050
          %vm1369 = vcmp.eq.s32.totalorder %v378, %v1056
          %vm1370 = vcmp.eq.s32.totalorder %v378, %v1062
          %vm1371 = vcmp.eq.s32.totalorder %v378, %v1068
          %vm1372 = vcmp.eq.s32.totalorder %v378, %v1074
          %vm1373 = vcmp.eq.s32.totalorder %v378, %v1080
          %vm1374 = vcmp.eq.s32.totalorder %v378, %v1086
          %vm1375 = vcmp.eq.s32.totalorder %v378, %v1092
          %vm1376 = vcmp.eq.s32.totalorder %v378, %v1098
          %vm1377 = vcmp.eq.s32.totalorder %v378, %v1104
          %vm1378 = vcmp.eq.s32.totalorder %v378, %v1110
          %vm1379 = vcmp.eq.s32.totalorder %v378, %v1116
          %vm1380 = vcmp.eq.s32.totalorder %v378, %v1122
          %vm1381 = vcmp.eq.s32.totalorder %v378, %v1128
          %vm1382 = vcmp.eq.s32.totalorder %v378, %v1134
          %vm1383 = vcmp.eq.s32.totalorder %v378, %v1140
          %vm1384 = vcmp.eq.s32.totalorder %v378, %v1146
          %vm1385 = vcmp.eq.s32.totalorder %v378, %v1152
          %vm1386 = vcmp.eq.s32.totalorder %v378, %v1158
          %vm1387 = vcmp.eq.s32.totalorder %v378, %v1164
          %vm1388 = vcmp.eq.s32.totalorder %v378, %v1170
          %vm1389 = vcmp.eq.s32.totalorder %v378, %v1176
          %vm1390 = vcmp.eq.s32.totalorder %v378, %v1182
          %vm1391 = vcmp.eq.s32.totalorder %v378, %v1188
          %vm1392 = vcmp.eq.s32.totalorder %v378, %v1194
          %vm1393 = vcmp.eq.s32.totalorder %v378, %v1200
          %vm1394 = vcmp.eq.s32.totalorder %v378, %v1206
          %vm1395 = vcmp.eq.s32.totalorder %v378, %v1212
          %vm1396 = vcmp.eq.s32.totalorder %v378, %v1218
          %vm1397 = vcmp.eq.s32.totalorder %v378, %v1224
          %vm1398 = vcmp.eq.s32.totalorder %v378, %v1230
          %vm1399 = vcmp.eq.s32.totalorder %v378, %v1236
          %vm1400 = vcmp.eq.s32.totalorder %v378, %v1242
          %vm1401 = vcmp.eq.s32.totalorder %v378, %v1248
          %vm1402 = vcmp.eq.s32.totalorder %v378, %v1254
          %vm1403 = vcmp.eq.s32.totalorder %v378, %v1260
          %vm1404 = vcmp.eq.s32.totalorder %v378, %v1266
          %vm1405 = vcmp.eq.s32.totalorder %v378, %v1272
          %vm1406 = vcmp.eq.s32.totalorder %v378, %v1278
          %v1407 = vsel %vm1279, 1, 0
          %v1408 = vsel %vm1280, 1, 0
          %v1409 = vsel %vm1281, 1, 0
          %v1410 = vsel %vm1282, 1, 0
          %v1411 = vsel %vm1283, 1, 0
          %v1412 = vsel %vm1284, 1, 0
          %v1413 = vsel %vm1285, 1, 0
          %v1414 = vsel %vm1286, 1, 0
          %v1415 = vsel %vm1287, 1, 0
          %v1416 = vsel %vm1288, 1, 0
          %v1417 = vsel %vm1289, 1, 0
          %v1418 = vsel %vm1290, 1, 0
          %v1419 = vsel %vm1291, 1, 0
          %v1420 = vsel %vm1292, 1, 0
          %v1421 = vsel %vm1293, 1, 0
          %v1422 = vsel %vm1294, 1, 0
          %v1423 = vsel %vm1295, 1, 0
          %v1424 = vsel %vm1296, 1, 0
          %v1425 = vsel %vm1297, 1, 0
          %v1426 = vsel %vm1298, 1, 0
          %v1427 = vsel %vm1299, 1, 0
          %v1428 = vsel %vm1300, 1, 0
          %v1429 = vsel %vm1301, 1, 0
          %v1430 = vsel %vm1302, 1, 0
          %v1431 = vsel %vm1303, 1, 0
          %v1432 = vsel %vm1304, 1, 0
          %v1433 = vsel %vm1305, 1, 0
          %v1434 = vsel %vm1306, 1, 0
          %v1435 = vsel %vm1307, 1, 0
          %v1436 = vsel %vm1308, 1, 0
          %v1437 = vsel %vm1309, 1, 0
          %v1438 = vsel %vm1310, 1, 0
          %v1439 = vsel %vm1311, 1, 0
          %v1440 = vsel %vm1312, 1, 0
          %v1441 = vsel %vm1313, 1, 0
          %v1442 = vsel %vm1314, 1, 0
          %v1443 = vsel %vm1315, 1, 0
          %v1444 = vsel %vm1316, 1, 0
          %v1445 = vsel %vm1317, 1, 0
          %v1446 = vsel %vm1318, 1, 0
          %v1447 = vsel %vm1319, 1, 0
          %v1448 = vsel %vm1320, 1, 0
          %v1449 = vsel %vm1321, 1, 0
          %v1450 = vsel %vm1322, 1, 0
          %v1451 = vsel %vm1323, 1, 0
          %v1452 = vsel %vm1324, 1, 0
          %v1453 = vsel %vm1325, 1, 0
          %v1454 = vsel %vm1326, 1, 0
          %v1455 = vsel %vm1327, 1, 0
          %v1456 = vsel %vm1328, 1, 0
          %v1457 = vsel %vm1329, 1, 0
          %v1458 = vsel %vm1330, 1, 0
          %v1459 = vsel %vm1331, 1, 0
          %v1460 = vsel %vm1332, 1, 0
          %v1461 = vsel %vm1333, 1, 0
          %v1462 = vsel %vm1334, 1, 0
          %v1463 = vsel %vm1335, 1, 0
          %v1464 = vsel %vm1336, 1, 0
          %v1465 = vsel %vm1337, 1, 0
          %v1466 = vsel %vm1338, 1, 0
          %v1467 = vsel %vm1339, 1, 0
          %v1468 = vsel %vm1340, 1, 0
          %v1469 = vsel %vm1341, 1, 0
          %v1470 = vsel %vm1342, 1, 0
          %v1471 = vsel %vm1343, 1, 0
          %v1472 = vsel %vm1344, 1, 0
          %v1473 = vsel %vm1345, 1, 0
          %v1474 = vsel %vm1346, 1, 0
          %v1475 = vsel %vm1347, 1, 0
          %v1476 = vsel %vm1348, 1, 0
          %v1477 = vsel %vm1349, 1, 0
          %v1478 = vsel %vm1350, 1, 0
          %v1479 = vsel %vm1351, 1, 0
          %v1480 = vsel %vm1352, 1, 0
          %v1481 = vsel %vm1353, 1, 0
          %v1482 = vsel %vm1354, 1, 0
          %v1483 = vsel %vm1355, 1, 0
          %v1484 = vsel %vm1356, 1, 0
          %v1485 = vsel %vm1357, 1, 0
          %v1486 = vsel %vm1358, 1, 0
          %v1487 = vsel %vm1359, 1, 0
          %v1488 = vsel %vm1360, 1, 0
          %v1489 = vsel %vm1361, 1, 0
          %v1490 = vsel %vm1362, 1, 0
          %v1491 = vsel %vm1363, 1, 0
          %v1492 = vsel %vm1364, 1, 0
          %v1493 = vsel %vm1365, 1, 0
          %v1494 = vsel %vm1366, 1, 0
          %v1495 = vsel %vm1367, 1, 0
          %v1496 = vsel %vm1368, 1, 0
          %v1497 = vsel %vm1369, 1, 0
          %v1498 = vsel %vm1370, 1, 0
          %v1499 = vsel %vm1371, 1, 0
          %v1500 = vsel %vm1372, 1, 0
          %v1501 = vsel %vm1373, 1, 0
          %v1502 = vsel %vm1374, 1, 0
          %v1503 = vsel %vm1375, 1, 0
          %v1504 = vsel %vm1376, 1, 0
          %v1505 = vsel %vm1377, 1, 0
          %v1506 = vsel %vm1378, 1, 0
          %v1507 = vsel %vm1379, 1, 0
          %v1508 = vsel %vm1380, 1, 0
          %v1509 = vsel %vm1381, 1, 0
          %v1510 = vsel %vm1382, 1, 0
          %v1511 = vsel %vm1383, 1, 0
          %v1512 = vsel %vm1384, 1, 0
          %v1513 = vsel %vm1385, 1, 0
          %v1514 = vsel %vm1386, 1, 0
          %v1515 = vsel %vm1387, 1, 0
          %v1516 = vsel %vm1388, 1, 0
          %v1517 = vsel %vm1389, 1, 0
          %v1518 = vsel %vm1390, 1, 0
          %v1519 = vsel %vm1391, 1, 0
          %v1520 = vsel %vm1392, 1, 0
          %v1521 = vsel %vm1393, 1, 0
          %v1522 = vsel %vm1394, 1, 0
          %v1523 = vsel %vm1395, 1, 0
          %v1524 = vsel %vm1396, 1, 0
          %v1525 = vsel %vm1397, 1, 0
          %v1526 = vsel %vm1398, 1, 0
          %v1527 = vsel %vm1399, 1, 0
          %v1528 = vsel %vm1400, 1, 0
          %v1529 = vsel %vm1401, 1, 0
          %v1530 = vsel %vm1402, 1, 0
          %v1531 = vsel %vm1403, 1, 0
          %v1532 = vsel %vm1404, 1, 0
          %v1533 = vsel %vm1405, 1, 0
          %v1534 = vsel %vm1406, 1, 0
          %v1535 = vcvt.s32.f32 %v1407
          %v1536 = vcvt.s32.f32 %v1408
          %v1537 = vcvt.s32.f32 %v1409
          %v1538 = vcvt.s32.f32 %v1410
          %v1539 = vcvt.s32.f32 %v1411
          %v1540 = vcvt.s32.f32 %v1412
          %v1541 = vcvt.s32.f32 %v1413
          %v1542 = vcvt.s32.f32 %v1414
          %v1543 = vcvt.s32.f32 %v1415
          %v1544 = vcvt.s32.f32 %v1416
          %v1545 = vcvt.s32.f32 %v1417
          %v1546 = vcvt.s32.f32 %v1418
          %v1547 = vcvt.s32.f32 %v1419
          %v1548 = vcvt.s32.f32 %v1420
          %v1549 = vcvt.s32.f32 %v1421
          %v1550 = vcvt.s32.f32 %v1422
          %v1551 = vcvt.s32.f32 %v1423
          %v1552 = vcvt.s32.f32 %v1424
          %v1553 = vcvt.s32.f32 %v1425
          %v1554 = vcvt.s32.f32 %v1426
          %v1555 = vcvt.s32.f32 %v1427
          %v1556 = vcvt.s32.f32 %v1428
          %v1557 = vcvt.s32.f32 %v1429
          %v1558 = vcvt.s32.f32 %v1430
          %v1559 = vcvt.s32.f32 %v1431
          %v1560 = vcvt.s32.f32 %v1432
          %v1561 = vcvt.s32.f32 %v1433
          %v1562 = vcvt.s32.f32 %v1434
          %v1563 = vcvt.s32.f32 %v1435
          %v1564 = vcvt.s32.f32 %v1436
          %v1565 = vcvt.s32.f32 %v1437
          %v1566 = vcvt.s32.f32 %v1438
          %v1567 = vcvt.s32.f32 %v1439
          %v1568 = vcvt.s32.f32 %v1440
          %v1569 = vcvt.s32.f32 %v1441
          %v1570 = vcvt.s32.f32 %v1442
          %v1571 = vcvt.s32.f32 %v1443
          %v1572 = vcvt.s32.f32 %v1444
          %v1573 = vcvt.s32.f32 %v1445
          %v1574 = vcvt.s32.f32 %v1446
          %v1575 = vcvt.s32.f32 %v1447
          %v1576 = vcvt.s32.f32 %v1448
          %v1577 = vcvt.s32.f32 %v1449
          %v1578 = vcvt.s32.f32 %v1450
          %v1579 = vcvt.s32.f32 %v1451
          %v1580 = vcvt.s32.f32 %v1452
          %v1581 = vcvt.s32.f32 %v1453
          %v1582 = vcvt.s32.f32 %v1454
          %v1583 = vcvt.s32.f32 %v1455
          %v1584 = vcvt.s32.f32 %v1456
          %v1585 = vcvt.s32.f32 %v1457
          %v1586 = vcvt.s32.f32 %v1458
          %v1587 = vcvt.s32.f32 %v1459
          %v1588 = vcvt.s32.f32 %v1460
          %v1589 = vcvt.s32.f32 %v1461
          %v1590 = vcvt.s32.f32 %v1462
          %v1591 = vcvt.s32.f32 %v1463
          %v1592 = vcvt.s32.f32 %v1464
          %v1593 = vcvt.s32.f32 %v1465
          %v1594 = vcvt.s32.f32 %v1466
          %v1595 = vcvt.s32.f32 %v1467
          %v1596 = vcvt.s32.f32 %v1468
          %v1597 = vcvt.s32.f32 %v1469
          %v1598 = vcvt.s32.f32 %v1470
          %v1599 = vcvt.s32.f32 %v1471
          %v1600 = vcvt.s32.f32 %v1472
          %v1601 = vcvt.s32.f32 %v1473
          %v1602 = vcvt.s32.f32 %v1474
          %v1603 = vcvt.s32.f32 %v1475
          %v1604 = vcvt.s32.f32 %v1476
          %v1605 = vcvt.s32.f32 %v1477
          %v1606 = vcvt.s32.f32 %v1478
          %v1607 = vcvt.s32.f32 %v1479
          %v1608 = vcvt.s32.f32 %v1480
          %v1609 = vcvt.s32.f32 %v1481
          %v1610 = vcvt.s32.f32 %v1482
          %v1611 = vcvt.s32.f32 %v1483
          %v1612 = vcvt.s32.f32 %v1484
          %v1613 = vcvt.s32.f32 %v1485
          %v1614 = vcvt.s32.f32 %v1486
          %v1615 = vcvt.s32.f32 %v1487
          %v1616 = vcvt.s32.f32 %v1488
          %v1617 = vcvt.s32.f32 %v1489
          %v1618 = vcvt.s32.f32 %v1490
          %v1619 = vcvt.s32.f32 %v1491
          %v1620 = vcvt.s32.f32 %v1492
          %v1621 = vcvt.s32.f32 %v1493
          %v1622 = vcvt.s32.f32 %v1494
          %v1623 = vcvt.s32.f32 %v1495
          %v1624 = vcvt.s32.f32 %v1496
          %v1625 = vcvt.s32.f32 %v1497
          %v1626 = vcvt.s32.f32 %v1498
          %v1627 = vcvt.s32.f32 %v1499
          %v1628 = vcvt.s32.f32 %v1500
          %v1629 = vcvt.s32.f32 %v1501
          %v1630 = vcvt.s32.f32 %v1502
          %v1631 = vcvt.s32.f32 %v1503
          %v1632 = vcvt.s32.f32 %v1504
          %v1633 = vcvt.s32.f32 %v1505
          %v1634 = vcvt.s32.f32 %v1506
          %v1635 = vcvt.s32.f32 %v1507
          %v1636 = vcvt.s32.f32 %v1508
          %v1637 = vcvt.s32.f32 %v1509
          %v1638 = vcvt.s32.f32 %v1510
          %v1639 = vcvt.s32.f32 %v1511
          %v1640 = vcvt.s32.f32 %v1512
          %v1641 = vcvt.s32.f32 %v1513
          %v1642 = vcvt.s32.f32 %v1514
          %v1643 = vcvt.s32.f32 %v1515
          %v1644 = vcvt.s32.f32 %v1516
          %v1645 = vcvt.s32.f32 %v1517
          %v1646 = vcvt.s32.f32 %v1518
          %v1647 = vcvt.s32.f32 %v1519
          %v1648 = vcvt.s32.f32 %v1520
          %v1649 = vcvt.s32.f32 %v1521
          %v1650 = vcvt.s32.f32 %v1522
          %v1651 = vcvt.s32.f32 %v1523
          %v1652 = vcvt.s32.f32 %v1524
          %v1653 = vcvt.s32.f32 %v1525
          %v1654 = vcvt.s32.f32 %v1526
          %v1655 = vcvt.s32.f32 %v1527
          %v1656 = vcvt.s32.f32 %v1528
          %v1657 = vcvt.s32.f32 %v1529
          %v1658 = vcvt.s32.f32 %v1530
          %v1659 = vcvt.s32.f32 %v1531
          %v1660 = vcvt.s32.f32 %v1532
          %v1661 = vcvt.s32.f32 %v1533
          %v1662 = vcvt.s32.f32 %v1534
          %vm1663 = vcmask 261120
          %1664 = vst.msk [vmem:[#allocation3] sm:$0xff] %vm1663, %v1535
          %1665 = vst.msk [vmem:[#allocation3 + $0x8] sm:$0xff] %vm1663, %v1536
          %1666 = vst.msk [vmem:[#allocation3 + $0x10] sm:$0xff] %vm1663, %v1537
          %1667 = vst.msk [vmem:[#allocation3 + $0x18] sm:$0xff] %vm1663, %v1538
          %1668 = vst.msk [vmem:[#allocation3 + $0x20] sm:$0xff] %vm1663, %v1539
          %1669 = vst.msk [vmem:[#allocation3 + $0x28] sm:$0xff] %vm1663, %v1540
          %1670 = vst.msk [vmem:[#allocation3 + $0x30] sm:$0xff] %vm1663, %v1541
          %1671 = vst.msk [vmem:[#allocation3 + $0x38] sm:$0xff] %vm1663, %v1542
          %1672 = vst.msk [vmem:[#allocation3 + $0x40] sm:$0xff] %vm1663, %v1543
          %1673 = vst.msk [vmem:[#allocation3 + $0x48] sm:$0xff] %vm1663, %v1544
          %1674 = vst.msk [vmem:[#allocation3 + $0x50] sm:$0xff] %vm1663, %v1545
          %1675 = vst.msk [vmem:[#allocation3 + $0x58] sm:$0xff] %vm1663, %v1546
          %1676 = vst.msk [vmem:[#allocation3 + $0x60] sm:$0xff] %vm1663, %v1547
          %1677 = vst.msk [vmem:[#allocation3 + $0x68] sm:$0xff] %vm1663, %v1548
          %1678 = vst.msk [vmem:[#allocation3 + $0x70] sm:$0xff] %vm1663, %v1549
          %1679 = vst.msk [vmem:[#allocation3 + $0x78] sm:$0xff] %vm1663, %v1550
          %1680 = vst.msk [vmem:[#allocation3 + $0x80] sm:$0xff] %vm1663, %v1551
          %1681 = vst.msk [vmem:[#allocation3 + $0x88] sm:$0xff] %vm1663, %v1552
          %1682 = vst.msk [vmem:[#allocation3 + $0x90] sm:$0xff] %vm1663, %v1553
          %1683 = vst.msk [vmem:[#allocation3 + $0x98] sm:$0xff] %vm1663, %v1554
          %1684 = vst.msk [vmem:[#allocation3 + $0xa0] sm:$0xff] %vm1663, %v1555
          %1685 = vst.msk [vmem:[#allocation3 + $0xa8] sm:$0xff] %vm1663, %v1556
          %1686 = vst.msk [vmem:[#allocation3 + $0xb0] sm:$0xff] %vm1663, %v1557
          %1687 = vst.msk [vmem:[#allocation3 + $0xb8] sm:$0xff] %vm1663, %v1558
          %1688 = vst.msk [vmem:[#allocation3 + $0xc0] sm:$0xff] %vm1663, %v1559
          %1689 = vst.msk [vmem:[#allocation3 + $0xc8] sm:$0xff] %vm1663, %v1560
          %1690 = vst.msk [vmem:[#allocation3 + $0xd0] sm:$0xff] %vm1663, %v1561
          %1691 = vst.msk [vmem:[#allocation3 + $0xd8] sm:$0xff] %vm1663, %v1562
          %1692 = vst.msk [vmem:[#allocation3 + $0xe0] sm:$0xff] %vm1663, %v1563
          %1693 = vst.msk [vmem:[#allocation3 + $0xe8] sm:$0xff] %vm1663, %v1564
          %1694 = vst.msk [vmem:[#allocation3 + $0xf0] sm:$0xff] %vm1663, %v1565
          %1695 = vst.msk [vmem:[#allocation3 + $0xf8] sm:$0xff] %vm1663, %v1566
          %1696 = vst.msk [vmem:[#allocation3 + $0x100] sm:$0xff] %vm1663, %v1567
          %1697 = vst.msk [vmem:[#allocation3 + $0x108] sm:$0xff] %vm1663, %v1568
          %1698 = vst.msk [vmem:[#allocation3 + $0x110] sm:$0xff] %vm1663, %v1569
          %1699 = vst.msk [vmem:[#allocation3 + $0x118] sm:$0xff] %vm1663, %v1570
          %1700 = vst.msk [vmem:[#allocation3 + $0x120] sm:$0xff] %vm1663, %v1571
          %1701 = vst.msk [vmem:[#allocation3 + $0x128] sm:$0xff] %vm1663, %v1572
          %1702 = vst.msk [vmem:[#allocation3 + $0x130] sm:$0xff] %vm1663, %v1573
          %1703 = vst.msk [vmem:[#allocation3 + $0x138] sm:$0xff] %vm1663, %v1574
          %1704 = vst.msk [vmem:[#allocation3 + $0x140] sm:$0xff] %vm1663, %v1575
          %1705 = vst.msk [vmem:[#allocation3 + $0x148] sm:$0xff] %vm1663, %v1576
          %1706 = vst.msk [vmem:[#allocation3 + $0x150] sm:$0xff] %vm1663, %v1577
          %1707 = vst.msk [vmem:[#allocation3 + $0x158] sm:$0xff] %vm1663, %v1578
          %1708 = vst.msk [vmem:[#allocation3 + $0x160] sm:$0xff] %vm1663, %v1579
          %1709 = vst.msk [vmem:[#allocation3 + $0x168] sm:$0xff] %vm1663, %v1580
          %1710 = vst.msk [vmem:[#allocation3 + $0x170] sm:$0xff] %vm1663, %v1581
          %1711 = vst.msk [vmem:[#allocation3 + $0x178] sm:$0xff] %vm1663, %v1582
          %1712 = vst.msk [vmem:[#allocation3 + $0x180] sm:$0xff] %vm1663, %v1583
          %1713 = vst.msk [vmem:[#allocation3 + $0x188] sm:$0xff] %vm1663, %v1584
          %1714 = vst.msk [vmem:[#allocation3 + $0x190] sm:$0xff] %vm1663, %v1585
          %1715 = vst.msk [vmem:[#allocation3 + $0x198] sm:$0xff] %vm1663, %v1586
          %1716 = vst.msk [vmem:[#allocation3 + $0x1a0] sm:$0xff] %vm1663, %v1587
          %1717 = vst.msk [vmem:[#allocation3 + $0x1a8] sm:$0xff] %vm1663, %v1588
          %1718 = vst.msk [vmem:[#allocation3 + $0x1b0] sm:$0xff] %vm1663, %v1589
          %1719 = vst.msk [vmem:[#allocation3 + $0x1b8] sm:$0xff] %vm1663, %v1590
          %1720 = vst.msk [vmem:[#allocation3 + $0x1c0] sm:$0xff] %vm1663, %v1591
          %1721 = vst.msk [vmem:[#allocation3 + $0x1c8] sm:$0xff] %vm1663, %v1592
          %1722 = vst.msk [vmem:[#allocation3 + $0x1d0] sm:$0xff] %vm1663, %v1593
          %1723 = vst.msk [vmem:[#allocation3 + $0x1d8] sm:$0xff] %vm1663, %v1594
          %1724 = vst.msk [vmem:[#allocation3 + $0x1e0] sm:$0xff] %vm1663, %v1595
          %1725 = vst.msk [vmem:[#allocation3 + $0x1e8] sm:$0xff] %vm1663, %v1596
          %1726 = vst.msk [vmem:[#allocation3 + $0x1f0] sm:$0xff] %vm1663, %v1597
          %1727 = vst.msk [vmem:[#allocation3 + $0x1f8] sm:$0xff] %vm1663, %v1598
          %1728 = vst.msk [vmem:[#allocation3 + $0x200] sm:$0xff] %vm1663, %v1599
          %1729 = vst.msk [vmem:[#allocation3 + $0x208] sm:$0xff] %vm1663, %v1600
          %1730 = vst.msk [vmem:[#allocation3 + $0x210] sm:$0xff] %vm1663, %v1601
          %1731 = vst.msk [vmem:[#allocation3 + $0x218] sm:$0xff] %vm1663, %v1602
          %1732 = vst.msk [vmem:[#allocation3 + $0x220] sm:$0xff] %vm1663, %v1603
          %1733 = vst.msk [vmem:[#allocation3 + $0x228] sm:$0xff] %vm1663, %v1604
          %1734 = vst.msk [vmem:[#allocation3 + $0x230] sm:$0xff] %vm1663, %v1605
          %1735 = vst.msk [vmem:[#allocation3 + $0x238] sm:$0xff] %vm1663, %v1606
          %1736 = vst.msk [vmem:[#allocation3 + $0x240] sm:$0xff] %vm1663, %v1607
          %1737 = vst.msk [vmem:[#allocation3 + $0x248] sm:$0xff] %vm1663, %v1608
          %1738 = vst.msk [vmem:[#allocation3 + $0x250] sm:$0xff] %vm1663, %v1609
          %1739 = vst.msk [vmem:[#allocation3 + $0x258] sm:$0xff] %vm1663, %v1610
          %1740 = vst.msk [vmem:[#allocation3 + $0x260] sm:$0xff] %vm1663, %v1611
          %1741 = vst.msk [vmem:[#allocation3 + $0x268] sm:$0xff] %vm1663, %v1612
          %1742 = vst.msk [vmem:[#allocation3 + $0x270] sm:$0xff] %vm1663, %v1613
          %1743 = vst.msk [vmem:[#allocation3 + $0x278] sm:$0xff] %vm1663, %v1614
          %1744 = vst.msk [vmem:[#allocation3 + $0x280] sm:$0xff] %vm1663, %v1615
          %1745 = vst.msk [vmem:[#allocation3 + $0x288] sm:$0xff] %vm1663, %v1616
          %1746 = vst.msk [vmem:[#allocation3 + $0x290] sm:$0xff] %vm1663, %v1617
          %1747 = vst.msk [vmem:[#allocation3 + $0x298] sm:$0xff] %vm1663, %v1618
          %1748 = vst.msk [vmem:[#allocation3 + $0x2a0] sm:$0xff] %vm1663, %v1619
          %1749 = vst.msk [vmem:[#allocation3 + $0x2a8] sm:$0xff] %vm1663, %v1620
          %1750 = vst.msk [vmem:[#allocation3 + $0x2b0] sm:$0xff] %vm1663, %v1621
          %1751 = vst.msk [vmem:[#allocation3 + $0x2b8] sm:$0xff] %vm1663, %v1622
          %1752 = vst.msk [vmem:[#allocation3 + $0x2c0] sm:$0xff] %vm1663, %v1623
          %1753 = vst.msk [vmem:[#allocation3 + $0x2c8] sm:$0xff] %vm1663, %v1624
          %1754 = vst.msk [vmem:[#allocation3 + $0x2d0] sm:$0xff] %vm1663, %v1625
          %1755 = vst.msk [vmem:[#allocation3 + $0x2d8] sm:$0xff] %vm1663, %v1626
          %1756 = vst.msk [vmem:[#allocation3 + $0x2e0] sm:$0xff] %vm1663, %v1627
          %1757 = vst.msk [vmem:[#allocation3 + $0x2e8] sm:$0xff] %vm1663, %v1628
          %1758 = vst.msk [vmem:[#allocation3 + $0x2f0] sm:$0xff] %vm1663, %v1629
          %1759 = vst.msk [vmem:[#allocation3 + $0x2f8] sm:$0xff] %vm1663, %v1630
          %1760 = vst.msk [vmem:[#allocation3 + $0x300] sm:$0xff] %vm1663, %v1631
          %1761 = vst.msk [vmem:[#allocation3 + $0x308] sm:$0xff] %vm1663, %v1632
          %1762 = vst.msk [vmem:[#allocation3 + $0x310] sm:$0xff] %vm1663, %v1633
          %1763 = vst.msk [vmem:[#allocation3 + $0x318] sm:$0xff] %vm1663, %v1634
          %1764 = vst.msk [vmem:[#allocation3 + $0x320] sm:$0xff] %vm1663, %v1635
          %1765 = vst.msk [vmem:[#allocation3 + $0x328] sm:$0xff] %vm1663, %v1636
          %1766 = vst.msk [vmem:[#allocation3 + $0x330] sm:$0xff] %vm1663, %v1637
          %1767 = vst.msk [vmem:[#allocation3 + $0x338] sm:$0xff] %vm1663, %v1638
          %1768 = vst.msk [vmem:[#allocation3 + $0x340] sm:$0xff] %vm1663, %v1639
          %1769 = vst.msk [vmem:[#allocation3 + $0x348] sm:$0xff] %vm1663, %v1640
          %1770 = vst.msk [vmem:[#allocation3 + $0x350] sm:$0xff] %vm1663, %v1641
          %1771 = vst.msk [vmem:[#allocation3 + $0x358] sm:$0xff] %vm1663, %v1642
          %1772 = vst.msk [vmem:[#allocation3 + $0x360] sm:$0xff] %vm1663, %v1643
          %1773 = vst.msk [vmem:[#allocation3 + $0x368] sm:$0xff] %vm1663, %v1644
          %1774 = vst.msk [vmem:[#allocation3 + $0x370] sm:$0xff] %vm1663, %v1645
          %1775 = vst.msk [vmem:[#allocation3 + $0x378] sm:$0xff] %vm1663, %v1646
          %1776 = vst.msk [vmem:[#allocation3 + $0x380] sm:$0xff] %vm1663, %v1647
          %1777 = vst.msk [vmem:[#allocation3 + $0x388] sm:$0xff] %vm1663, %v1648
          %1778 = vst.msk [vmem:[#allocation3 + $0x390] sm:$0xff] %vm1663, %v1649
          %1779 = vst.msk [vmem:[#allocation3 + $0x398] sm:$0xff] %vm1663, %v1650
          %1780 = vst.msk [vmem:[#allocation3 + $0x3a0] sm:$0xff] %vm1663, %v1651
          %1781 = vst.msk [vmem:[#allocation3 + $0x3a8] sm:$0xff] %vm1663, %v1652
          %1782 = vst.msk [vmem:[#allocation3 + $0x3b0] sm:$0xff] %vm1663, %v1653
          %1783 = vst.msk [vmem:[#allocation3 + $0x3b8] sm:$0xff] %vm1663, %v1654
          %1784 = vst.msk [vmem:[#allocation3 + $0x3c0] sm:$0xff] %vm1663, %v1655
          %1785 = vst.msk [vmem:[#allocation3 + $0x3c8] sm:$0xff] %vm1663, %v1656
          %1786 = vst.msk [vmem:[#allocation3 + $0x3d0] sm:$0xff] %vm1663, %v1657
          %1787 = vst.msk [vmem:[#allocation3 + $0x3d8] sm:$0xff] %vm1663, %v1658
          %1788 = vst.msk [vmem:[#allocation3 + $0x3e0] sm:$0xff] %vm1663, %v1659
          %1789 = vst.msk [vmem:[#allocation3 + $0x3e8] sm:$0xff] %vm1663, %v1660
          %1790 = vst.msk [vmem:[#allocation3 + $0x3f0] sm:$0xff] %vm1663, %v1661
          %1791 = vst.msk [vmem:[#allocation3 + $0x3f8] sm:$0xff] %vm1663, %v1662
          %vm1792 = vcmask 1041409
          %v1793 = vsel %vm1792, %v468, %v461
          %vm1794 = vcmask 1042434
          %v1795 = vsel %vm1794, %v475, %v1793
          %vm1796 = vcmask 1043459
          %v1797 = vsel %vm1796, %v482, %v1795
          %vm1798 = vcmask 1044484
          %v1799 = vsel %vm1798, %v489, %v1797
          %vm1800 = vcmask 1045509
          %v1801 = vsel %vm1800, %v496, %v1799
          %vm1802 = vcmask 1046534
          %v1803 = vsel %vm1802, %v503, %v1801
          %vm1804 = vcmask 1047559
          %v1805 = vsel %vm1804, %v510, %v1803
          %1806 = vrot.lane.b32.xlu0 %v1805, 2
          %v1807 = vpop.permute.xlu0 %1806
          %vm1808 = vcmask 15360
          %v1809 = vsel %vm1808, 0, %v1807
          %vm1810 = vcmp.lt.s32.totalorder %v378, 0
          %v1811 = vsub.s32 0, %v378
          %v1812 = vsel %vm1810, %v1811, %v378
          %v1813 = vshrl.u32 %v1812, 1
          %v1814 = vand.u32 %v1812, 1
          %v1815 = vsub.s32 0, %v1814
          %v1816 = vsel %vm1810, %v1815, %v1814
          %vm1817 = vcmp.ne.s32.totalorder %v1816, 0
          %vm1818 = vcmp.lt.s32.totalorder %v1816, 0
          %vm1819 = vmand %vm1818, %vm1817
          %v1820 = vadd.s32 %v1816, 2
          %v1821 = vsel %vm1819, %v1820, %v1816
          %vm1822 = vcmp.eq.s32.totalorder %v1821, 1
          %vm1823 = vcmp.ge.s32.totalorder %v378, 3
          %vm1824 = vmand %vm1822, %vm1823
          %vm1825 = vcmp.lt.s32.totalorder %v378, 13
          %vm1826 = vmand %vm1824, %vm1825
          %v1827 = vrot.slane %v1809, 1
          %v1828 = vrot.slane %v1809, 2
          %v1829 = vrot.slane %v1809, 3
          %v1830 = vrot.slane %v1809, 4
          %v1831 = vrot.slane %v1809, 5
          %v1832 = vrot.slane %v1809, 6
          %v1833 = vrot.slane %v1809, 7
          %vm1834 = vcmp.ne.s32.totalorder %v461, %v1809
          %vm1835 = vcmp.ne.s32.totalorder %v468, %v1827
          %vm1836 = vcmp.ne.s32.totalorder %v475, %v1828
          %vm1837 = vcmp.ne.s32.totalorder %v482, %v1829
          %vm1838 = vcmp.ne.s32.totalorder %v489, %v1830
          %vm1839 = vcmp.ne.s32.totalorder %v496, %v1831
          %vm1840 = vcmp.ne.s32.totalorder %v503, %v1832
          %vm1841 = vcmp.ne.s32.totalorder %v510, %v1833
          %v1842 = vsel %vm1834, 1, 0
          %v1843 = vsel %vm1835, 1, 0
          %v1844 = vsel %vm1836, 1, 0
          %v1845 = vsel %vm1837, 1, 0
          %v1846 = vsel %vm1838, 1, 0
          %v1847 = vsel %vm1839, 1, 0
          %v1848 = vsel %vm1840, 1, 0
          %v1849 = vsel %vm1841, 1, 0
          %v1850 = vrot.slane %v1843, 7
          %v1851 = vsel %vm1792, %v1850, %v1842
          %v1852 = vrot.slane %v1844, 6
          %v1853 = vsel %vm1794, %v1852, %v1851
          %v1854 = vrot.slane %v1845, 5
          %v1855 = vsel %vm1796, %v1854, %v1853
          %v1856 = vrot.slane %v1846, 4
          %v1857 = vsel %vm1798, %v1856, %v1855
          %v1858 = vrot.slane %v1847, 3
          %v1859 = vsel %vm1800, %v1858, %v1857
          %v1860 = vrot.slane %v1848, 2
          %v1861 = vsel %vm1802, %v1860, %v1859
          %v1862 = vrot.slane %v1849, 1
          %v1863 = vsel %vm1804, %v1862, %v1861
          %vm1864 = vcmp.ne.s32.totalorder %v1863, 0
          %vm1865 = vmand %vm1826, %vm1864
          %v1866 = vsel %vm1865, 0.0, -1e+30
          %1867 = vst [vmem:[#allocation4] sm:$0xff] %v1866
        $region86: #{tpu_custom_call.1} parent=73 // pred_fallthru
          _
        %v1868 = vld [vmem:[%s322] sm:$0xff]
        %v1869 = vld [vmem:[%s322 + $0x8] sm:$0xff]
        %v1870 = vld [vmem:[%s322 + $0x10] sm:$0xff]
        %v1871 = vld [vmem:[%s322 + $0x18] sm:$0xff]
        %v1872 = vld [vmem:[%s322 + $0x20] sm:$0xff]
        %v1873 = vld [vmem:[%s322 + $0x28] sm:$0xff]
        %v1874 = vld [vmem:[%s322 + $0x30] sm:$0xff]
        %v1875 = vld [vmem:[%s322 + $0x38] sm:$0xff]
        %v1876 = vld [vmem:[#allocation3] sm:$0xff]
        %v1877 = vld [vmem:[#allocation3 + $0x8] sm:$0xff]
        %v1878 = vld [vmem:[#allocation3 + $0x10] sm:$0xff]
        %v1879 = vld [vmem:[#allocation3 + $0x18] sm:$0xff]
        %v1880 = vld [vmem:[#allocation3 + $0x20] sm:$0xff]
        %v1881 = vld [vmem:[#allocation3 + $0x28] sm:$0xff]
        %v1882 = vld [vmem:[#allocation3 + $0x30] sm:$0xff]
        %v1883 = vld [vmem:[#allocation3 + $0x38] sm:$0xff]
        %v1884 = vld [vmem:[#allocation3 + $0x40] sm:$0xff]
        %v1885 = vld [vmem:[#allocation3 + $0x48] sm:$0xff]
        %v1886 = vld [vmem:[#allocation3 + $0x50] sm:$0xff]
        %v1887 = vld [vmem:[#allocation3 + $0x58] sm:$0xff]
        %v1888 = vld [vmem:[#allocation3 + $0x60] sm:$0xff]
        %v1889 = vld [vmem:[#allocation3 + $0x68] sm:$0xff]
        %v1890 = vld [vmem:[#allocation3 + $0x70] sm:$0xff]
        %v1891 = vld [vmem:[#allocation3 + $0x78] sm:$0xff]
        %v1892 = vld [vmem:[#allocation3 + $0x80] sm:$0xff]
        %v1893 = vld [vmem:[#allocation3 + $0x88] sm:$0xff]
        %v1894 = vld [vmem:[#allocation3 + $0x90] sm:$0xff]
        %v1895 = vld [vmem:[#allocation3 + $0x98] sm:$0xff]
        %v1896 = vld [vmem:[#allocation3 + $0xa0] sm:$0xff]
        %v1897 = vld [vmem:[#allocation3 + $0xa8] sm:$0xff]
        %v1898 = vld [vmem:[#allocation3 + $0xb0] sm:$0xff]
        %v1899 = vld [vmem:[#allocation3 + $0xb8] sm:$0xff]
        %v1900 = vld [vmem:[#allocation3 + $0xc0] sm:$0xff]
        %v1901 = vld [vmem:[#allocation3 + $0xc8] sm:$0xff]
        %v1902 = vld [vmem:[#allocation3 + $0xd0] sm:$0xff]
        %v1903 = vld [vmem:[#allocation3 + $0xd8] sm:$0xff]
        %v1904 = vld [vmem:[#allocation3 + $0xe0] sm:$0xff]
        %v1905 = vld [vmem:[#allocation3 + $0xe8] sm:$0xff]
        %v1906 = vld [vmem:[#allocation3 + $0xf0] sm:$0xff]
        %v1907 = vld [vmem:[#allocation3 + $0xf8] sm:$0xff]
        %v1908 = vld [vmem:[#allocation3 + $0x100] sm:$0xff]
        %v1909 = vld [vmem:[#allocation3 + $0x108] sm:$0xff]
        %v1910 = vld [vmem:[#allocation3 + $0x110] sm:$0xff]
        %v1911 = vld [vmem:[#allocation3 + $0x118] sm:$0xff]
        %v1912 = vld [vmem:[#allocation3 + $0x120] sm:$0xff]
        %v1913 = vld [vmem:[#allocation3 + $0x128] sm:$0xff]
        %v1914 = vld [vmem:[#allocation3 + $0x130] sm:$0xff]
        %v1915 = vld [vmem:[#allocation3 + $0x138] sm:$0xff]
        %v1916 = vld [vmem:[#allocation3 + $0x140] sm:$0xff]
        %v1917 = vld [vmem:[#allocation3 + $0x148] sm:$0xff]
        %v1918 = vld [vmem:[#allocation3 + $0x150] sm:$0xff]
        %v1919 = vld [vmem:[#allocation3 + $0x158] sm:$0xff]
        %v1920 = vld [vmem:[#allocation3 + $0x160] sm:$0xff]
        %v1921 = vld [vmem:[#allocation3 + $0x168] sm:$0xff]
        %v1922 = vld [vmem:[#allocation3 + $0x170] sm:$0xff]
        %v1923 = vld [vmem:[#allocation3 + $0x178] sm:$0xff]
        %v1924 = vld [vmem:[#allocation3 + $0x180] sm:$0xff]
        %v1925 = vld [vmem:[#allocation3 + $0x188] sm:$0xff]
        %v1926 = vld [vmem:[#allocation3 + $0x190] sm:$0xff]
        %v1927 = vld [vmem:[#allocation3 + $0x198] sm:$0xff]
        %v1928 = vld [vmem:[#allocation3 + $0x1a0] sm:$0xff]
        %v1929 = vld [vmem:[#allocation3 + $0x1a8] sm:$0xff]
        %v1930 = vld [vmem:[#allocation3 + $0x1b0] sm:$0xff]
        %v1931 = vld [vmem:[#allocation3 + $0x1b8] sm:$0xff]
        %v1932 = vld [vmem:[#allocation3 + $0x1c0] sm:$0xff]
        %v1933 = vld [vmem:[#allocation3 + $0x1c8] sm:$0xff]
        %v1934 = vld [vmem:[#allocation3 + $0x1d0] sm:$0xff]
        %v1935 = vld [vmem:[#allocation3 + $0x1d8] sm:$0xff]
        %v1936 = vld [vmem:[#allocation3 + $0x1e0] sm:$0xff]
        %v1937 = vld [vmem:[#allocation3 + $0x1e8] sm:$0xff]
        %v1938 = vld [vmem:[#allocation3 + $0x1f0] sm:$0xff]
        %v1939 = vld [vmem:[#allocation3 + $0x1f8] sm:$0xff]
        %v1940 = vld [vmem:[#allocation3 + $0x200] sm:$0xff]
        %v1941 = vld [vmem:[#allocation3 + $0x208] sm:$0xff]
        %v1942 = vld [vmem:[#allocation3 + $0x210] sm:$0xff]
        %v1943 = vld [vmem:[#allocation3 + $0x218] sm:$0xff]
        %v1944 = vld [vmem:[#allocation3 + $0x220] sm:$0xff]
        %v1945 = vld [vmem:[#allocation3 + $0x228] sm:$0xff]
        %v1946 = vld [vmem:[#allocation3 + $0x230] sm:$0xff]
        %v1947 = vld [vmem:[#allocation3 + $0x238] sm:$0xff]
        %v1948 = vld [vmem:[#allocation3 + $0x240] sm:$0xff]
        %v1949 = vld [vmem:[#allocation3 + $0x248] sm:$0xff]
        %v1950 = vld [vmem:[#allocation3 + $0x250] sm:$0xff]
        %v1951 = vld [vmem:[#allocation3 + $0x258] sm:$0xff]
        %v1952 = vld [vmem:[#allocation3 + $0x260] sm:$0xff]
        %v1953 = vld [vmem:[#allocation3 + $0x268] sm:$0xff]
        %v1954 = vld [vmem:[#allocation3 + $0x270] sm:$0xff]
        %v1955 = vld [vmem:[#allocation3 + $0x278] sm:$0xff]
        %v1956 = vld [vmem:[#allocation3 + $0x280] sm:$0xff]
        %v1957 = vld [vmem:[#allocation3 + $0x288] sm:$0xff]
        %v1958 = vld [vmem:[#allocation3 + $0x290] sm:$0xff]
        %v1959 = vld [vmem:[#allocation3 + $0x298] sm:$0xff]
        %v1960 = vld [vmem:[#allocation3 + $0x2a0] sm:$0xff]
        %v1961 = vld [vmem:[#allocation3 + $0x2a8] sm:$0xff]
        %v1962 = vld [vmem:[#allocation3 + $0x2b0] sm:$0xff]
        %v1963 = vld [vmem:[#allocation3 + $0x2b8] sm:$0xff]
        %v1964 = vld [vmem:[#allocation3 + $0x2c0] sm:$0xff]
        %v1965 = vld [vmem:[#allocation3 + $0x2c8] sm:$0xff]
        %v1966 = vld [vmem:[#allocation3 + $0x2d0] sm:$0xff]
        %v1967 = vld [vmem:[#allocation3 + $0x2d8] sm:$0xff]
        %v1968 = vld [vmem:[#allocation3 + $0x2e0] sm:$0xff]
        %v1969 = vld [vmem:[#allocation3 + $0x2e8] sm:$0xff]
        %v1970 = vld [vmem:[#allocation3 + $0x2f0] sm:$0xff]
        %v1971 = vld [vmem:[#allocation3 + $0x2f8] sm:$0xff]
        %v1972 = vld [vmem:[#allocation3 + $0x300] sm:$0xff]
        %v1973 = vld [vmem:[#allocation3 + $0x308] sm:$0xff]
        %v1974 = vld [vmem:[#allocation3 + $0x310] sm:$0xff]
        %v1975 = vld [vmem:[#allocation3 + $0x318] sm:$0xff]
        %v1976 = vld [vmem:[#allocation3 + $0x320] sm:$0xff]
        %v1977 = vld [vmem:[#allocation3 + $0x328] sm:$0xff]
        %v1978 = vld [vmem:[#allocation3 + $0x330] sm:$0xff]
        %v1979 = vld [vmem:[#allocation3 + $0x338] sm:$0xff]
        %v1980 = vld [vmem:[#allocation3 + $0x340] sm:$0xff]
        %v1981 = vld [vmem:[#allocation3 + $0x348] sm:$0xff]
        %v1982 = vld [vmem:[#allocation3 + $0x350] sm:$0xff]
        %v1983 = vld [vmem:[#allocation3 + $0x358] sm:$0xff]
        %v1984 = vld [vmem:[#allocation3 + $0x360] sm:$0xff]
        %v1985 = vld [vmem:[#allocation3 + $0x368] sm:$0xff]
        %v1986 = vld [vmem:[#allocation3 + $0x370] sm:$0xff]
        %v1987 = vld [vmem:[#allocation3 + $0x378] sm:$0xff]
        %v1988 = vld [vmem:[#allocation3 + $0x380] sm:$0xff]
        %v1989 = vld [vmem:[#allocation3 + $0x388] sm:$0xff]
        %v1990 = vld [vmem:[#allocation3 + $0x390] sm:$0xff]
        %v1991 = vld [vmem:[#allocation3 + $0x398] sm:$0xff]
        %v1992 = vld [vmem:[#allocation3 + $0x3a0] sm:$0xff]
        %v1993 = vld [vmem:[#allocation3 + $0x3a8] sm:$0xff]
        %v1994 = vld [vmem:[#allocation3 + $0x3b0] sm:$0xff]
        %v1995 = vld [vmem:[#allocation3 + $0x3b8] sm:$0xff]
        %v1996 = vld [vmem:[#allocation3 + $0x3c0] sm:$0xff]
        %v1997 = vld [vmem:[#allocation3 + $0x3c8] sm:$0xff]
        %v1998 = vld [vmem:[#allocation3 + $0x3d0] sm:$0xff]
        %v1999 = vld [vmem:[#allocation3 + $0x3d8] sm:$0xff]
        %v2000 = vld [vmem:[#allocation3 + $0x3e0] sm:$0xff]
        %v2001 = vld [vmem:[#allocation3 + $0x3e8] sm:$0xff]
        %v2002 = vld [vmem:[#allocation3 + $0x3f0] sm:$0xff]
        %v2003 = vld [vmem:[#allocation3 + $0x3f8] sm:$0xff]
        %vm2004 = vcmask 261120
        %v2006 = vsel %vm2004, %v1868, 0
        %v2009 = vsel %vm2004, %v1876, 0
        %v2012 = vsel %vm2004, %v1877, 0
        %v2015 = vsel %vm2004, %v1878, 0
        %v2018 = vsel %vm2004, %v1879, 0
        %v2021 = vsel %vm2004, %v1880, 0
        %v2024 = vsel %vm2004, %v1881, 0
        %v2027 = vsel %vm2004, %v1882, 0
        %v2030 = vsel %vm2004, %v1883, 0
        %v2033 = vsel %vm2004, %v1884, 0
        %v2036 = vsel %vm2004, %v1885, 0
        %v2039 = vsel %vm2004, %v1886, 0
        %v2042 = vsel %vm2004, %v1887, 0
        %v2045 = vsel %vm2004, %v1888, 0
        %v2048 = vsel %vm2004, %v1889, 0
        %v2051 = vsel %vm2004, %v1890, 0
        %v2054 = vsel %vm2004, %v1891, 0
        %2056 = vmatpush.xpose.msra.mxu0 %v2054
        %2057 = vmatpush.xpose.msra.mxu0 %v2051
        %2058 = vmatpush.xpose.msra.mxu0 %v2048
        %2059 = vmatpush.xpose.msra.mxu0 %v2045
        %2060 = vmatpush.xpose.msra.mxu0 %v2042
        %2061 = vmatpush.xpose.msra.mxu0 %v2039
        %2062 = vmatpush.xpose.msra.mxu0 %v2036
        %2063 = vmatpush.xpose.msra.mxu0 %v2033
        %2064 = vmatpush.xpose.msra.mxu0 %v2030
        %2065 = vmatpush.xpose.msra.mxu0 %v2027
        %2066 = vmatpush.xpose.msra.mxu0 %v2024
        %2067 = vmatpush.xpose.msra.mxu0 %v2021
        %2068 = vmatpush.xpose.msra.mxu0 %v2018
        %2069 = vmatpush.xpose.msra.mxu0 %v2015
        %2070 = vmatpush.xpose.msra.mxu0 %v2012
        %2071 = vmatpush.xpose.msra.mxu0 %v2009
        %2072 = vmatmul.f32.gmra.mxu0 %v2006
        %v2073 = vpop.f32.mrf.mxu0
        %v2074 = vadd.f32 0.0, %v2073
        %2075 = vdwg.mxu0
        %v2077 = vsel %vm2004, %v1869, 0
        %v2080 = vsel %vm2004, %v1892, 0
        %v2083 = vsel %vm2004, %v1893, 0
        %v2086 = vsel %vm2004, %v1894, 0
        %v2089 = vsel %vm2004, %v1895, 0
        %v2092 = vsel %vm2004, %v1896, 0
        %v2095 = vsel %vm2004, %v1897, 0
        %v2098 = vsel %vm2004, %v1898, 0
        %v2101 = vsel %vm2004, %v1899, 0
        %v2104 = vsel %vm2004, %v1900, 0
        %v2107 = vsel %vm2004, %v1901, 0
        %v2110 = vsel %vm2004, %v1902, 0
        %v2113 = vsel %vm2004, %v1903, 0
        %v2116 = vsel %vm2004, %v1904, 0
        %v2119 = vsel %vm2004, %v1905, 0
        %v2122 = vsel %vm2004, %v1906, 0
        %v2125 = vsel %vm2004, %v1907, 0
        %2127 = vmatpush.xpose.msra.mxu0 %v2125
        %2128 = vmatpush.xpose.msra.mxu0 %v2122
        %2129 = vmatpush.xpose.msra.mxu0 %v2119
        %2130 = vmatpush.xpose.msra.mxu0 %v2116
        %2131 = vmatpush.xpose.msra.mxu0 %v2113
        %2132 = vmatpush.xpose.msra.mxu0 %v2110
        %2133 = vmatpush.xpose.msra.mxu0 %v2107
        %2134 = vmatpush.xpose.msra.mxu0 %v2104
        %2135 = vmatpush.xpose.msra.mxu0 %v2101
        %2136 = vmatpush.xpose.msra.mxu0 %v2098
        %2137 = vmatpush.xpose.msra.mxu0 %v2095
        %2138 = vmatpush.xpose.msra.mxu0 %v2092
        %2139 = vmatpush.xpose.msra.mxu0 %v2089
        %2140 = vmatpush.xpose.msra.mxu0 %v2086
        %2141 = vmatpush.xpose.msra.mxu0 %v2083
        %2142 = vmatpush.xpose.msra.mxu0 %v2080
        %2143 = vmatmul.f32.gmra.mxu0 %v2077
        %v2144 = vpop.f32.mrf.mxu0
        %v2145 = vadd.f32 0.0, %v2144
        %2146 = vdwg.mxu0
        %v2148 = vsel %vm2004, %v1870, 0
        %v2151 = vsel %vm2004, %v1908, 0
        %v2154 = vsel %vm2004, %v1909, 0
        %v2157 = vsel %vm2004, %v1910, 0
        %v2160 = vsel %vm2004, %v1911, 0
        %v2163 = vsel %vm2004, %v1912, 0
        %v2166 = vsel %vm2004, %v1913, 0
        %v2169 = vsel %vm2004, %v1914, 0
        %v2172 = vsel %vm2004, %v1915, 0
        %v2175 = vsel %vm2004, %v1916, 0
        %v2178 = vsel %vm2004, %v1917, 0
        %v2181 = vsel %vm2004, %v1918, 0
        %v2184 = vsel %vm2004, %v1919, 0
        %v2187 = vsel %vm2004, %v1920, 0
        %v2190 = vsel %vm2004, %v1921, 0
        %v2193 = vsel %vm2004, %v1922, 0
        %v2196 = vsel %vm2004, %v1923, 0
        %2198 = vmatpush.xpose.msra.mxu0 %v2196
        %2199 = vmatpush.xpose.msra.mxu0 %v2193
        %2200 = vmatpush.xpose.msra.mxu0 %v2190
        %2201 = vmatpush.xpose.msra.mxu0 %v2187
        %2202 = vmatpush.xpose.msra.mxu0 %v2184
        %2203 = vmatpush.xpose.msra.mxu0 %v2181
        %2204 = vmatpush.xpose.msra.mxu0 %v2178
        %2205 = vmatpush.xpose.msra.mxu0 %v2175
        %2206 = vmatpush.xpose.msra.mxu0 %v2172
        %2207 = vmatpush.xpose.msra.mxu0 %v2169
        %2208 = vmatpush.xpose.msra.mxu0 %v2166
        %2209 = vmatpush.xpose.msra.mxu0 %v2163
        %2210 = vmatpush.xpose.msra.mxu0 %v2160
        %2211 = vmatpush.xpose.msra.mxu0 %v2157
        %2212 = vmatpush.xpose.msra.mxu0 %v2154
        %2213 = vmatpush.xpose.msra.mxu0 %v2151
        %2214 = vmatmul.f32.gmra.mxu0 %v2148
        %v2215 = vpop.f32.mrf.mxu0
        %v2216 = vadd.f32 0.0, %v2215
        %2217 = vdwg.mxu0
        %v2219 = vsel %vm2004, %v1871, 0
        %v2222 = vsel %vm2004, %v1924, 0
        %v2225 = vsel %vm2004, %v1925, 0
        %v2228 = vsel %vm2004, %v1926, 0
        %v2231 = vsel %vm2004, %v1927, 0
        %v2234 = vsel %vm2004, %v1928, 0
        %v2237 = vsel %vm2004, %v1929, 0
        %v2240 = vsel %vm2004, %v1930, 0
        %v2243 = vsel %vm2004, %v1931, 0
        %v2246 = vsel %vm2004, %v1932, 0
        %v2249 = vsel %vm2004, %v1933, 0
        %v2252 = vsel %vm2004, %v1934, 0
        %v2255 = vsel %vm2004, %v1935, 0
        %v2258 = vsel %vm2004, %v1936, 0
        %v2261 = vsel %vm2004, %v1937, 0
        %v2264 = vsel %vm2004, %v1938, 0
        %v2267 = vsel %vm2004, %v1939, 0
        %2269 = vmatpush.xpose.msra.mxu0 %v2267
        %2270 = vmatpush.xpose.msra.mxu0 %v2264
        %2271 = vmatpush.xpose.msra.mxu0 %v2261
        %2272 = vmatpush.xpose.msra.mxu0 %v2258
        %2273 = vmatpush.xpose.msra.mxu0 %v2255
        %2274 = vmatpush.xpose.msra.mxu0 %v2252
        %2275 = vmatpush.xpose.msra.mxu0 %v2249
        %2276 = vmatpush.xpose.msra.mxu0 %v2246
        %2277 = vmatpush.xpose.msra.mxu0 %v2243
        %2278 = vmatpush.xpose.msra.mxu0 %v2240
        %2279 = vmatpush.xpose.msra.mxu0 %v2237
        %2280 = vmatpush.xpose.msra.mxu0 %v2234
        %2281 = vmatpush.xpose.msra.mxu0 %v2231
        %2282 = vmatpush.xpose.msra.mxu0 %v2228
        %2283 = vmatpush.xpose.msra.mxu0 %v2225
        %2284 = vmatpush.xpose.msra.mxu0 %v2222
        %2285 = vmatmul.f32.gmra.mxu0 %v2219
        %v2286 = vpop.f32.mrf.mxu0
        %v2287 = vadd.f32 0.0, %v2286
        %2288 = vdwg.mxu0
        %v2290 = vsel %vm2004, %v1872, 0
        %v2293 = vsel %vm2004, %v1940, 0
        %v2296 = vsel %vm2004, %v1941, 0
        %v2299 = vsel %vm2004, %v1942, 0
        %v2302 = vsel %vm2004, %v1943, 0
        %v2305 = vsel %vm2004, %v1944, 0
        %v2308 = vsel %vm2004, %v1945, 0
        %v2311 = vsel %vm2004, %v1946, 0
        %v2314 = vsel %vm2004, %v1947, 0
        %v2317 = vsel %vm2004, %v1948, 0
        %v2320 = vsel %vm2004, %v1949, 0
        %v2323 = vsel %vm2004, %v1950, 0
        %v2326 = vsel %vm2004, %v1951, 0
        %v2329 = vsel %vm2004, %v1952, 0
        %v2332 = vsel %vm2004, %v1953, 0
        %v2335 = vsel %vm2004, %v1954, 0
        %v2338 = vsel %vm2004, %v1955, 0
        %2340 = vmatpush.xpose.msra.mxu0 %v2338
        %2341 = vmatpush.xpose.msra.mxu0 %v2335
        %2342 = vmatpush.xpose.msra.mxu0 %v2332
        %2343 = vmatpush.xpose.msra.mxu0 %v2329
        %2344 = vmatpush.xpose.msra.mxu0 %v2326
        %2345 = vmatpush.xpose.msra.mxu0 %v2323
        %2346 = vmatpush.xpose.msra.mxu0 %v2320
        %2347 = vmatpush.xpose.msra.mxu0 %v2317
        %2348 = vmatpush.xpose.msra.mxu0 %v2314
        %2349 = vmatpush.xpose.msra.mxu0 %v2311
        %2350 = vmatpush.xpose.msra.mxu0 %v2308
        %2351 = vmatpush.xpose.msra.mxu0 %v2305
        %2352 = vmatpush.xpose.msra.mxu0 %v2302
        %2353 = vmatpush.xpose.msra.mxu0 %v2299
        %2354 = vmatpush.xpose.msra.mxu0 %v2296
        %2355 = vmatpush.xpose.msra.mxu0 %v2293
        %2356 = vmatmul.f32.gmra.mxu0 %v2290
        %v2357 = vpop.f32.mrf.mxu0
        %v2358 = vadd.f32 0.0, %v2357
        %2359 = vdwg.mxu0
        %v2361 = vsel %vm2004, %v1873, 0
        %v2364 = vsel %vm2004, %v1956, 0
        %v2367 = vsel %vm2004, %v1957, 0
        %v2370 = vsel %vm2004, %v1958, 0
        %v2373 = vsel %vm2004, %v1959, 0
        %v2376 = vsel %vm2004, %v1960, 0
        %v2379 = vsel %vm2004, %v1961, 0
        %v2382 = vsel %vm2004, %v1962, 0
        %v2385 = vsel %vm2004, %v1963, 0
        %v2388 = vsel %vm2004, %v1964, 0
        %v2391 = vsel %vm2004, %v1965, 0
        %v2394 = vsel %vm2004, %v1966, 0
        %v2397 = vsel %vm2004, %v1967, 0
        %v2400 = vsel %vm2004, %v1968, 0
        %v2403 = vsel %vm2004, %v1969, 0
        %v2406 = vsel %vm2004, %v1970, 0
        %v2409 = vsel %vm2004, %v1971, 0
        %2411 = vmatpush.xpose.msra.mxu0 %v2409
        %2412 = vmatpush.xpose.msra.mxu0 %v2406
        %2413 = vmatpush.xpose.msra.mxu0 %v2403
        %2414 = vmatpush.xpose.msra.mxu0 %v2400
        %2415 = vmatpush.xpose.msra.mxu0 %v2397
        %2416 = vmatpush.xpose.msra.mxu0 %v2394
        %2417 = vmatpush.xpose.msra.mxu0 %v2391
        %2418 = vmatpush.xpose.msra.mxu0 %v2388
        %2419 = vmatpush.xpose.msra.mxu0 %v2385
        %2420 = vmatpush.xpose.msra.mxu0 %v2382
        %2421 = vmatpush.xpose.msra.mxu0 %v2379
        %2422 = vmatpush.xpose.msra.mxu0 %v2376
        %2423 = vmatpush.xpose.msra.mxu0 %v2373
        %2424 = vmatpush.xpose.msra.mxu0 %v2370
        %2425 = vmatpush.xpose.msra.mxu0 %v2367
        %2426 = vmatpush.xpose.msra.mxu0 %v2364
        %2427 = vmatmul.f32.gmra.mxu0 %v2361
        %v2428 = vpop.f32.mrf.mxu0
        %v2429 = vadd.f32 0.0, %v2428
        %2430 = vdwg.mxu0
        %v2432 = vsel %vm2004, %v1874, 0
        %v2435 = vsel %vm2004, %v1972, 0
        %v2438 = vsel %vm2004, %v1973, 0
        %v2441 = vsel %vm2004, %v1974, 0
        %v2444 = vsel %vm2004, %v1975, 0
        %v2447 = vsel %vm2004, %v1976, 0
        %v2450 = vsel %vm2004, %v1977, 0
        %v2453 = vsel %vm2004, %v1978, 0
        %v2456 = vsel %vm2004, %v1979, 0
        %v2459 = vsel %vm2004, %v1980, 0
        %v2462 = vsel %vm2004, %v1981, 0
        %v2465 = vsel %vm2004, %v1982, 0
        %v2468 = vsel %vm2004, %v1983, 0
        %v2471 = vsel %vm2004, %v1984, 0
        %v2474 = vsel %vm2004, %v1985, 0
        %v2477 = vsel %vm2004, %v1986, 0
        %v2480 = vsel %vm2004, %v1987, 0
        %2482 = vmatpush.xpose.msra.mxu0 %v2480
        %2483 = vmatpush.xpose.msra.mxu0 %v2477
        %2484 = vmatpush.xpose.msra.mxu0 %v2474
        %2485 = vmatpush.xpose.msra.mxu0 %v2471
        %2486 = vmatpush.xpose.msra.mxu0 %v2468
        %2487 = vmatpush.xpose.msra.mxu0 %v2465
        %2488 = vmatpush.xpose.msra.mxu0 %v2462
        %2489 = vmatpush.xpose.msra.mxu0 %v2459
        %2490 = vmatpush.xpose.msra.mxu0 %v2456
        %2491 = vmatpush.xpose.msra.mxu0 %v2453
        %2492 = vmatpush.xpose.msra.mxu0 %v2450
        %2493 = vmatpush.xpose.msra.mxu0 %v2447
        %2494 = vmatpush.xpose.msra.mxu0 %v2444
        %2495 = vmatpush.xpose.msra.mxu0 %v2441
        %2496 = vmatpush.xpose.msra.mxu0 %v2438
        %2497 = vmatpush.xpose.msra.mxu0 %v2435
        %2498 = vmatmul.f32.gmra.mxu0 %v2432
        %v2499 = vpop.f32.mrf.mxu0
        %v2500 = vadd.f32 0.0, %v2499
        %2501 = vdwg.mxu0
        %v2503 = vsel %vm2004, %v1875, 0
        %v2506 = vsel %vm2004, %v1988, 0
        %v2509 = vsel %vm2004, %v1989, 0
        %v2512 = vsel %vm2004, %v1990, 0
        %v2515 = vsel %vm2004, %v1991, 0
        %v2518 = vsel %vm2004, %v1992, 0
        %v2521 = vsel %vm2004, %v1993, 0
        %v2524 = vsel %vm2004, %v1994, 0
        %v2527 = vsel %vm2004, %v1995, 0
        %v2530 = vsel %vm2004, %v1996, 0
        %v2533 = vsel %vm2004, %v1997, 0
        %v2536 = vsel %vm2004, %v1998, 0
        %v2539 = vsel %vm2004, %v1999, 0
        %v2542 = vsel %vm2004, %v2000, 0
        %v2545 = vsel %vm2004, %v2001, 0
        %v2548 = vsel %vm2004, %v2002, 0
        %v2551 = vsel %vm2004, %v2003, 0
        %2553 = vmatpush.xpose.msra.mxu0 %v2551
        %2554 = vmatpush.xpose.msra.mxu0 %v2548
        %2555 = vmatpush.xpose.msra.mxu0 %v2545
        %2556 = vmatpush.xpose.msra.mxu0 %v2542
        %2557 = vmatpush.xpose.msra.mxu0 %v2539
        %2558 = vmatpush.xpose.msra.mxu0 %v2536
        %2559 = vmatpush.xpose.msra.mxu0 %v2533
        %2560 = vmatpush.xpose.msra.mxu0 %v2530
        %2561 = vmatpush.xpose.msra.mxu0 %v2527
        %2562 = vmatpush.xpose.msra.mxu0 %v2524
        %2563 = vmatpush.xpose.msra.mxu0 %v2521
        %2564 = vmatpush.xpose.msra.mxu0 %v2518
        %2565 = vmatpush.xpose.msra.mxu0 %v2515
        %2566 = vmatpush.xpose.msra.mxu0 %v2512
        %2567 = vmatpush.xpose.msra.mxu0 %v2509
        %2568 = vmatpush.xpose.msra.mxu0 %v2506
        %2569 = vmatmul.f32.gmra.mxu0 %v2503
        %v2570 = vpop.f32.mrf.mxu0
        %v2571 = vadd.f32 0.0, %v2570
        %2572 = vdwg.mxu0
        // Predicated region
        $region87: #{tpu_custom_call.1} parent=73 // pred_check
          %p2573 = pneg %p379
        $region88: #{tpu_custom_call.1} parent=73 // pred_check_branch
          %2575 = sbr.rel (%p2573) target = $region90
        $region89: #{tpu_custom_call.1} parent=73 // pred_region
          %vm2576 = vcmp.le.s32.totalorder %v378, 1
          %v2585 = vrot.slane %v2145, 7
          %vm2586 = vcmask 1041409
          %v2587 = vsel %vm2586, %v2585, %v2074
          %v2588 = vrot.slane %v2216, 6
          %vm2589 = vcmask 1042434
          %v2590 = vsel %vm2589, %v2588, %v2587
          %v2591 = vrot.slane %v2287, 5
          %vm2592 = vcmask 1043459
          %v2593 = vsel %vm2592, %v2591, %v2590
          %v2594 = vrot.slane %v2358, 4
          %vm2595 = vcmask 1044484
          %v2596 = vsel %vm2595, %v2594, %v2593
          %v2597 = vrot.slane %v2429, 3
          %vm2598 = vcmask 1045509
          %v2599 = vsel %vm2598, %v2597, %v2596
          %v2600 = vrot.slane %v2500, 2
          %vm2601 = vcmask 1046534
          %v2602 = vsel %vm2601, %v2600, %v2599
          %v2603 = vrot.slane %v2571, 1
          %vm2604 = vcmask 1047559
          %v2605 = vsel %vm2604, %v2603, %v2602
          %v2607 = vsel %vm2576, %v2605, -1e+30
          %2608 = vst [vmem:[#allocation2] sm:$0xff] %v2607
        $region90: #{tpu_custom_call.1} parent=73 // pred_fallthru
          _
        %vm2609 = vcmp.ge.s32.totalorder %v378, 1
        %v2610 = vsel %vm2609, 0.0, -1e+30
        %v2611 = vld [vmem:[#allocation4] sm:$0xff]
        %v2612 = vld [vmem:[#allocation2] sm:$0xff]
        %s2613 = smul.u32 %s23, 8
        %2614 = vrot.lane.b32.xlu0 %v2612, 1
        %v2615 = vpop.permute.xlu0 %2614
        %v2616 = vadd.f32 %v2615, %v2610
        %2617 = vrot.lane.b32.xlu0 %v2612, 2
        %v2618 = vpop.permute.xlu0 %2617
        %v2619 = vadd.f32 %v2618, %v2611
        %v2620 = vmax.f32 %v2612, %v2616
        %v2621 = vmax.f32 %v2620, %v2619
        %v2622 = vsub.f32 %v2612, %v2621
        %v2623 = vmul.f32 %v2622, 1.442695
        %v2624 = vpow.pop %v2623
        %v2625 = vsub.f32 %v2616, %v2621
        %v2626 = vmul.f32 %v2625, 1.442695
        %v2627 = vpow.pop %v2626
        %v2628 = vadd.f32 %v2624, %v2627
        %v2629 = vsub.f32 %v2619, %v2621
        %v2630 = vmul.f32 %v2629, 1.442695
        %v2631 = vpow.pop %v2630
        %v2632 = vadd.f32 %v2628, %v2631
        %v2633 = vlog2.pop %v2632
        %v2634 = vmul.f32 %v2633, 0.6931472
        %v2635 = vadd.f32 %v2621, %v2634
        %v2644 = vrot.slane %v2145, 7
        %vm2645 = vcmask 1041409
        %v2646 = vsel %vm2645, %v2644, %v2074
        %v2647 = vrot.slane %v2216, 6
        %vm2648 = vcmask 1042434
        %v2649 = vsel %vm2648, %v2647, %v2646
        %v2650 = vrot.slane %v2287, 5
        %vm2651 = vcmask 1043459
        %v2652 = vsel %vm2651, %v2650, %v2649
        %v2653 = vrot.slane %v2358, 4
        %vm2654 = vcmask 1044484
        %v2655 = vsel %vm2654, %v2653, %v2652
        %v2656 = vrot.slane %v2429, 3
        %vm2657 = vcmask 1045509
        %v2658 = vsel %vm2657, %v2656, %v2655
        %v2659 = vrot.slane %v2500, 2
        %vm2660 = vcmask 1046534
        %v2661 = vsel %vm2660, %v2659, %v2658
        %v2662 = vrot.slane %v2571, 1
        %vm2663 = vcmask 1047559
        %v2664 = vsel %vm2663, %v2662, %v2661
        %v2666 = vadd.f32 %v2635, %v2664
        %p2667 = scmp.ge.s32.totalorder %s2613, 1
        %v2668 = vstv %s2613
        %vm2669 = vcmp.lt.s32.totalorder %v2668, %v375
        %s2670 = scalar_select %p2667, 1, 0
        %v2671 = vstv %s2670
        %vm2672 = vcmp.eq.s32.totalorder %v2671, 1
        %vm2673 = vmand %vm2672, %vm2669
        %v2674 = vsel %vm2673, 1, 0
        %2675 = vset.pattern.permute.xlu0 0
        %2676 = vperm.xlu0 %2675, %v2674
        %v2677 = vpop.permute.xlu0 %2676
        %vm2678 = vcmp.eq.s32.totalorder %v2677, 1
        %v2679 = vsel %vm2678, %v2666, %v2612
        %2680 = vrot.lane.b32.xlu0 %v2679, 1
        %v2681 = vpop.permute.xlu0 %2680
        %v2682 = vadd.f32 %v2681, %v2610
        %2683 = vrot.lane.b32.xlu0 %v2679, 2
        %v2684 = vpop.permute.xlu0 %2683
        %v2685 = vadd.f32 %v2684, %v2611
        %v2686 = vmax.f32 %v2679, %v2682
        %v2687 = vmax.f32 %v2686, %v2685
        %v2688 = vsub.f32 %v2679, %v2687
        %v2689 = vmul.f32 %v2688, 1.442695
        %v2690 = vpow.pop %v2689
        %v2691 = vsub.f32 %v2682, %v2687
        %v2692 = vmul.f32 %v2691, 1.442695
        %v2693 = vpow.pop %v2692
        %v2694 = vadd.f32 %v2690, %v2693
        %v2695 = vsub.f32 %v2685, %v2687
        %v2696 = vmul.f32 %v2695, 1.442695
        %v2697 = vpow.pop %v2696
        %v2698 = vadd.f32 %v2694, %v2697
        %v2699 = vlog2.pop %v2698
        %v2700 = vmul.f32 %v2699, 0.6931472
        %v2701 = vadd.f32 %v2687, %v2700
        %v2702 = vrot.slane %v2074, 1
        %v2703 = vsel %vm2645, %v2145, %v2702
        %v2704 = vrot.slane %v2216, 7
        %v2705 = vsel %vm2648, %v2704, %v2703
        %v2706 = vrot.slane %v2287, 6
        %v2707 = vsel %vm2651, %v2706, %v2705
        %v2708 = vrot.slane %v2358, 5
        %v2709 = vsel %vm2654, %v2708, %v2707
        %v2710 = vrot.slane %v2429, 4
        %v2711 = vsel %vm2657, %v2710, %v2709
        %v2712 = vrot.slane %v2500, 3
        %v2713 = vsel %vm2660, %v2712, %v2711
        %v2714 = vrot.slane %v2571, 2
        %v2715 = vsel %vm2663, %v2714, %v2713
        %v2717 = vadd.f32 %v2701, %v2715
        %s2718 = sadd.s32 %s2613, 1
        %p2719 = scmp.ge.s32.totalorder %s2718, 1
        %v2720 = vstv %s2718
        %vm2721 = vcmp.lt.s32.totalorder %v2720, %v375
        %s2722 = scalar_select %p2719, 1, 0
        %v2723 = vstv %s2722
        %vm2724 = vcmp.eq.s32.totalorder %v2723, 1
        %vm2725 = vmand %vm2724, %vm2721
        %v2726 = vsel %vm2725, 1, 0
        %2727 = vset.pattern.permute.xlu0 0
        %2728 = vperm.xlu0 %2727, %v2726
        %v2729 = vpop.permute.xlu0 %2728
        %vm2730 = vcmp.eq.s32.totalorder %v2729, 1
        %v2731 = vsel %vm2730, %v2717, %v2679
        %2732 = vrot.lane.b32.xlu0 %v2731, 1
        %v2733 = vpop.permute.xlu0 %2732
        %v2734 = vadd.f32 %v2733, %v2610
        %2735 = vrot.lane.b32.xlu0 %v2731, 2
        %v2736 = vpop.permute.xlu0 %2735
        %v2737 = vadd.f32 %v2736, %v2611
        %v2738 = vmax.f32 %v2731, %v2734
        %v2739 = vmax.f32 %v2738, %v2737
        %v2740 = vsub.f32 %v2731, %v2739
        %v2741 = vmul.f32 %v2740, 1.442695
        %v2742 = vpow.pop %v2741
        %v2743 = vsub.f32 %v2734, %v2739
        %v2744 = vmul.f32 %v2743, 1.442695
        %v2745 = vpow.pop %v2744
        %v2746 = vadd.f32 %v2742, %v2745
        %v2747 = vsub.f32 %v2737, %v2739
        %v2748 = vmul.f32 %v2747, 1.442695
        %v2749 = vpow.pop %v2748
        %v2750 = vadd.f32 %v2746, %v2749
        %v2751 = vlog2.pop %v2750
        %v2752 = vmul.f32 %v2751, 0.6931472
        %v2753 = vadd.f32 %v2739, %v2752
        %v2754 = vrot.slane %v2074, 2
        %v2755 = vrot.slane %v2145, 1
        %v2756 = vsel %vm2645, %v2755, %v2754
        %v2757 = vsel %vm2648, %v2216, %v2756
        %v2758 = vrot.slane %v2287, 7
        %v2759 = vsel %vm2651, %v2758, %v2757
        %v2760 = vrot.slane %v2358, 6
        %v2761 = vsel %vm2654, %v2760, %v2759
        %v2762 = vrot.slane %v2429, 5
        %v2763 = vsel %vm2657, %v2762, %v2761
        %v2764 = vrot.slane %v2500, 4
        %v2765 = vsel %vm2660, %v2764, %v2763
        %v2766 = vrot.slane %v2571, 3
        %v2767 = vsel %vm2663, %v2766, %v2765
        %v2769 = vadd.f32 %v2753, %v2767
        %s2770 = sadd.s32 %s2613, 2
        %p2771 = scmp.ge.s32.totalorder %s2770, 1
        %v2772 = vstv %s2770
        %vm2773 = vcmp.lt.s32.totalorder %v2772, %v375
        %s2774 = scalar_select %p2771, 1, 0
        %v2775 = vstv %s2774
        %vm2776 = vcmp.eq.s32.totalorder %v2775, 1
        %vm2777 = vmand %vm2776, %vm2773
        %v2778 = vsel %vm2777, 1, 0
        %2779 = vset.pattern.permute.xlu0 0
        %2780 = vperm.xlu0 %2779, %v2778
        %v2781 = vpop.permute.xlu0 %2780
        %vm2782 = vcmp.eq.s32.totalorder %v2781, 1
        %v2783 = vsel %vm2782, %v2769, %v2731
        %2784 = vrot.lane.b32.xlu0 %v2783, 1
        %v2785 = vpop.permute.xlu0 %2784
        %v2786 = vadd.f32 %v2785, %v2610
        %2787 = vrot.lane.b32.xlu0 %v2783, 2
        %v2788 = vpop.permute.xlu0 %2787
        %v2789 = vadd.f32 %v2788, %v2611
        %v2790 = vmax.f32 %v2783, %v2786
        %v2791 = vmax.f32 %v2790, %v2789
        %v2792 = vsub.f32 %v2783, %v2791
        %v2793 = vmul.f32 %v2792, 1.442695
        %v2794 = vpow.pop %v2793
        %v2795 = vsub.f32 %v2786, %v2791
        %v2796 = vmul.f32 %v2795, 1.442695
        %v2797 = vpow.pop %v2796
        %v2798 = vadd.f32 %v2794, %v2797
        %v2799 = vsub.f32 %v2789, %v2791
        %v2800 = vmul.f32 %v2799, 1.442695
        %v2801 = vpow.pop %v2800
        %v2802 = vadd.f32 %v2798, %v2801
        %v2803 = vlog2.pop %v2802
        %v2804 = vmul.f32 %v2803, 0.6931472
        %v2805 = vadd.f32 %v2791, %v2804
        %v2806 = vrot.slane %v2074, 3
        %v2807 = vrot.slane %v2145, 2
        %v2808 = vsel %vm2645, %v2807, %v2806
        %v2809 = vrot.slane %v2216, 1
        %v2810 = vsel %vm2648, %v2809, %v2808
        %v2811 = vsel %vm2651, %v2287, %v2810
        %v2812 = vrot.slane %v2358, 7
        %v2813 = vsel %vm2654, %v2812, %v2811
        %v2814 = vrot.slane %v2429, 6
        %v2815 = vsel %vm2657, %v2814, %v2813
        %v2816 = vrot.slane %v2500, 5
        %v2817 = vsel %vm2660, %v2816, %v2815
        %v2818 = vrot.slane %v2571, 4
        %v2819 = vsel %vm2663, %v2818, %v2817
        %v2821 = vadd.f32 %v2805, %v2819
        %s2822 = sadd.s32 %s2613, 3
        %p2823 = scmp.ge.s32.totalorder %s2822, 1
        %v2824 = vstv %s2822
        %vm2825 = vcmp.lt.s32.totalorder %v2824, %v375
        %s2826 = scalar_select %p2823, 1, 0
        %v2827 = vstv %s2826
        %vm2828 = vcmp.eq.s32.totalorder %v2827, 1
        %vm2829 = vmand %vm2828, %vm2825
        %v2830 = vsel %vm2829, 1, 0
        %2831 = vset.pattern.permute.xlu0 0
        %2832 = vperm.xlu0 %2831, %v2830
        %v2833 = vpop.permute.xlu0 %2832
        %vm2834 = vcmp.eq.s32.totalorder %v2833, 1
        %v2835 = vsel %vm2834, %v2821, %v2783
        %2836 = vrot.lane.b32.xlu0 %v2835, 1
        %v2837 = vpop.permute.xlu0 %2836
        %v2838 = vadd.f32 %v2837, %v2610
        %2839 = vrot.lane.b32.xlu0 %v2835, 2
        %v2840 = vpop.permute.xlu0 %2839
        %v2841 = vadd.f32 %v2840, %v2611
        %v2842 = vmax.f32 %v2835, %v2838
        %v2843 = vmax.f32 %v2842, %v2841
        %v2844 = vsub.f32 %v2835, %v2843
        %v2845 = vmul.f32 %v2844, 1.442695
        %v2846 = vpow.pop %v2845
        %v2847 = vsub.f32 %v2838, %v2843
        %v2848 = vmul.f32 %v2847, 1.442695
        %v2849 = vpow.pop %v2848
        %v2850 = vadd.f32 %v2846, %v2849
        %v2851 = vsub.f32 %v2841, %v2843
        %v2852 = vmul.f32 %v2851, 1.442695
        %v2853 = vpow.pop %v2852
        %v2854 = vadd.f32 %v2850, %v2853
        %v2855 = vlog2.pop %v2854
        %v2856 = vmul.f32 %v2855, 0.6931472
        %v2857 = vadd.f32 %v2843, %v2856
        %v2858 = vrot.slane %v2074, 4
        %v2859 = vrot.slane %v2145, 3
        %v2860 = vsel %vm2645, %v2859, %v2858
        %v2861 = vrot.slane %v2216, 2
        %v2862 = vsel %vm2648, %v2861, %v2860
        %v2863 = vrot.slane %v2287, 1
        %v2864 = vsel %vm2651, %v2863, %v2862
        %v2865 = vsel %vm2654, %v2358, %v2864
        %v2866 = vrot.slane %v2429, 7
        %v2867 = vsel %vm2657, %v2866, %v2865
        %v2868 = vrot.slane %v2500, 6
        %v2869 = vsel %vm2660, %v2868, %v2867
        %v2870 = vrot.slane %v2571, 5
        %v2871 = vsel %vm2663, %v2870, %v2869
        %v2873 = vadd.f32 %v2857, %v2871
        %s2874 = sadd.s32 %s2613, 4
        %p2875 = scmp.ge.s32.totalorder %s2874, 1
        %v2876 = vstv %s2874
        %vm2877 = vcmp.lt.s32.totalorder %v2876, %v375
        %s2878 = scalar_select %p2875, 1, 0
        %v2879 = vstv %s2878
        %vm2880 = vcmp.eq.s32.totalorder %v2879, 1
        %vm2881 = vmand %vm2880, %vm2877
        %v2882 = vsel %vm2881, 1, 0
        %2883 = vset.pattern.permute.xlu0 0
        %2884 = vperm.xlu0 %2883, %v2882
        %v2885 = vpop.permute.xlu0 %2884
        %vm2886 = vcmp.eq.s32.totalorder %v2885, 1
        %v2887 = vsel %vm2886, %v2873, %v2835
        %2888 = vrot.lane.b32.xlu0 %v2887, 1
        %v2889 = vpop.permute.xlu0 %2888
        %v2890 = vadd.f32 %v2889, %v2610
        %2891 = vrot.lane.b32.xlu0 %v2887, 2
        %v2892 = vpop.permute.xlu0 %2891
        %v2893 = vadd.f32 %v2892, %v2611
        %v2894 = vmax.f32 %v2887, %v2890
        %v2895 = vmax.f32 %v2894, %v2893
        %v2896 = vsub.f32 %v2887, %v2895
        %v2897 = vmul.f32 %v2896, 1.442695
        %v2898 = vpow.pop %v2897
        %v2899 = vsub.f32 %v2890, %v2895
        %v2900 = vmul.f32 %v2899, 1.442695
        %v2901 = vpow.pop %v2900
        %v2902 = vadd.f32 %v2898, %v2901
        %v2903 = vsub.f32 %v2893, %v2895
        %v2904 = vmul.f32 %v2903, 1.442695
        %v2905 = vpow.pop %v2904
        %v2906 = vadd.f32 %v2902, %v2905
        %v2907 = vlog2.pop %v2906
        %v2908 = vmul.f32 %v2907, 0.6931472
        %v2909 = vadd.f32 %v2895, %v2908
        %v2910 = vrot.slane %v2074, 5
        %v2911 = vrot.slane %v2145, 4
        %v2912 = vsel %vm2645, %v2911, %v2910
        %v2913 = vrot.slane %v2216, 3
        %v2914 = vsel %vm2648, %v2913, %v2912
        %v2915 = vrot.slane %v2287, 2
        %v2916 = vsel %vm2651, %v2915, %v2914
        %v2917 = vrot.slane %v2358, 1
        %v2918 = vsel %vm2654, %v2917, %v2916
        %v2919 = vsel %vm2657, %v2429, %v2918
        %v2920 = vrot.slane %v2500, 7
        %v2921 = vsel %vm2660, %v2920, %v2919
        %v2922 = vrot.slane %v2571, 6
        %v2923 = vsel %vm2663, %v2922, %v2921
        %v2925 = vadd.f32 %v2909, %v2923
        %s2926 = sadd.s32 %s2613, 5
        %p2927 = scmp.ge.s32.totalorder %s2926, 1
        %v2928 = vstv %s2926
        %vm2929 = vcmp.lt.s32.totalorder %v2928, %v375
        %s2930 = scalar_select %p2927, 1, 0
        %v2931 = vstv %s2930
        %vm2932 = vcmp.eq.s32.totalorder %v2931, 1
        %vm2933 = vmand %vm2932, %vm2929
        %v2934 = vsel %vm2933, 1, 0
        %2935 = vset.pattern.permute.xlu0 0
        %2936 = vperm.xlu0 %2935, %v2934
        %v2937 = vpop.permute.xlu0 %2936
        %vm2938 = vcmp.eq.s32.totalorder %v2937, 1
        %v2939 = vsel %vm2938, %v2925, %v2887
        %2940 = vrot.lane.b32.xlu0 %v2939, 1
        %v2941 = vpop.permute.xlu0 %2940
        %v2942 = vadd.f32 %v2941, %v2610
        %2943 = vrot.lane.b32.xlu0 %v2939, 2
        %v2944 = vpop.permute.xlu0 %2943
        %v2945 = vadd.f32 %v2944, %v2611
        %v2946 = vmax.f32 %v2939, %v2942
        %v2947 = vmax.f32 %v2946, %v2945
        %v2948 = vsub.f32 %v2939, %v2947
        %v2949 = vmul.f32 %v2948, 1.442695
        %v2950 = vpow.pop %v2949
        %v2951 = vsub.f32 %v2942, %v2947
        %v2952 = vmul.f32 %v2951, 1.442695
        %v2953 = vpow.pop %v2952
        %v2954 = vadd.f32 %v2950, %v2953
        %v2955 = vsub.f32 %v2945, %v2947
        %v2956 = vmul.f32 %v2955, 1.442695
        %v2957 = vpow.pop %v2956
        %v2958 = vadd.f32 %v2954, %v2957
        %v2959 = vlog2.pop %v2958
        %v2960 = vmul.f32 %v2959, 0.6931472
        %v2961 = vadd.f32 %v2947, %v2960
        %v2962 = vrot.slane %v2074, 6
        %v2963 = vrot.slane %v2145, 5
        %v2964 = vsel %vm2645, %v2963, %v2962
        %v2965 = vrot.slane %v2216, 4
        %v2966 = vsel %vm2648, %v2965, %v2964
        %v2967 = vrot.slane %v2287, 3
        %v2968 = vsel %vm2651, %v2967, %v2966
        %v2969 = vrot.slane %v2358, 2
        %v2970 = vsel %vm2654, %v2969, %v2968
        %v2971 = vrot.slane %v2429, 1
        %v2972 = vsel %vm2657, %v2971, %v2970
        %v2973 = vsel %vm2660, %v2500, %v2972
        %v2974 = vrot.slane %v2571, 7
        %v2975 = vsel %vm2663, %v2974, %v2973
        %v2977 = vadd.f32 %v2961, %v2975
        %s2978 = sadd.s32 %s2613, 6
        %p2979 = scmp.ge.s32.totalorder %s2978, 1
        %v2980 = vstv %s2978
        %vm2981 = vcmp.lt.s32.totalorder %v2980, %v375
        %s2982 = scalar_select %p2979, 1, 0
        %v2983 = vstv %s2982
        %vm2984 = vcmp.eq.s32.totalorder %v2983, 1
        %vm2985 = vmand %vm2984, %vm2981
        %v2986 = vsel %vm2985, 1, 0
        %2987 = vset.pattern.permute.xlu0 0
        %2988 = vperm.xlu0 %2987, %v2986
        %v2989 = vpop.permute.xlu0 %2988
        %vm2990 = vcmp.eq.s32.totalorder %v2989, 1
        %v2991 = vsel %vm2990, %v2977, %v2939
        %2992 = vrot.lane.b32.xlu0 %v2991, 1
        %v2993 = vpop.permute.xlu0 %2992
        %v2994 = vadd.f32 %v2993, %v2610
        %2995 = vrot.lane.b32.xlu0 %v2991, 2
        %v2996 = vpop.permute.xlu0 %2995
        %v2997 = vadd.f32 %v2996, %v2611
        %v2998 = vmax.f32 %v2991, %v2994
        %v2999 = vmax.f32 %v2998, %v2997
        %v3000 = vsub.f32 %v2991, %v2999
        %v3001 = vmul.f32 %v3000, 1.442695
        %v3002 = vpow.pop %v3001
        %v3003 = vsub.f32 %v2994, %v2999
        %v3004 = vmul.f32 %v3003, 1.442695
        %v3005 = vpow.pop %v3004
        %v3006 = vadd.f32 %v3002, %v3005
        %v3007 = vsub.f32 %v2997, %v2999
        %v3008 = vmul.f32 %v3007, 1.442695
        %v3009 = vpow.pop %v3008
        %v3010 = vadd.f32 %v3006, %v3009
        %v3011 = vlog2.pop %v3010
        %v3012 = vmul.f32 %v3011, 0.6931472
        %v3013 = vadd.f32 %v2999, %v3012
        %v3014 = vrot.slane %v2074, 7
        %v3015 = vrot.slane %v2145, 6
        %v3016 = vsel %vm2645, %v3015, %v3014
        %v3017 = vrot.slane %v2216, 5
        %v3018 = vsel %vm2648, %v3017, %v3016
        %v3019 = vrot.slane %v2287, 4
        %v3020 = vsel %vm2651, %v3019, %v3018
        %v3021 = vrot.slane %v2358, 3
        %v3022 = vsel %vm2654, %v3021, %v3020
        %v3023 = vrot.slane %v2429, 2
        %v3024 = vsel %vm2657, %v3023, %v3022
        %v3025 = vrot.slane %v2500, 1
        %v3026 = vsel %vm2660, %v3025, %v3024
        %v3027 = vsel %vm2663, %v2571, %v3026
        %v3029 = vadd.f32 %v3013, %v3027
        %s3030 = sadd.s32 %s2613, 7
        %p3031 = scmp.ge.s32.totalorder %s3030, 1
        %v3032 = vstv %s3030
        %vm3033 = vcmp.lt.s32.totalorder %v3032, %v375
        %s3034 = scalar_select %p3031, 1, 0
        %v3035 = vstv %s3034
        %vm3036 = vcmp.eq.s32.totalorder %v3035, 1
        %vm3037 = vmand %vm3036, %vm3033
        %v3038 = vsel %vm3037, 1, 0
        %3039 = vset.pattern.permute.xlu0 0
        %3040 = vperm.xlu0 %3039, %v3038
        %v3041 = vpop.permute.xlu0 %3040
        %vm3042 = vcmp.eq.s32.totalorder %v3041, 1
        %v3043 = vsel %vm3042, %v3029, %v2991
        %3044 = vst [vmem:[#allocation2] sm:$0xff] %v3043
        %p3045 = scmp.eq.s32.totalorder %s23, 1
        // Predicated region
        $region91: #{tpu_custom_call.1} parent=73 // pred_check
          %p3046 = pneg %p3045
        $region92: #{tpu_custom_call.1} parent=73 // pred_check_branch
          %3048 = sbr.rel (%p3046) target = $region94
        $region93: #{tpu_custom_call.1} parent=73 // pred_region
          %v3049 = vld [vmem:[%s365] sm:$0x3f]
          %v3050 = vld [vmem:[%s365 + $0x8] sm:$0x3f]
          %v3051 = vld [vmem:[%s365 + $0x10] sm:$0x3f]
          %v3052 = vld [vmem:[%s365 + $0x18] sm:$0x3f]
          %v3053 = vld [vmem:[%s365 + $0x20] sm:$0x3f]
          %v3054 = vld [vmem:[%s365 + $0x28] sm:$0x3f]
          %v3055 = vld [vmem:[%s365 + $0x30] sm:$0x3f]
          %v3056 = vld [vmem:[%s365 + $0x38] sm:$0x3f]
          %v3057 = vld [vmem:[#allocation6] sm:$0xff]
          %v3058 = vperm.slane %v3057, 0
          %v3059 = vlaneseq
          %v3060 = vshrl.u32 %v3059, 7
          %3062 = vset.pattern.permute.xlu0 %v3060
          %3063 = vperm.xlu0 %3062, %v3058
          %v3064 = vpop.permute.xlu0 %3063
          %v3065 = vperm.slane %v3057, 1
          %v3066 = vlaneseq
          %v3067 = vshrl.u32 %v3066, 7
          %3069 = vset.pattern.permute.xlu0 %v3067
          %3070 = vperm.xlu0 %3069, %v3065
          %v3071 = vpop.permute.xlu0 %3070
          %v3072 = vperm.slane %v3057, 2
          %v3073 = vlaneseq
          %v3074 = vshrl.u32 %v3073, 7
          %3076 = vset.pattern.permute.xlu0 %v3074
          %3077 = vperm.xlu0 %3076, %v3072
          %v3078 = vpop.permute.xlu0 %3077
          %v3079 = vperm.slane %v3057, 3
          %v3080 = vlaneseq
          %v3081 = vshrl.u32 %v3080, 7
          %3083 = vset.pattern.permute.xlu0 %v3081
          %3084 = vperm.xlu0 %3083, %v3079
          %v3085 = vpop.permute.xlu0 %3084
          %v3086 = vperm.slane %v3057, 4
          %v3087 = vlaneseq
          %v3088 = vshrl.u32 %v3087, 7
          %3090 = vset.pattern.permute.xlu0 %v3088
          %3091 = vperm.xlu0 %3090, %v3086
          %v3092 = vpop.permute.xlu0 %3091
          %v3093 = vperm.slane %v3057, 5
          %v3094 = vlaneseq
          %v3095 = vshrl.u32 %v3094, 7
          %3097 = vset.pattern.permute.xlu0 %v3095
          %3098 = vperm.xlu0 %3097, %v3093
          %v3099 = vpop.permute.xlu0 %3098
          %v3100 = vperm.slane %v3057, 6
          %v3101 = vlaneseq
          %v3102 = vshrl.u32 %v3101, 7
          %3104 = vset.pattern.permute.xlu0 %v3102
          %3105 = vperm.xlu0 %3104, %v3100
          %v3106 = vpop.permute.xlu0 %3105
          %v3107 = vperm.slane %v3057, 7
          %v3108 = vlaneseq
          %v3109 = vshrl.u32 %v3108, 7
          %3111 = vset.pattern.permute.xlu0 %v3109
          %3112 = vperm.xlu0 %3111, %v3107
          %v3113 = vpop.permute.xlu0 %3112
          %vm3114 = vcmp.eq.s32.totalorder %v378, %v3064
          %vm3115 = vcmp.eq.s32.totalorder %v378, %v3071
          %vm3116 = vcmp.eq.s32.totalorder %v378, %v3078
          %vm3117 = vcmp.eq.s32.totalorder %v378, %v3085
          %vm3118 = vcmp.eq.s32.totalorder %v378, %v3092
          %vm3119 = vcmp.eq.s32.totalorder %v378, %v3099
          %vm3120 = vcmp.eq.s32.totalorder %v378, %v3106
          %vm3121 = vcmp.eq.s32.totalorder %v378, %v3113
          %vm3122 = vcmask 259072
          %v3123 = vsel %vm3122, %v3049, -inf
          %3124 = vmax.xlane.f32.xlu0 %v3123
          %v3125 = vpop.xlane.xlu0 %3124
          %v3126 = vsel %vm3122, %v3050, -inf
          %3127 = vmax.xlane.f32.xlu0 %v3126
          %v3128 = vpop.xlane.xlu0 %3127
          %v3129 = vsel %vm3122, %v3051, -inf
          %3130 = vmax.xlane.f32.xlu0 %v3129
          %v3131 = vpop.xlane.xlu0 %3130
          %v3132 = vsel %vm3122, %v3052, -inf
          %3133 = vmax.xlane.f32.xlu0 %v3132
          %v3134 = vpop.xlane.xlu0 %3133
          %v3135 = vsel %vm3122, %v3053, -inf
          %3136 = vmax.xlane.f32.xlu0 %v3135
          %v3137 = vpop.xlane.xlu0 %3136
          %v3138 = vsel %vm3122, %v3054, -inf
          %3139 = vmax.xlane.f32.xlu0 %v3138
          %v3140 = vpop.xlane.xlu0 %3139
          %v3141 = vsel %vm3122, %v3055, -inf
          %3142 = vmax.xlane.f32.xlu0 %v3141
          %v3143 = vpop.xlane.xlu0 %3142
          %v3144 = vsel %vm3122, %v3056, -inf
          %3145 = vmax.xlane.f32.xlu0 %v3144
          %v3146 = vpop.xlane.xlu0 %3145
          %v3147 = vsub.f32 %v3049, %v3125
          %v3148 = vsub.f32 %v3050, %v3128
          %v3149 = vsub.f32 %v3051, %v3131
          %v3150 = vsub.f32 %v3052, %v3134
          %v3151 = vsub.f32 %v3053, %v3137
          %v3152 = vsub.f32 %v3054, %v3140
          %v3153 = vsub.f32 %v3055, %v3143
          %v3154 = vsub.f32 %v3056, %v3146
          %v3155 = vmul.f32 %v3147, 1.442695
          %v3156 = vpow.pop %v3155
          %v3157 = vmul.f32 %v3148, 1.442695
          %v3158 = vpow.pop %v3157
          %v3159 = vmul.f32 %v3149, 1.442695
          %v3160 = vpow.pop %v3159
          %v3161 = vmul.f32 %v3150, 1.442695
          %v3162 = vpow.pop %v3161
          %v3163 = vmul.f32 %v3151, 1.442695
          %v3164 = vpow.pop %v3163
          %v3165 = vmul.f32 %v3152, 1.442695
          %v3166 = vpow.pop %v3165
          %v3167 = vmul.f32 %v3153, 1.442695
          %v3168 = vpow.pop %v3167
          %v3169 = vmul.f32 %v3154, 1.442695
          %v3170 = vpow.pop %v3169
          %v3171 = vsel %vm3122, %v3156, 0.0
          %3172 = vadd.xlane.f32.xlu0 %v3171
          %v3173 = vpop.xlane.xlu0 %3172
          %v3174 = vsel %vm3122, %v3158, 0.0
          %3175 = vadd.xlane.f32.xlu0 %v3174
          %v3176 = vpop.xlane.xlu0 %3175
          %v3177 = vsel %vm3122, %v3160, 0.0
          %3178 = vadd.xlane.f32.xlu0 %v3177
          %v3179 = vpop.xlane.xlu0 %3178
          %v3180 = vsel %vm3122, %v3162, 0.0
          %3181 = vadd.xlane.f32.xlu0 %v3180
          %v3182 = vpop.xlane.xlu0 %3181
          %v3183 = vsel %vm3122, %v3164, 0.0
          %3184 = vadd.xlane.f32.xlu0 %v3183
          %v3185 = vpop.xlane.xlu0 %3184
          %v3186 = vsel %vm3122, %v3166, 0.0
          %3187 = vadd.xlane.f32.xlu0 %v3186
          %v3188 = vpop.xlane.xlu0 %3187
          %v3189 = vsel %vm3122, %v3168, 0.0
          %3190 = vadd.xlane.f32.xlu0 %v3189
          %v3191 = vpop.xlane.xlu0 %3190
          %v3192 = vsel %vm3122, %v3170, 0.0
          %3193 = vadd.xlane.f32.xlu0 %v3192
          %v3194 = vpop.xlane.xlu0 %3193
          %v3195 = vlog2.pop %v3173
          %v3196 = vmul.f32 %v3195, 0.6931472
          %v3197 = vlog2.pop %v3176
          %v3198 = vmul.f32 %v3197, 0.6931472
          %v3199 = vlog2.pop %v3179
          %v3200 = vmul.f32 %v3199, 0.6931472
          %v3201 = vlog2.pop %v3182
          %v3202 = vmul.f32 %v3201, 0.6931472
          %v3203 = vlog2.pop %v3185
          %v3204 = vmul.f32 %v3203, 0.6931472
          %v3205 = vlog2.pop %v3188
          %v3206 = vmul.f32 %v3205, 0.6931472
          %v3207 = vlog2.pop %v3191
          %v3208 = vmul.f32 %v3207, 0.6931472
          %v3209 = vlog2.pop %v3194
          %v3210 = vmul.f32 %v3209, 0.6931472
          %v3211 = vadd.f32 %v3125, %v3196
          %v3212 = vadd.f32 %v3128, %v3198
          %v3213 = vadd.f32 %v3131, %v3200
          %v3214 = vadd.f32 %v3134, %v3202
          %v3215 = vadd.f32 %v3137, %v3204
          %v3216 = vadd.f32 %v3140, %v3206
          %v3217 = vadd.f32 %v3143, %v3208
          %v3218 = vadd.f32 %v3146, %v3210
          %v3219 = vsel %vm3114, %v3049, 0.0
          %v3220 = vsel %vm3115, %v3050, 0.0
          %v3221 = vsel %vm3116, %v3051, 0.0
          %v3222 = vsel %vm3117, %v3052, 0.0
          %v3223 = vsel %vm3118, %v3053, 0.0
          %v3224 = vsel %vm3119, %v3054, 0.0
          %v3225 = vsel %vm3120, %v3055, 0.0
          %v3226 = vsel %vm3121, %v3056, 0.0
          %v3227 = vsel %vm3122, %v3219, 0.0
          %3228 = vadd.xlane.f32.xlu0 %v3227
          %v3229 = vpop.xlane.xlu0 %3228
          %v3230 = vsel %vm3122, %v3220, 0.0
          %3231 = vadd.xlane.f32.xlu0 %v3230
          %v3232 = vpop.xlane.xlu0 %3231
          %v3233 = vsel %vm3122, %v3221, 0.0
          %3234 = vadd.xlane.f32.xlu0 %v3233
          %v3235 = vpop.xlane.xlu0 %3234
          %v3236 = vsel %vm3122, %v3222, 0.0
          %3237 = vadd.xlane.f32.xlu0 %v3236
          %v3238 = vpop.xlane.xlu0 %3237
          %v3239 = vsel %vm3122, %v3223, 0.0
          %3240 = vadd.xlane.f32.xlu0 %v3239
          %v3241 = vpop.xlane.xlu0 %3240
          %v3242 = vsel %vm3122, %v3224, 0.0
          %3243 = vadd.xlane.f32.xlu0 %v3242
          %v3244 = vpop.xlane.xlu0 %3243
          %v3245 = vsel %vm3122, %v3225, 0.0
          %3246 = vadd.xlane.f32.xlu0 %v3245
          %v3247 = vpop.xlane.xlu0 %3246
          %v3248 = vsel %vm3122, %v3226, 0.0
          %3249 = vadd.xlane.f32.xlu0 %v3248
          %v3250 = vpop.xlane.xlu0 %3249
          %v3251 = vsub.f32 %v3211, %v3229
          %v3252 = vsub.f32 %v3212, %v3232
          %v3253 = vsub.f32 %v3213, %v3235
          %v3254 = vsub.f32 %v3214, %v3238
          %v3255 = vsub.f32 %v3215, %v3241
          %v3256 = vsub.f32 %v3216, %v3244
          %v3257 = vsub.f32 %v3217, %v3247
          %v3258 = vsub.f32 %v3218, %v3250
          %3259 = vset.pattern.permute.xlu0 0
          %3260 = vperm.xlu0 %3259, %v376
          %v3261 = vpop.permute.xlu0 %3260
          %vm3262 = vcmp.lt.s32.totalorder %v378, %v3261
          %v3271 = vperm.slane %v3251, %v378
          %v3272 = vperm.slane %v3252, %v378
          %v3273 = vperm.slane %v3253, %v378
          %v3274 = vperm.slane %v3254, %v378
          %v3275 = vperm.slane %v3255, %v378
          %v3276 = vperm.slane %v3256, %v378
          %v3277 = vperm.slane %v3257, %v378
          %v3278 = vperm.slane %v3258, %v378
          %v3279 = vsel %vm2645, %v3272, %v3271
          %v3280 = vsel %vm2648, %v3273, %v3279
          %v3281 = vsel %vm2651, %v3274, %v3280
          %v3282 = vsel %vm2654, %v3275, %v3281
          %v3283 = vsel %vm2657, %v3276, %v3282
          %v3284 = vsel %vm2660, %v3277, %v3283
          %v3285 = vsel %vm2663, %v3278, %v3284
          %v3287 = vsel %vm3262, %v3285, 0.0
          %vm3288 = vcmask 48128
          %v3289 = vsel %vm3288, %v3287, 0.0
          %3290 = vadd.xlane.f32.xlu0 %v3289
          %v3291 = vpop.xlane.xlu0 %3290
          %v3292 = vrot.slane %v3291, 4
          %v3293 = vadd.f32 %v3291, %v3292
          %v3294 = vrot.slane %v3293, 2
          %v3295 = vadd.f32 %v3293, %v3294
          %v3296 = vrot.slane %v3295, 1
          %v3297 = vadd.f32 %v3295, %v3296
          %s3298 = vtos %v3297
          %v3299 = vsel %vm3262, 1, 0
          %v3300 = vcvt.s32.f32 %v3299
          %v3301 = vsel %vm3288, %v3300, 0.0
          %3302 = vadd.xlane.f32.xlu0 %v3301
          %v3303 = vpop.xlane.xlu0 %3302
          %v3304 = vrot.slane %v3303, 4
          %v3305 = vadd.f32 %v3303, %v3304
          %v3306 = vrot.slane %v3305, 2
          %v3307 = vadd.f32 %v3305, %v3306
          %v3308 = vrot.slane %v3307, 1
          %v3309 = vadd.f32 %v3307, %v3308
          %s3310 = vtos %v3309
          %v3311 = vmul.u32 %v376, 2
          %3312 = vset.pattern.permute.xlu0 0
          %3313 = vperm.xlu0 %3312, %v3311
          %v3314 = vpop.permute.xlu0 %3313
          %vm3315 = vcmp.eq.s32.totalorder %v378, %v3314
          %v3316 = vsub.s32 %v3311, 1
          %3317 = vset.pattern.permute.xlu0 0
          %3318 = vperm.xlu0 %3317, %v3316
          %v3319 = vpop.permute.xlu0 %3318
          %vm3320 = vcmp.eq.s32.totalorder %v378, %v3319
          %vm3321 = vmor %vm3315, %vm3320
          %v3322 = vsel %vm3321, %v3043, -1e+30
          %3323 = vmax.xlane.f32.xlu0 %v3322
          %v3324 = vpop.xlane.xlu0 %3323
          %v3325 = vsub.f32 %v3322, %v3324
          %v3326 = vmul.f32 %v3325, 1.442695
          %v3327 = vpow.pop %v3326
          %3328 = vadd.xlane.f32.xlu0 %v3327
          %v3329 = vpop.xlane.xlu0 %3328
          %v3330 = vlog2.pop %v3329
          %v3331 = vmul.f32 %v3330, 0.6931472
          %v3332 = vadd.f32 %v3324, %v3331
          %v3333 = vsub.f32 0.0, %v3332
          %vm3334 = vcmp.gt.f32.partialorder %v3333, 1e+20
          %v3335 = vsel %vm3334, 0.0, %v3333
          %v3336 = vcvt.s32.f32 %v376
          %v3337 = vmax.f32 %v3336, 1.0
          %v3338 = vrcp.pop %v3337
          %v3339 = vmul.f32 %v3337, %v3338
          %v3340 = vsub.f32 1.0, %v3339
          %v3341 = vmul.f32 %v3338, %v3340
          %v3342 = vadd.f32 %v3338, %v3341
          %vm3343 = vweird.f32 %v3337
          %vm3344 = vweird.f32 %v3338
          %vm3345 = vmor %vm3343, %vm3344
          %v3346 = vsel %vm3345, %v3338, %v3342
          %v3347 = vand.u32 2147483647, %v3337
          %vm3348 = vcmp.eq.f32.partialorder %v3347, 8.507059e+37
          %v3349 = vand.u32 %v3337, 2147483648
          %v3350 = vor.u32 1.1754944e-38, %v3349
          %v3351 = vsel %vm3348, %v3350, %v3346
          %v3352 = vmul.f32 %v3335, %v3351
          %v3353 = vlaneseq
          %v3354 = vshrl.u32 %v3353, 7
          %s3355 = smul.u32 %s22, 8
          %v3356 = vstv %s3355
          %v3357 = vadd.s32 %v3356, %v3354
          %vm3358 = vcmp.lt.s32.totalorder %v3357, 2
          %v3359 = vsel %vm3358, %v3352, 0.0
          %vm3360 = vcmask 7168
          %v3361 = vsel %vm3360, %v3359, 0.0
          %3362 = vadd.xlane.f32.xlu0 %v3361
          %v3363 = vpop.xlane.xlu0 %3362
          %v3364 = vrot.slane %v3363, 4
          %v3365 = vadd.f32 %v3363, %v3364
          %v3366 = vrot.slane %v3365, 2
          %v3367 = vadd.f32 %v3365, %v3366
          %v3368 = vrot.slane %v3367, 1
          %v3369 = vadd.f32 %v3367, %v3368
          %s3370 = vtos %v3369
          %vm3371 = vcmp.eq.s32.totalorder %v3354, 0
          %vm3372 = vcmp.eq.s32.totalorder %v378, 0
          %vm3373 = vmand %vm3371, %vm3372
          %v3374 = vstv %s3298
          %v3375 = vsel %vm3373, %v3374, 0.0
          %vm3376 = vcmp.eq.s32.totalorder %v378, 1
          %vm3377 = vmand %vm3371, %vm3376
          %v3378 = vstv %s3310
          %v3379 = vsel %vm3377, %v3378, 0.0
          %v3380 = vadd.f32 %v3375, %v3379
          %vm3381 = vcmp.eq.s32.totalorder %v378, 2
          %vm3382 = vmand %vm3371, %vm3381
          %v3383 = vstv %s3370
          %v3384 = vsel %vm3382, %v3383, 0.0
          %v3385 = vadd.f32 %v3380, %v3384
          %3386 = vst [vmem:[#allocation9] sm:$0xff] %v3385
        $region94: #{tpu_custom_call.1} parent=73 // pred_fallthru
          _
        // Predicated region
        $region95: #{tpu_custom_call.1} parent=73 // pred_check
          %p3387 = pneg %p180
        $region96: #{tpu_custom_call.1} parent=73 // pred_check_branch
          %3389 = sbr.rel (%p3387) target = $region98
        $region97: #{tpu_custom_call.1} parent=73 // pred_region
          %3391 = vsyncadd [#allocation8], 0
          %s3392 = smul.addr %s22, 8
          %s3393 = scalar_lea.hbm %s5, %s3392
          %s3395 = sshll.u32 [#allocation9], 4
          %s3396 = int_to_ptr.vmem [resolvable:$true] %s3395
          %s3397 = sshll.u32 %s3393, 4
          %s3398 = int_to_ptr.hbm [resolvable:$true] %s3397
          %3400 = dma.vmem_to_hbm [thread:$0]  %s3396, 128, %s3398, [#allocation8]
        $region98: #{tpu_custom_call.1} parent=73 // pred_fallthru
          _
        // Predicated region
        $region99: #{tpu_custom_call.1} parent=73 // pred_check
          %p3401 = pneg %p180
        $region100: #{tpu_custom_call.1} parent=73 // pred_check_branch
          %3403 = sbr.rel (%p3401) target = $region102
        $region101: #{tpu_custom_call.1} parent=73 // pred_region
          %3405 = dma.done [#allocation8], 128
        $region102: #{tpu_custom_call.1} parent=73 // pred_fallthru
          _
      $region74: #{tpu_custom_call.1} parent=5 // pred_fallthru
        _
      %p3406 = scmp.le.s32.totalorder 2, %s13
      // Predicated region
      $region103: #{tpu_custom_call.1} parent=5 // pred_check
        %p3407 = pneg %p3406
      $region104: #{tpu_custom_call.1} parent=5 // pred_check_branch
        %3409 = sbr.rel (%p3407) target = $region106
      $region105: #{tpu_custom_call.1} parent=5 // pred_region
        %s3410 = ssub.s32 %s13, 2
      $region106: #{tpu_custom_call.1} parent=5 // pred_fallthru
        _
    $region6: #{tpu_custom_call.1} parent=1 // loop_footer
      %s17 = sadd.s32 1, %s13
    $region7: #{tpu_custom_call.1} parent=1 // loop_footer_branch
      %12 = sbr.rel target = $region3
    $region8: #{tpu_custom_call.1} parent=1 // loop_exit
      _
    %3411 = vsyncpa [#allocation7], 1
    %s3412 = scalar_lea.sflag [#allocation7], 1
    %3413 = vsyncpa %s3412, 1
    %3414 = vsyncpa [#allocation8], 1
    %s3415 = scalar_lea.sflag [#allocation8], 1
    %3416 = vsyncpa %s3415, 1

</llo_original>
